<compile_context>
chip_gen: v7x
topology: tpu7x:2x2x1
jax: 0.10.0
libtpu: 0.0.40
codegen_flags: <defaults>
</compile_context>

<pallas_src>
import jax
import jax.numpy as jnp
from jax import lax
from jax.experimental import pallas as pl
from jax.experimental.pallas import tpu as pltpu

ALPHA = 1.0 / 2.0 ** 0.5
V_TH = 0.15
TAU = 2.0
DECAY = 1.0 - 1.0 / TAU
BN_EPS = 1e-5


def _vmem_limit_bytes(request):
    """Explicit VMEM budget sized from the tile math, clamped to ~80% of HW."""
    try:
        cap = pltpu.get_tpu_info().vmem_capacity_bytes
    except Exception:
        cap = 64 * 1024 * 1024          # conservative (v7x per-TC VMEM)
    return int(min(max(request, 32 * 1024 * 1024), int(cap * 0.8)))


# --------------------------------------------------------------------------
# Kernel 1: bilinear x2 upsample fused with multi-step LIF neuron dynamics,
# emitting the four parity sub-grids packed along channels [ee, eo, oe, oo]:
#   even rows : 0.75*x[i] + 0.25*x[i-1]   (edge clamped)
#   odd  rows : 0.75*x[i] + 0.25*x[i+1]
# (same separable formula along columns).  Works on a 2-D (H*W, .) layout so
# the column shifts are pltpu.roll's on a 2-D array.  Membrane potential is
# carried across the innermost (sequential) T grid axis in VMEM scratch.
# --------------------------------------------------------------------------
def _up_lif_kernel(x_ref, s_ref, v_ref):
    t = pl.program_id(1)

    @pl.when(t == 0)
    def _init():
        v_ref[...] = jnp.zeros_like(v_ref)

    x3 = x_ref[0, 0].astype(jnp.float32)                   # (H, W, C)
    H, W, C = x3.shape
    pix = H * W
    x = x3.reshape(pix, C)                                 # (H*W, C)

    # rows (H): edge-clamped shift by one spatial row = W flat rows
    r_prev = jnp.concatenate([x[:W], x[:pix - W]], axis=0)
    r_next = jnp.concatenate([x[W:], x[pix - W:]], axis=0)
    xh_e = 0.75 * x + 0.25 * r_prev                        # even output rows
    xh_o = 0.75 * x + 0.25 * r_next                        # odd output rows

    # pack (row parity, col parity) channel blocks: [ee, eo, oe, oo]
    xcat = jnp.concatenate([xh_e, xh_e, xh_o, xh_o], axis=-1)   # (H*W, 4C)

    # cols (W): circular roll by one flat row (XLU slot) + edge clamp fix-up
    r_idx = lax.broadcasted_iota(jnp.int32, xcat.shape, 0)
    j_idx = r_idx % W
    c_prev = jnp.where(j_idx == 0, xcat, pltpu.roll(xcat, 1, 0))
    c_next = jnp.where(j_idx == W - 1, xcat, pltpu.roll(xcat, pix - 1, 0))
    lane = lax.broadcasted_iota(jnp.int32, xcat.shape, 1)
    use_prev = (lane < C) | ((lane >= 2 * C) & (lane < 3 * C))  # ee, oe blocks
    x_up = 0.75 * xcat + 0.25 * jnp.where(use_prev, c_prev, c_next)

    # LIF: decay_input=False, v_reset=0 (hard reset); f32 state, bf16 spikes
    h = DECAY * v_ref[...] + x_up
    spike = (h >= V_TH).astype(jnp.float32)
    v_ref[...] = h * (1.0 - spike)
    s_ref[0, 0] = spike.astype(s_ref.dtype)


def _up_lif(x_nhwc):
    T, B, H, W, C = x_nhwc.shape
    pix = H * W
    vlim = _vmem_limit_bytes(
        2 * pix * C * 4                 # f32 input block, double-buffered
        + 2 * pix * 4 * C * 2           # bf16 output block, double-buffered
        + 10 * pix * 4 * C * 4)         # membrane scratch + elementwise temps
    return pl.pallas_call(
        _up_lif_kernel,
        out_shape=jax.ShapeDtypeStruct((T, B, pix, 4 * C), jnp.bfloat16),
        grid_spec=pltpu.PrefetchScalarGridSpec(
            num_scalar_prefetch=0,
            grid=(B, T),                # T innermost: sequential LIF state
            in_specs=[pl.BlockSpec((1, 1, H, W, C),
                                   lambda b, t: (t, b, 0, 0, 0))],
            out_specs=pl.BlockSpec((1, 1, pix, 4 * C),
                                   lambda b, t: (t, b, 0, 0)),
            scratch_shapes=[pltpu.VMEM((pix, 4 * C), jnp.float32)],
        ),
        compiler_params=pltpu.CompilerParams(
            dimension_semantics=("parallel", "arbitrary"),
            vmem_limit_bytes=vlim,
        ),
    )(x_nhwc)


# --------------------------------------------------------------------------
# Polyphase weight: reindexes the 3x3 conv on the (2H, 2W) map into a 3x3
# conv on the packed (H, W, 4C) sub-grid tensor producing the packed
# (H, W, 4Cout) output (output parities along channels).  Cout is zero-padded
# to a multiple of 128 for lane-dense MXU output / stores.
# --------------------------------------------------------------------------
def _polyphase_weight(w_hwio, cout_pad):
    C, Cout = w_hwio.shape[2], w_hwio.shape[3]
    w_eff = jnp.zeros((3, 3, 4 * C, cout_pad), jnp.float32)
    for pr in range(2):
        for pc in range(2):
            for ky in range(3):
                for kx in range(3):
                    a, b = pr + ky - 1, pc + kx - 1
                    ey, pa = a // 2 + 1, a % 2
                    ex, pb = b // 2 + 1, b % 2
                    ib = (pa * 2 + pb) * C
                    ob = (pr * 2 + pc) * Cout
                    w_eff = w_eff.at[ey, ex, ib:ib + C, ob:ob + Cout].add(
                        w_hwio[ky, kx])
    return w_eff.reshape(9 * 4 * C, cout_pad)


# --------------------------------------------------------------------------
# Kernel 2: 3x3 conv on the packed sub-grids as ONE large-K matmul per sample
# (taps packed along the contraction axis), plus per-sample partial BN stats
# so the N = T*B grid axis stays fully parallel.
# --------------------------------------------------------------------------
def _conv_stats_kernel(s_ref, w_ref, y_ref, sum_ref, sq_ref):
    s = s_ref[0]                                           # (H, W, K0) bf16
    H, W, K0 = s.shape
    zrow = jnp.zeros((1, W, K0), s.dtype)
    sr = jnp.concatenate([zrow, s, zrow], axis=0)          # (H+2, W, K0)
    zcol = jnp.zeros((H + 2, 1, K0), s.dtype)
    c_m = jnp.concatenate([zcol, sr[:, :W - 1, :]], axis=1)  # col j -> j-1
    c_z = sr                                                 # col j
    c_p = jnp.concatenate([sr[:, 1:, :], zcol], axis=1)      # col j -> j+1

    taps = []
    for dy in range(3):                 # row slices along the free major axis
        for c in (c_m, c_z, c_p):
            taps.append(c[dy:dy + H])
    patches = jnp.concatenate(taps, axis=-1).reshape(H * W, 9 * K0)

    y = jnp.dot(patches, w_ref[...], preferred_element_type=jnp.float32)
    y_ref[0] = y
    sum_ref[0] = jnp.sum(y, axis=0, keepdims=True)
    sq_ref[0] = jnp.sum(y * y, axis=0, keepdims=True)


def _conv_stats(s, w_mat):
    N, H, W, K0 = s.shape
    K, Cp = w_mat.shape
    pix = H * W
    vlim = _vmem_limit_bytes(
        2 * pix * K0 * 2                # bf16 input block, double-buffered
        + 3 * pix * 9 * K0 * 2          # tap-packed patches + temporaries
        + 2 * pix * Cp * 4              # f32 y block, double-buffered
        + 2 * K * Cp * 2)               # weights
    return pl.pallas_call(
        _conv_stats_kernel,
        out_shape=(
            jax.ShapeDtypeStruct((N, pix, Cp), jnp.float32),
            jax.ShapeDtypeStruct((N, 1, Cp), jnp.float32),
            jax.ShapeDtypeStruct((N, 1, Cp), jnp.float32),
        ),
        grid_spec=pltpu.PrefetchScalarGridSpec(
            num_scalar_prefetch=0,
            grid=(N,),
            in_specs=[
                pl.BlockSpec((1, H, W, K0), lambda n: (n, 0, 0, 0)),
                pl.BlockSpec((K, Cp), lambda n: (0, 0)),
            ],
            out_specs=[
                pl.BlockSpec((1, pix, Cp), lambda n: (n, 0, 0)),
                pl.BlockSpec((1, 1, Cp), lambda n: (n, 0, 0)),
                pl.BlockSpec((1, 1, Cp), lambda n: (n, 0, 0)),
            ],
        ),
        compiler_params=pltpu.CompilerParams(
            dimension_semantics=("parallel",),
            vmem_limit_bytes=vlim,
        ),
    )(s, w_mat)


# --------------------------------------------------------------------------
# Full UpSampling forward.
# --------------------------------------------------------------------------
@jax.jit
def upsampling_forward(x, conv_w, gamma, beta):
    """x: (T,B,C,H,W) f32; conv_w: (3,3,Cin,Cout) HWIO -> (T,B,Cout,2H,2W)."""
    T, B, C, H, W = x.shape
    Cout = conv_w.shape[-1]
    Cp = ((4 * Cout + 127) // 128) * 128          # lane-dense packed channels
    valid = 4 * Cout

    x_nhwc = jnp.transpose(x, (0, 1, 3, 4, 2)).astype(jnp.float32)

    # bilinear x2 + LIF -> packed parity sub-grids (T, B, H*W, 4C), bf16
    spikes = _up_lif(x_nhwc)
    s = spikes.reshape(T * B, H, W, 4 * C)        # free view

    # conv (polyphase, single large-K matmul per sample) + partial BN stats
    w_mat = _polyphase_weight(conv_w.astype(jnp.float32), Cp).astype(jnp.bfloat16)
    y, psum, psq = _conv_stats(s, w_mat)          # y: (N, H*W, Cp)

    # tdBN statistics over the flattened T*B batch (biased variance).
    # NOTE: E[x^2]-mean^2 in f32, guarded against tiny negative values.
    N = T * B
    sum_c = psum.reshape(N, Cp)[:, :valid].sum(axis=0).reshape(4, Cout).sum(0)
    sq_c = psq.reshape(N, Cp)[:, :valid].sum(axis=0).reshape(4, Cout).sum(0)
    cnt = jnp.float32(N * H * W * 4)              # = N * 2H * 2W
    mean = sum_c / cnt
    var = jnp.maximum(sq_c / cnt - mean * mean, 0.0)
    scale = gamma / jnp.sqrt(var + BN_EPS)
    shift = beta - mean * scale

    # Fused XLA epilogue: BN affine + parity de-interleave + NCHW transpose.
    scale_p = jnp.tile(scale, 4)                  # packed ch = (pr*2+pc)*Cout+co
    shift_p = jnp.tile(shift, 4)
    out = y[:, :, :valid] * scale_p + shift_p
    out = out.reshape(T, B, H, W, 2, 2, Cout)
    out = jnp.transpose(out, (0, 1, 6, 2, 4, 3, 5))
    return out.reshape(T, B, Cout, 2 * H, 2 * W)


if __name__ == "__main__":
    key = jax.random.PRNGKey(0)
    k_x, k_w = jax.random.split(key)

    T, B, dim, H, W = 4, 2, 4, 16, 16
    x = jax.random.normal(k_x, (T, B, dim, H, W), dtype=jnp.float32)

    # Conv2d(dim, dim//2, 3, padding=1, bias=False): torch weight (Cout,Cin,3,3)
    w_torch = jax.random.normal(k_w, (dim // 2, dim, 3, 3), dtype=jnp.float32) * 0.1
    conv_w = jnp.transpose(w_torch, (2, 3, 1, 0))        # -> (3, 3, Cin, Cout)

    # tdBN affine params at init: weight = alpha * v_th, bias = 0
    gamma = jnp.full((dim // 2,), ALPHA * V_TH, dtype=jnp.float32)
    beta = jnp.zeros((dim // 2,), dtype=jnp.float32)

    out = upsampling_forward(x, conv_w, gamma, beta)
    out = jax.block_until_ready(out)

    assert out.shape == (T, B, dim // 2, 2 * H, 2 * W), out.shape
    assert bool(jnp.isfinite(out).all())
    # tdBN self-consistency: per-channel mean of the normalized output == beta
    ch_mean = jnp.mean(out, axis=(0, 1, 3, 4))
    assert bool(jnp.all(jnp.abs(ch_mean) < 1e-3)), ch_mean
    print("KERNEL_OK")
</pallas_src>

<mosaic_0001>
module attributes {stable_mosaic.version = 11 : i64} {
  func.func @_up_lif_kernel(%arg0: i32, %arg1: i32, %arg2: memref<1x1x16x16x4xf32, #tpu.memory_space<vmem>>, %arg3: memref<1x1x256x16xbf16, #tpu.memory_space<vmem>>, %arg4: memref<256x16xf32, #tpu.memory_space<vmem>>) attributes {dimension_semantics = [#tpu.dimension_semantics<parallel>, #tpu.dimension_semantics<arbitrary>], iteration_bounds = array<i64: 2, 4>, scalar_prefetch = 0 : i64, scratch_operands = 1 : i64, tpu.core_type = #tpu.core_type<tc>, window_params = [{transform_indices = @transform_0, window_bounds = array<i64: 1, 1, 16, 16, 4>}, {transform_indices = @transform_1, window_bounds = array<i64: 1, 1, 256, 16>}]} {
    %c0_i32 = arith.constant 0 : i32
    %0 = arith.cmpi eq, %arg1, %c0_i32 : i32
    %1 = arith.extui %0 : i1 to i32
    %c0_i32_0 = arith.constant 0 : i32
    %2 = arith.cmpi ne, %1, %c0_i32_0 : i32
    scf.if %2 {
      %cst_27 = arith.constant 0.000000e+00 : f32
      %79 = vector.broadcast %cst_27 : f32 to vector<256x16xf32>
      %c0_28 = arith.constant 0 : index
      %c0_29 = arith.constant 0 : index
      %80 = vector.load %arg4[%c0_28, %c0_29] : memref<256x16xf32, #tpu.memory_space<vmem>>, vector<256x16xf32>
      tpu.vector_store %arg4[%c0_28, %c0_29], %79 {strides = array<i32>} : memref<256x16xf32, #tpu.memory_space<vmem>>, vector<256x16xf32>,
    } else {
    }
    %c0 = arith.constant 0 : index
    %c0_1 = arith.constant 0 : index
    %c0_2 = arith.constant 0 : index
    %c0_3 = arith.constant 0 : index
    %c0_4 = arith.constant 0 : index
    %3 = vector.load %arg2[%c0, %c0_1, %c0_2, %c0_3, %c0_4] : memref<1x1x16x16x4xf32, #tpu.memory_space<vmem>>, vector<1x1x16x16x4xf32>
    %4 = vector.shape_cast %3 : vector<1x1x16x16x4xf32> to vector<16x16x4xf32>
    %5 = vector.shape_cast %4 : vector<16x16x4xf32> to vector<256x4xf32>
    %6 = vector.extract_strided_slice %5 {offsets = [0, 0], sizes = [16, 4], strides = [1, 1]} : vector<256x4xf32> to vector<16x4xf32>
    %7 = vector.extract_strided_slice %5 {offsets = [0, 0], sizes = [240, 4], strides = [1, 1]} : vector<256x4xf32> to vector<240x4xf32>
    %8 = tpu.concatenate %6, %7 in 0 : vector<16x4xf32>, vector<240x4xf32> -> vector<256x4xf32>
    %9 = vector.extract_strided_slice %5 {offsets = [16, 0], sizes = [240, 4], strides = [1, 1]} : vector<256x4xf32> to vector<240x4xf32>
    %10 = vector.extract_strided_slice %5 {offsets = [240, 0], sizes = [16, 4], strides = [1, 1]} : vector<256x4xf32> to vector<16x4xf32>
    %11 = tpu.concatenate %9, %10 in 0 : vector<240x4xf32>, vector<16x4xf32> -> vector<256x4xf32>
    %cst = arith.constant 7.500000e-01 : f32
    %12 = vector.broadcast %cst : f32 to vector<256x4xf32>
    %13 = arith.mulf %12, %5 : vector<256x4xf32>
    %cst_5 = arith.constant 2.500000e-01 : f32
    %14 = vector.broadcast %cst_5 : f32 to vector<256x4xf32>
    %15 = arith.mulf %14, %8 : vector<256x4xf32>
    %16 = arith.addf %13, %15 : vector<256x4xf32>
    %cst_6 = arith.constant 7.500000e-01 : f32
    %17 = vector.broadcast %cst_6 : f32 to vector<256x4xf32>
    %18 = arith.mulf %17, %5 : vector<256x4xf32>
    %cst_7 = arith.constant 2.500000e-01 : f32
    %19 = vector.broadcast %cst_7 : f32 to vector<256x4xf32>
    %20 = arith.mulf %19, %11 : vector<256x4xf32>
    %21 = arith.addf %18, %20 : vector<256x4xf32>
    %22 = tpu.concatenate %16, %16, %21, %21 in 1 : vector<256x4xf32>, vector<256x4xf32>, vector<256x4xf32>, vector<256x4xf32> -> vector<256x16xf32>
    %23 = tpu.iota {dimensions = array<i32: 0>} : vector<256x16xi32>
    %c16_i32 = arith.constant 16 : i32
    %c0_i32_8 = arith.constant 0 : i32
    %24 = arith.cmpi eq, %c16_i32, %c0_i32_8 : i32
    %c1_i32 = arith.constant 1 : i32
    %25 = arith.select %24, %c1_i32, %c16_i32 : i32
    %26 = vector.broadcast %25 : i32 to vector<256x16xi32>
    %27 = arith.remsi %23, %26 : vector<256x16xi32>
    %c0_i32_9 = arith.constant 0 : i32
    %28 = vector.broadcast %c0_i32_9 : i32 to vector<256x16xi32>
    %29 = arith.cmpi ne, %27, %28 : vector<256x16xi32>
    %c0_i32_10 = arith.constant 0 : i32
    %30 = vector.broadcast %c0_i32_10 : i32 to vector<256x16xi32>
    %31 = arith.cmpi slt, %27, %30 : vector<256x16xi32>
    %c0_i32_11 = arith.constant 0 : i32
    %32 = arith.cmpi slt, %25, %c0_i32_11 : i32
    %33 = vector.broadcast %32 : i1 to vector<256x16xi1>
    %34 = vector.broadcast %33 : vector<256x16xi1> to vector<256x16xi1>
    %35 = arith.xori %31, %34 : vector<256x16xi1>
    %36 = arith.andi %35, %29 : vector<256x16xi1>
    %37 = vector.broadcast %25 : i32 to vector<256x16xi32>
    %38 = arith.addi %27, %37 : vector<256x16xi32>
    %39 = arith.select %36, %38, %27 : vector<256x16xi1>, vector<256x16xi32>
    %c0_i32_12 = arith.constant 0 : i32
    %40 = vector.broadcast %c0_i32_12 : i32 to vector<256x16xi32>
    %41 = arith.cmpi eq, %39, %40 : vector<256x16xi32>
    %c1_i32_13 = arith.constant 1 : i32
    %42 = tpu.dynamic_rotate %22 by %c1_i32_13 dim 0 : vector<256x16xf32>, i32 -> vector<256x16xf32>
    %43 = arith.select %41, %22, %42 : vector<256x16xi1>, vector<256x16xf32>
    %c15_i32 = arith.constant 15 : i32
    %44 = vector.broadcast %c15_i32 : i32 to vector<256x16xi32>
    %45 = arith.cmpi eq, %39, %44 : vector<256x16xi32>
    %c255_i32 = arith.constant 255 : i32
    %46 = tpu.dynamic_rotate %22 by %c255_i32 dim 0 : vector<256x16xf32>, i32 -> vector<256x16xf32>
    %47 = arith.select %45, %22, %46 : vector<256x16xi1>, vector<256x16xf32>
    %48 = tpu.iota {dimensions = array<i32: 1>} : vector<256x16xi32>
    %c4_i32 = arith.constant 4 : i32
    %49 = vector.broadcast %c4_i32 : i32 to vector<256x16xi32>
    %50 = arith.cmpi slt, %48, %49 : vector<256x16xi32>
    %c8_i32 = arith.constant 8 : i32
    %51 = vector.broadcast %c8_i32 : i32 to vector<256x16xi32>
    %52 = arith.cmpi sge, %48, %51 : vector<256x16xi32>
    %c12_i32 = arith.constant 12 : i32
    %53 = vector.broadcast %c12_i32 : i32 to vector<256x16xi32>
    %54 = arith.cmpi slt, %48, %53 : vector<256x16xi32>
    %55 = arith.andi %52, %54 : vector<256x16xi1>
    %56 = arith.ori %50, %55 : vector<256x16xi1>
    %cst_14 = arith.constant 7.500000e-01 : f32
    %57 = vector.broadcast %cst_14 : f32 to vector<256x16xf32>
    %58 = arith.mulf %57, %22 : vector<256x16xf32>
    %59 = arith.select %56, %43, %47 : vector<256x16xi1>, vector<256x16xf32>
    %cst_15 = arith.constant 2.500000e-01 : f32
    %60 = vector.broadcast %cst_15 : f32 to vector<256x16xf32>
    %61 = arith.mulf %60, %59 : vector<256x16xf32>
    %62 = arith.addf %58, %61 : vector<256x16xf32>
    %c0_16 = arith.constant 0 : index
    %c0_17 = arith.constant 0 : index
    %63 = vector.load %arg4[%c0_16, %c0_17] : memref<256x16xf32, #tpu.memory_space<vmem>>, vector<256x16xf32>
    %cst_18 = arith.constant 5.000000e-01 : f32
    %64 = vector.broadcast %cst_18 : f32 to vector<256x16xf32>
    %65 = arith.mulf %64, %63 : vector<256x16xf32>
    %66 = arith.addf %65, %62 : vector<256x16xf32>
    %cst_19 = arith.constant 1.500000e-01 : f32
    %67 = vector.broadcast %cst_19 : f32 to vector<256x16xf32>
    %68 = arith.cmpf oge, %66, %67 : vector<256x16xf32>
    %69 = arith.extui %68 : vector<256x16xi1> to vector<256x16xi32>
    %70 = arith.sitofp %69 : vector<256x16xi32> to vector<256x16xf32>
    %cst_20 = arith.constant 1.000000e+00 : f32
    %71 = vector.broadcast %cst_20 : f32 to vector<256x16xf32>
    %72 = arith.subf %71, %70 : vector<256x16xf32>
    %73 = arith.mulf %66, %72 : vector<256x16xf32>
    %c0_21 = arith.constant 0 : index
    %c0_22 = arith.constant 0 : index
    %74 = vector.load %arg4[%c0_21, %c0_22] : memref<256x16xf32, #tpu.memory_space<vmem>>, vector<256x16xf32>
    tpu.vector_store %arg4[%c0_21, %c0_22], %73 {strides = array<i32>} : memref<256x16xf32, #tpu.memory_space<vmem>>, vector<256x16xf32>,
    %75 = arith.truncf %70 : vector<256x16xf32> to vector<256x16xbf16>
    %c0_23 = arith.constant 0 : index
    %c0_24 = arith.constant 0 : index
    %c0_25 = arith.constant 0 : index
    %c0_26 = arith.constant 0 : index
    %76 = vector.load %arg3[%c0_23, %c0_24, %c0_25, %c0_26] : memref<1x1x256x16xbf16, #tpu.memory_space<vmem>>, vector<1x1x256x16xbf16>
    %77 = vector.shape_cast %76 : vector<1x1x256x16xbf16> to vector<256x16xbf16>
    %78 = vector.shape_cast %75 : vector<256x16xbf16> to vector<1x1x256x16xbf16>
    tpu.vector_store %arg3[%c0_23, %c0_24, %c0_25, %c0_26], %78 {strides = array<i32>} : memref<1x1x256x16xbf16, #tpu.memory_space<vmem>>, vector<1x1x256x16xbf16>,
    return
  }
  func.func @transform_0(%arg0: i32, %arg1: i32) -> (i32, i32, i32, i32, i32) {
    %c0_i32 = arith.constant 0 : i32
    %c0_i32_0 = arith.constant 0 : i32
    %c0_i32_1 = arith.constant 0 : i32
    %c0_i32_2 = arith.constant 0 : i32
    return %arg1, %arg0, %c0_i32, %c0_i32_0, %c0_i32_1 : i32, i32, i32, i32, i32
  }
  func.func @transform_1(%arg0: i32, %arg1: i32) -> (i32, i32, i32, i32) {
    %c0_i32 = arith.constant 0 : i32
    %c0_i32_0 = arith.constant 0 : i32
    %c0_i32_1 = arith.constant 0 : i32
    return %arg1, %arg0, %c0_i32, %c0_i32_0 : i32, i32, i32, i32
  }
}

module attributes {stable_mosaic.version = 11 : i64} {
  func.func @_conv_stats_kernel(%arg0: i32, %arg1: memref<1x16x16x16xbf16, #tpu.memory_space<vmem>>, %arg2: memref<144x128xbf16, #tpu.memory_space<vmem>>, %arg3: memref<1x256x128xf32, #tpu.memory_space<vmem>>, %arg4: memref<1x1x128xf32, #tpu.memory_space<vmem>>, %arg5: memref<1x1x128xf32, #tpu.memory_space<vmem>>) attributes {dimension_semantics = [#tpu.dimension_semantics<parallel>], iteration_bounds = array<i64: 8>, scalar_prefetch = 0 : i64, scratch_operands = 0 : i64, tpu.core_type = #tpu.core_type<tc>, window_params = [{transform_indices = @transform_0, window_bounds = array<i64: 1, 16, 16, 16>}, {pipeline_mode = #tpu.pipeline_mode<synchronous>, transform_indices = @transform_1, window_bounds = array<i64: 144, 128>}, {transform_indices = @transform_2, window_bounds = array<i64: 1, 256, 128>}, {transform_indices = @transform_3, window_bounds = array<i64: 1, 1, 128>}, {transform_indices = @transform_4, window_bounds = array<i64: 1, 1, 128>}]} {
    %c0 = arith.constant 0 : index
    %c0_0 = arith.constant 0 : index
    %c0_1 = arith.constant 0 : index
    %c0_2 = arith.constant 0 : index
    %0 = vector.load %arg1[%c0, %c0_0, %c0_1, %c0_2] : memref<1x16x16x16xbf16, #tpu.memory_space<vmem>>, vector<1x16x16x16xbf16>
    %1 = vector.shape_cast %0 : vector<1x16x16x16xbf16> to vector<16x16x16xbf16>
    %cst = arith.constant 0.000000e+00 : bf16
    %2 = vector.broadcast %cst : bf16 to vector<1x16x16xbf16>
    %3 = tpu.concatenate %2, %1, %2 in 0 : vector<1x16x16xbf16>, vector<16x16x16xbf16>, vector<1x16x16xbf16> -> vector<18x16x16xbf16>
    %cst_3 = arith.constant 0.000000e+00 : bf16
    %4 = vector.broadcast %cst_3 : bf16 to vector<18x1x16xbf16>
    %5 = vector.extract_strided_slice %3 {offsets = [0, 0, 0], sizes = [18, 15, 16], strides = [1, 1, 1]} : vector<18x16x16xbf16> to vector<18x15x16xbf16>
    %6 = tpu.concatenate %4, %5 in 1 : vector<18x1x16xbf16>, vector<18x15x16xbf16> -> vector<18x16x16xbf16>
    %7 = vector.extract_strided_slice %3 {offsets = [0, 1, 0], sizes = [18, 15, 16], strides = [1, 1, 1]} : vector<18x16x16xbf16> to vector<18x15x16xbf16>
    %8 = tpu.concatenate %7, %4 in 1 : vector<18x15x16xbf16>, vector<18x1x16xbf16> -> vector<18x16x16xbf16>
    %9 = vector.extract_strided_slice %6 {offsets = [0, 0, 0], sizes = [16, 16, 16], strides = [1, 1, 1]} : vector<18x16x16xbf16> to vector<16x16x16xbf16>
    %10 = vector.extract_strided_slice %3 {offsets = [0, 0, 0], sizes = [16, 16, 16], strides = [1, 1, 1]} : vector<18x16x16xbf16> to vector<16x16x16xbf16>
    %11 = vector.extract_strided_slice %8 {offsets = [0, 0, 0], sizes = [16, 16, 16], strides = [1, 1, 1]} : vector<18x16x16xbf16> to vector<16x16x16xbf16>
    %12 = vector.extract_strided_slice %6 {offsets = [1, 0, 0], sizes = [16, 16, 16], strides = [1, 1, 1]} : vector<18x16x16xbf16> to vector<16x16x16xbf16>
    %13 = vector.extract_strided_slice %3 {offsets = [1, 0, 0], sizes = [16, 16, 16], strides = [1, 1, 1]} : vector<18x16x16xbf16> to vector<16x16x16xbf16>
    %14 = vector.extract_strided_slice %8 {offsets = [1, 0, 0], sizes = [16, 16, 16], strides = [1, 1, 1]} : vector<18x16x16xbf16> to vector<16x16x16xbf16>
    %15 = vector.extract_strided_slice %6 {offsets = [2, 0, 0], sizes = [16, 16, 16], strides = [1, 1, 1]} : vector<18x16x16xbf16> to vector<16x16x16xbf16>
    %16 = vector.extract_strided_slice %3 {offsets = [2, 0, 0], sizes = [16, 16, 16], strides = [1, 1, 1]} : vector<18x16x16xbf16> to vector<16x16x16xbf16>
    %17 = vector.extract_strided_slice %8 {offsets = [2, 0, 0], sizes = [16, 16, 16], strides = [1, 1, 1]} : vector<18x16x16xbf16> to vector<16x16x16xbf16>
    %18 = tpu.concatenate %9, %10, %11, %12, %13, %14, %15, %16, %17 in 2 : vector<16x16x16xbf16>, vector<16x16x16xbf16>, vector<16x16x16xbf16>, vector<16x16x16xbf16>, vector<16x16x16xbf16>, vector<16x16x16xbf16>, vector<16x16x16xbf16>, vector<16x16x16xbf16>, vector<16x16x16xbf16> -> vector<16x16x144xbf16>
    %19 = vector.shape_cast %18 : vector<16x16x144xbf16> to vector<256x144xbf16>
    %c0_4 = arith.constant 0 : index
    %c0_5 = arith.constant 0 : index
    %20 = vector.load %arg2[%c0_4, %c0_5] : memref<144x128xbf16, #tpu.memory_space<vmem>>, vector<144x128xbf16>
    %cst_6 = arith.constant dense<0.000000e+00> : vector<256x128xf32>
    %21 = tpu.matmul %19, %20, %cst_6 {dimension_numbers = #tpu.dot_dimension_numbers<[1], [0], [0], [1], [0, 0, 1, 1], [], []>} : vector<256x144xbf16>, vector<144x128xbf16>, vector<256x128xf32> -> vector<256x128xf32>
    %c0_7 = arith.constant 0 : index
    %c0_8 = arith.constant 0 : index
    %c0_9 = arith.constant 0 : index
    %22 = vector.load %arg3[%c0_7, %c0_8, %c0_9] : memref<1x256x128xf32, #tpu.memory_space<vmem>>, vector<1x256x128xf32>
    %23 = vector.shape_cast %22 : vector<1x256x128xf32> to vector<256x128xf32>
    %24 = vector.shape_cast %21 : vector<256x128xf32> to vector<1x256x128xf32>
    tpu.vector_store %arg3[%c0_7, %c0_8, %c0_9], %24 {strides = array<i32>} : memref<1x256x128xf32, #tpu.memory_space<vmem>>, vector<1x256x128xf32>,
    %cst_10 = arith.constant dense<0.000000e+00> : vector<128xf32>
    %25 = vector.multi_reduction <add>, %21, %cst_10 [0] : vector<256x128xf32> to vector<128xf32>
    %26 = vector.shape_cast %25 : vector<128xf32> to vector<1x128xf32>
    %c0_11 = arith.constant 0 : index
    %c0_12 = arith.constant 0 : index
    %c0_13 = arith.constant 0 : index
    %27 = vector.load %arg4[%c0_11, %c0_12, %c0_13] : memref<1x1x128xf32, #tpu.memory_space<vmem>>, vector<1x1x128xf32>
    %28 = vector.shape_cast %27 : vector<1x1x128xf32> to vector<1x128xf32>
    %29 = vector.shape_cast %26 : vector<1x128xf32> to vector<1x1x128xf32>
    tpu.vector_store %arg4[%c0_11, %c0_12, %c0_13], %29 {strides = array<i32>} : memref<1x1x128xf32, #tpu.memory_space<vmem>>, vector<1x1x128xf32>,
    %30 = arith.mulf %21, %21 : vector<256x128xf32>
    %cst_14 = arith.constant dense<0.000000e+00> : vector<128xf32>
    %31 = vector.multi_reduction <add>, %30, %cst_14 [0] : vector<256x128xf32> to vector<128xf32>
    %32 = vector.shape_cast %31 : vector<128xf32> to vector<1x128xf32>
    %c0_15 = arith.constant 0 : index
    %c0_16 = arith.constant 0 : index
    %c0_17 = arith.constant 0 : index
    %33 = vector.load %arg5[%c0_15, %c0_16, %c0_17] : memref<1x1x128xf32, #tpu.memory_space<vmem>>, vector<1x1x128xf32>
    %34 = vector.shape_cast %33 : vector<1x1x128xf32> to vector<1x128xf32>
    %35 = vector.shape_cast %32 : vector<1x128xf32> to vector<1x1x128xf32>
    tpu.vector_store %arg5[%c0_15, %c0_16, %c0_17], %35 {strides = array<i32>} : memref<1x1x128xf32, #tpu.memory_space<vmem>>, vector<1x1x128xf32>,
    return
  }
  func.func @transform_0(%arg0: i32) -> (i32, i32, i32, i32) {
    %c0_i32 = arith.constant 0 : i32
    %c0_i32_0 = arith.constant 0 : i32
    %c0_i32_1 = arith.constant 0 : i32
    %c0_i32_2 = arith.constant 0 : i32
    return %arg0, %c0_i32, %c0_i32_0, %c0_i32_1 : i32, i32, i32, i32
  }
  func.func @transform_1(%arg0: i32) -> (i32, i32) {
    %c0_i32 = arith.constant 0 : i32
    %c0_i32_0 = arith.constant 0 : i32
    %c0_i32_1 = arith.constant 0 : i32
    return %c0_i32, %c0_i32_0 : i32, i32
  }
  func.func @transform_2(%arg0: i32) -> (i32, i32, i32) {
    %c0_i32 = arith.constant 0 : i32
    %c0_i32_0 = arith.constant 0 : i32
    %c0_i32_1 = arith.constant 0 : i32
    return %arg0, %c0_i32, %c0_i32_0 : i32, i32, i32
  }
  func.func @transform_3(%arg0: i32) -> (i32, i32, i32) {
    %c0_i32 = arith.constant 0 : i32
    %c0_i32_0 = arith.constant 0 : i32
    %c0_i32_1 = arith.constant 0 : i32
    return %arg0, %c0_i32, %c0_i32_0 : i32, i32, i32
  }
  func.func @transform_4(%arg0: i32) -> (i32, i32, i32) {
    %c0_i32 = arith.constant 0 : i32
    %c0_i32_0 = arith.constant 0 : i32
    %c0_i32_1 = arith.constant 0 : i32
    return %arg0, %c0_i32, %c0_i32_0 : i32, i32, i32
  }
}

</mosaic_0001>

<llo_original>
// kernel: tile.17
$region0: #{tile.17}
  #allocation0 [shape = 's32[1]{0}', space=sflag, size = 0x4, scoped, tag = 'scoped memory for tile.17']
  %s0 = inlined_call_operand.vmem [shape: f32[2], index: 0, kind: input, shape index: {}]
  %s1 = inlined_call_operand.vmem [shape: f32[4,2], index: 1, kind: output, shape index: {}]
  // Predicated region
  $region2: #{tile.17} parent=0 // pred_check
    _
  $region3: #{tile.17} parent=0 // pred_check_branch
    %3 = sbr.rel (0) target = $region5
  $region4: #{tile.17} parent=0 // pred_region
    _
  $region5: #{tile.17} parent=0 // pred_fallthru
    _
  %v4 = vld [vmem:[%s0] ss:$0 sm:$0xff]
  %5 = vst [vmem:[%s1] sm:$0xf] %v4

// kernel: upsampling_forward.3
$region0: #{upsampling_forward.3}
  #allocation0 [shape = 'u32[]', space=smem, size = 0x4, offset = 0x4, fixed_abs, tag = 'smem constant byte address 0x4 - core index']
  #allocation1 [shape = 'u32[144,128]{1,0:T(1,128)}', space=vmem, size = 0x12000, scoped, tag = 'internal scratch']
  %s0 = inlined_call_operand.vmem [shape: bf16[8,16,16,16], index: 0, kind: input, shape index: {}]
  %s1 = inlined_call_operand.vmem [shape: bf16[144,128], index: 1, kind: input, shape index: {}]
  %s2 = inlined_call_operand.vmem [shape: f32[8,256,128], index: 2, kind: output, shape index: {0}]
  %s3 = inlined_call_operand.vmem [shape: f32[8,1,128], index: 3, kind: output, shape index: {1}]
  %s4 = inlined_call_operand.vmem [shape: f32[8,1,128], index: 4, kind: output, shape index: {2}]
  %5 = xla_tuple %s2, %s3, %s4
  %s6 = sld [smem:[#allocation0]]
  $region57: #{upsampling_forward.3} parent=0
    _
  %s8 = ssub.s32 1, %s6
  %s9 = scalar_select 0, %s8, %s6
  loop: start=0, step=1, limit=10
  $region2: #{upsampling_forward.3} parent=0 // loop_pre_header
    _
  $region3: #{upsampling_forward.3} parent=0 // loop_header
    %s11 = sphi 0, %s15
    %p12 = scmp.ge.s32.totalorder %s11, 10
    %s21 = sphi 0, %s23
    %s24 = sphi 0, %s21
    %s25 = sphi 0, %s24
    %s41 = sphi 0, %s25
    %s45 = sphi 0, %s45
    %s47 = sphi 0, %s45
    %s48 = sphi 0, %s47
    %s62 = sphi 0, %s48
    %s68 = sphi 0, %s70
    %s71 = sphi 0, %s68
    %s72 = sphi 0, %s71
    %s88 = sphi 0, %s72
    %s94 = sphi 0, %s96
    %s97 = sphi 0, %s94
    %s98 = sphi 0, %s97
    %s114 = sphi 0, %s98
    %s120 = sphi 0, %s122
    %s123 = sphi 0, %s120
    %s124 = sphi 0, %s123
    %s140 = sphi 0, %s124
  $region4: #{upsampling_forward.3} parent=0 // loop_header_branch
    %14 = sbr.rel (%p12) target = $region8
  $region5: #{upsampling_forward.3} parent=0 // loop_body
    %s16 = ssub.s32 %s11, 1
    %s17 = ssub.s32 %s11, 2
    %s18 = sadd.s32 %s11, 1
    %s19 = ssub.s32 %s11, %s18
    %p20 = scmp.eq.s32.totalorder %s19, 0
    %s22 = sadd.s32 %s21, 1
    %s23 = scalar_select %p20, %s21, %s22
    %p26 = pneg %p20
    %p27 = scmp.eq.s32.totalorder %s11, 7
    %p28 = por %p26, %p27
    %p29 = scmp.ne.s32.totalorder %s21, %s24
    %p30 = scmp.eq.s32.totalorder %s11, 0
    %p31 = por %p29, %p30
    %p32 = scmp.ne.s32.totalorder %s21, %s24
    %p33 = scmp.eq.s32.totalorder %s16, 7
    %p34 = por %p32, %p33
    %p35 = scmp.ne.s32.totalorder %s24, %s25
    %p36 = scmp.eq.s32.totalorder %s16, 0
    %p37 = por %p35, %p36
    %p38 = scmp.ne.s32.totalorder %s24, %s25
    %p39 = scmp.eq.s32.totalorder %s17, 7
    %p40 = por %p38, %p39
    %p42 = scmp.ne.s32.totalorder %s25, %s41
    %p43 = scmp.eq.s32.totalorder %s17, 0
    %p44 = por %p42, %p43
    %s46 = sadd.s32 %s45, 1
    %p49 = scmp.eq.s32.totalorder %s11, 7
    %p50 = scmp.ne.s32.totalorder %s45, %s47
    %p51 = scmp.eq.s32.totalorder %s11, 0
    %p52 = por %p50, %p51
    %p53 = scmp.ne.s32.totalorder %s45, %s47
    %p54 = scmp.eq.s32.totalorder %s16, 7
    %p55 = por %p53, %p54
    %p56 = scmp.ne.s32.totalorder %s47, %s48
    %p57 = scmp.eq.s32.totalorder %s16, 0
    %p58 = por %p56, %p57
    %p59 = scmp.ne.s32.totalorder %s47, %s48
    %p60 = scmp.eq.s32.totalorder %s17, 7
    %p61 = por %p59, %p60
    %p63 = scmp.ne.s32.totalorder %s48, %s62
    %p64 = scmp.eq.s32.totalorder %s17, 0
    %p65 = por %p63, %p64
    %s66 = ssub.s32 %s11, %s18
    %p67 = scmp.eq.s32.totalorder %s66, 0
    %s69 = sadd.s32 %s68, 1
    %s70 = scalar_select %p67, %s68, %s69
    %p73 = pneg %p67
    %p74 = scmp.eq.s32.totalorder %s11, 7
    %p75 = por %p73, %p74
    %p76 = scmp.ne.s32.totalorder %s68, %s71
    %p77 = scmp.eq.s32.totalorder %s11, 0
    %p78 = por %p76, %p77
    %p79 = scmp.ne.s32.totalorder %s68, %s71
    %p80 = scmp.eq.s32.totalorder %s16, 7
    %p81 = por %p79, %p80
    %p82 = scmp.ne.s32.totalorder %s71, %s72
    %p83 = scmp.eq.s32.totalorder %s16, 0
    %p84 = por %p82, %p83
    %p85 = scmp.ne.s32.totalorder %s71, %s72
    %p86 = scmp.eq.s32.totalorder %s17, 7
    %p87 = por %p85, %p86
    %p89 = scmp.ne.s32.totalorder %s72, %s88
    %p90 = scmp.eq.s32.totalorder %s17, 0
    %p91 = por %p89, %p90
    %s92 = ssub.s32 %s11, %s18
    %p93 = scmp.eq.s32.totalorder %s92, 0
    %s95 = sadd.s32 %s94, 1
    %s96 = scalar_select %p93, %s94, %s95
    %p99 = pneg %p93
    %p100 = scmp.eq.s32.totalorder %s11, 7
    %p101 = por %p99, %p100
    %p102 = scmp.ne.s32.totalorder %s94, %s97
    %p103 = scmp.eq.s32.totalorder %s11, 0
    %p104 = por %p102, %p103
    %p105 = scmp.ne.s32.totalorder %s94, %s97
    %p106 = scmp.eq.s32.totalorder %s16, 7
    %p107 = por %p105, %p106
    %p108 = scmp.ne.s32.totalorder %s97, %s98
    %p109 = scmp.eq.s32.totalorder %s16, 0
    %p110 = por %p108, %p109
    %p111 = scmp.ne.s32.totalorder %s97, %s98
    %p112 = scmp.eq.s32.totalorder %s17, 7
    %p113 = por %p111, %p112
    %p115 = scmp.ne.s32.totalorder %s98, %s114
    %p116 = scmp.eq.s32.totalorder %s17, 0
    %p117 = por %p115, %p116
    %s118 = ssub.s32 %s11, %s18
    %p119 = scmp.eq.s32.totalorder %s118, 0
    %s121 = sadd.s32 %s120, 1
    %s122 = scalar_select %p119, %s120, %s121
    %p125 = pneg %p119
    %p126 = scmp.eq.s32.totalorder %s11, 7
    %p127 = por %p125, %p126
    %p128 = scmp.ne.s32.totalorder %s120, %s123
    %p129 = scmp.eq.s32.totalorder %s11, 0
    %p130 = por %p128, %p129
    %p131 = scmp.ne.s32.totalorder %s120, %s123
    %p132 = scmp.eq.s32.totalorder %s16, 7
    %p133 = por %p131, %p132
    %p134 = scmp.ne.s32.totalorder %s123, %s124
    %p135 = scmp.eq.s32.totalorder %s16, 0
    %p136 = por %p134, %p135
    %p137 = scmp.ne.s32.totalorder %s123, %s124
    %p138 = scmp.eq.s32.totalorder %s17, 7
    %p139 = por %p137, %p138
    %p141 = scmp.ne.s32.totalorder %s124, %s140
    %p142 = scmp.eq.s32.totalorder %s17, 0
    %p143 = por %p141, %p142
    %p144 = scmp.le.s32.totalorder 1, %s11
    %p145 = scmp.lt.s32.totalorder %s11, 9
    %p146 = pnand %p144, %p145
    %p147 = pneg %p146
    // Predicated region
    $region9: #{upsampling_forward.3} parent=5 // pred_check
      _
    $region10: #{upsampling_forward.3} parent=5 // pred_check_branch
      %149 = sbr.rel (%p146) target = $region12
    $region11: #{upsampling_forward.3} parent=5 // pred_region
      %s150 = ssub.s32 %s11, 1
      // Predicated region
      $region13: #{upsampling_forward.3} parent=11 // pred_check
        %p151 = pneg %p58
      $region14: #{upsampling_forward.3} parent=11 // pred_check_branch
        %153 = sbr.rel (%p151) target = $region16
      $region15: #{upsampling_forward.3} parent=11 // pred_region
        _
      $region16: #{upsampling_forward.3} parent=11 // pred_fallthru
        _
    $region12: #{upsampling_forward.3} parent=5 // pred_fallthru
      _
    %p154 = scmp.lt.s32.totalorder %s11, 8
    // Predicated region
    $region17: #{upsampling_forward.3} parent=5 // pred_check
      %p155 = pneg %p154
    $region18: #{upsampling_forward.3} parent=5 // pred_check_branch
      %157 = sbr.rel (%p155) target = $region20
    $region19: #{upsampling_forward.3} parent=5 // pred_region
      // Predicated region
      $region21: #{upsampling_forward.3} parent=19 // pred_check
        %p158 = pneg %p31
      $region22: #{upsampling_forward.3} parent=19 // pred_check_branch
        %160 = sbr.rel (%p158) target = $region24
      $region23: #{upsampling_forward.3} parent=19 // pred_region
        %p161 = scmp.lt.s32.totalorder %s11, 7
        %s162 = scalar_select %p161, %s11, 7
        %s163 = smul.addr %s162, 32
        %s164 = smul.addr %s163, 4
        %s165 = scalar_lea.vmem %s0, %s164
      $region24: #{upsampling_forward.3} parent=19 // pred_fallthru
        _
    $region20: #{upsampling_forward.3} parent=5 // pred_fallthru
      _
    %p166 = scmp.le.s32.totalorder 1, %s11
    %p167 = scmp.lt.s32.totalorder %s11, 9
    %p168 = pnand %p166, %p167
    %p169 = pneg %p168
    // Predicated region
    $region25: #{upsampling_forward.3} parent=5 // pred_check
      _
    $region26: #{upsampling_forward.3} parent=5 // pred_check_branch
      %171 = sbr.rel (%p168) target = $region28
    $region27: #{upsampling_forward.3} parent=5 // pred_region
      %s172 = ssub.s32 %s11, 1
      %p173 = scmp.lt.s32.totalorder %s16, 7
      %s174 = scalar_select %p173, %s16, 7
      %s175 = smul.addr %s174, 32
      %s176 = smul.addr %s175, 4
      %s177 = scalar_lea.vmem %s0, %s176
      %p178 = pneg %p37
      %p179 = pneg %p34
      %p180 = pneg %p58
      %p181 = pneg %p55
      %p182 = pneg %p84
      %p183 = pneg %p81
      %p184 = scmp.lt.s32.totalorder %s16, 7
      %s185 = scalar_select %p184, %s16, 7
      %s186 = smul.addr %s185, 32
      %s187 = smul.addr %s186, 8
      %s188 = scalar_lea.vmem %s2, %s187
      %p189 = pneg %p110
      %p190 = pneg %p107
      %p191 = scmp.lt.s32.totalorder %s16, 7
      %s192 = scalar_select %p191, %s16, 7
      %s193 = scalar_lea.vmem %s3, %s192
      %p194 = pneg %p136
      %p195 = pneg %p133
      %p196 = scmp.lt.s32.totalorder %s16, 7
      %s197 = scalar_select %p196, %s16, 7
      %s198 = scalar_lea.vmem %s4, %s197
      %p199 = scmp.lt.s32.totalorder %s16, 7
      %s200 = scalar_select %p199, %s16, 7
      %s201 = smul.addr %s200, 32
      %s202 = smul.addr %s201, 4
      %s203 = scalar_lea.vmem %s0, %s202
      %p204 = scmp.lt.s32.totalorder %s16, 7
      %s205 = scalar_select %p204, %s16, 7
      %s206 = smul.addr %s205, 32
      %s207 = smul.addr %s206, 8
      %s208 = scalar_lea.vmem %s2, %s207
      %p209 = scmp.lt.s32.totalorder %s16, 7
      %s210 = scalar_select %p209, %s16, 7
      %s211 = scalar_lea.vmem %s3, %s210
      %p212 = scmp.lt.s32.totalorder %s16, 7
      %s213 = scalar_select %p212, %s16, 7
      %s214 = scalar_lea.vmem %s4, %s213
      %v216 = vld [vmem:[%s203] sm:$0xf]
      %v217 = vld [vmem:[%s203 + $0x4] sm:$0xf]
      %v218 = vld [vmem:[%s203 + $0x8] sm:$0xf]
      %v219 = vld [vmem:[%s203 + $0xc] sm:$0xf]
      %v220 = vld [vmem:[%s203 + $0x10] sm:$0xf]
      %v221 = vld [vmem:[%s203 + $0x14] sm:$0xf]
      %v222 = vld [vmem:[%s203 + $0x18] sm:$0xf]
      %v223 = vld [vmem:[%s203 + $0x1c] sm:$0xf]
      %v224 = vld [vmem:[%s203 + $0x20] sm:$0xf]
      %v225 = vld [vmem:[%s203 + $0x24] sm:$0xf]
      %v226 = vld [vmem:[%s203 + $0x28] sm:$0xf]
      %v227 = vld [vmem:[%s203 + $0x2c] sm:$0xf]
      %v228 = vld [vmem:[%s203 + $0x30] sm:$0xf]
      %v229 = vld [vmem:[%s203 + $0x34] sm:$0xf]
      %v230 = vld [vmem:[%s203 + $0x38] sm:$0xf]
      %v231 = vld [vmem:[%s203 + $0x3c] sm:$0xf]
      %v232 = vld [vmem:[%s203 + $0x40] sm:$0xf]
      %v233 = vld [vmem:[%s203 + $0x44] sm:$0xf]
      %v234 = vld [vmem:[%s203 + $0x48] sm:$0xf]
      %v235 = vld [vmem:[%s203 + $0x4c] sm:$0xf]
      %v236 = vld [vmem:[%s203 + $0x50] sm:$0xf]
      %v237 = vld [vmem:[%s203 + $0x54] sm:$0xf]
      %v238 = vld [vmem:[%s203 + $0x58] sm:$0xf]
      %v239 = vld [vmem:[%s203 + $0x5c] sm:$0xf]
      %v240 = vld [vmem:[%s203 + $0x60] sm:$0xf]
      %v241 = vld [vmem:[%s203 + $0x64] sm:$0xf]
      %v242 = vld [vmem:[%s203 + $0x68] sm:$0xf]
      %v243 = vld [vmem:[%s203 + $0x6c] sm:$0xf]
      %v244 = vld [vmem:[%s203 + $0x70] sm:$0xf]
      %v245 = vld [vmem:[%s203 + $0x74] sm:$0xf]
      %v246 = vld [vmem:[%s203 + $0x78] sm:$0xf]
      %v247 = vld [vmem:[%s203 + $0x7c] sm:$0xf]
      %v280 = vunpack.c.l.b16 %v216
      %v281 = vunpack.c.l.b16 %v217
      %v282 = vunpack.c.l.b16 %v218
      %v283 = vunpack.c.l.b16 %v219
      %v284 = vunpack.c.l.b16 %v220
      %v285 = vunpack.c.l.b16 %v221
      %v286 = vunpack.c.l.b16 %v222
      %v287 = vunpack.c.l.b16 %v223
      %v288 = vunpack.c.l.b16 %v224
      %v289 = vunpack.c.l.b16 %v225
      %v290 = vunpack.c.l.b16 %v226
      %v291 = vunpack.c.l.b16 %v227
      %v292 = vunpack.c.l.b16 %v228
      %v293 = vunpack.c.l.b16 %v229
      %v294 = vunpack.c.l.b16 %v230
      %v295 = vunpack.c.l.b16 %v231
      %v296 = vunpack.c.l.b16 %v232
      %v297 = vunpack.c.l.b16 %v233
      %v298 = vunpack.c.l.b16 %v234
      %v299 = vunpack.c.l.b16 %v235
      %v300 = vunpack.c.l.b16 %v236
      %v301 = vunpack.c.l.b16 %v237
      %v302 = vunpack.c.l.b16 %v238
      %v303 = vunpack.c.l.b16 %v239
      %v304 = vunpack.c.l.b16 %v240
      %v305 = vunpack.c.l.b16 %v241
      %v306 = vunpack.c.l.b16 %v242
      %v307 = vunpack.c.l.b16 %v243
      %v308 = vunpack.c.l.b16 %v244
      %v309 = vunpack.c.l.b16 %v245
      %v310 = vunpack.c.l.b16 %v246
      %v311 = vunpack.c.l.b16 %v247
      %v312 = vpack.c.b16 %v281, %v280
      %v313 = vpack.c.b16 %v283, %v282
      %v314 = vpack.c.b16 %v285, %v284
      %v315 = vpack.c.b16 %v287, %v286
      %v316 = vpack.c.b16 %v289, %v288
      %v317 = vpack.c.b16 %v291, %v290
      %v318 = vpack.c.b16 %v293, %v292
      %v319 = vpack.c.b16 %v295, %v294
      %v320 = vpack.c.b16 %v297, %v296
      %v321 = vpack.c.b16 %v299, %v298
      %v322 = vpack.c.b16 %v301, %v300
      %v323 = vpack.c.b16 %v303, %v302
      %v324 = vpack.c.b16 %v305, %v304
      %v325 = vpack.c.b16 %v307, %v306
      %v326 = vpack.c.b16 %v309, %v308
      %v327 = vpack.c.b16 %v311, %v310
      %v329 = vshrl.u32 0, 16
      %v331 = vrot.slane %v329, 7
      %v332 = vshll.u32 0, 16
      %v334 = vor.u32 %v331, %v332
      %v336 = vshrl.u32 %v312, 16
      %v338 = vrot.slane %v336, 7
      %v339 = vshll.u32 %v312, 16
      %v341 = vor.u32 %v338, %v339
      %v343 = vshrl.u32 %v313, 16
      %v345 = vrot.slane %v343, 7
      %v346 = vshll.u32 %v313, 16
      %v348 = vor.u32 %v345, %v346
      %v350 = vshrl.u32 %v314, 16
      %v352 = vrot.slane %v350, 7
      %v353 = vshll.u32 %v314, 16
      %v355 = vor.u32 %v352, %v353
      %v357 = vshrl.u32 %v315, 16
      %v359 = vrot.slane %v357, 7
      %v360 = vshll.u32 %v315, 16
      %v362 = vor.u32 %v359, %v360
      %v364 = vshrl.u32 %v316, 16
      %v366 = vrot.slane %v364, 7
      %v367 = vshll.u32 %v316, 16
      %v369 = vor.u32 %v366, %v367
      %v371 = vshrl.u32 %v317, 16
      %v373 = vrot.slane %v371, 7
      %v374 = vshll.u32 %v317, 16
      %v376 = vor.u32 %v373, %v374
      %v378 = vshrl.u32 %v318, 16
      %v380 = vrot.slane %v378, 7
      %v381 = vshll.u32 %v318, 16
      %v383 = vor.u32 %v380, %v381
      %v385 = vshrl.u32 %v319, 16
      %v387 = vrot.slane %v385, 7
      %v388 = vshll.u32 %v319, 16
      %v390 = vor.u32 %v387, %v388
      %v392 = vshrl.u32 %v320, 16
      %v394 = vrot.slane %v392, 7
      %v395 = vshll.u32 %v320, 16
      %v397 = vor.u32 %v394, %v395
      %v399 = vshrl.u32 %v321, 16
      %v401 = vrot.slane %v399, 7
      %v402 = vshll.u32 %v321, 16
      %v404 = vor.u32 %v401, %v402
      %v406 = vshrl.u32 %v322, 16
      %v408 = vrot.slane %v406, 7
      %v409 = vshll.u32 %v322, 16
      %v411 = vor.u32 %v408, %v409
      %v413 = vshrl.u32 %v323, 16
      %v415 = vrot.slane %v413, 7
      %v416 = vshll.u32 %v323, 16
      %v418 = vor.u32 %v415, %v416
      %v420 = vshrl.u32 %v324, 16
      %v422 = vrot.slane %v420, 7
      %v423 = vshll.u32 %v324, 16
      %v425 = vor.u32 %v422, %v423
      %v427 = vshrl.u32 %v325, 16
      %v429 = vrot.slane %v427, 7
      %v430 = vshll.u32 %v325, 16
      %v432 = vor.u32 %v429, %v430
      %v434 = vshrl.u32 %v326, 16
      %v436 = vrot.slane %v434, 7
      %v437 = vshll.u32 %v326, 16
      %v439 = vor.u32 %v436, %v437
      %v441 = vshrl.u32 %v327, 16
      %v443 = vrot.slane %v441, 7
      %v444 = vshll.u32 %v327, 16
      %v446 = vor.u32 %v443, %v444
      %vm464 = vcmask 1040384
      %vm465 = vsmask.f32 256
      %vm466 = vmand %vm464, %vm465
      %v467 = vsel %vm466, 0, %v334
      %v468 = vsel %vm466, 0, %v341
      %v469 = vsel %vm466, 0, %v348
      %v470 = vsel %vm466, 0, %v355
      %v471 = vsel %vm466, 0, %v362
      %v472 = vsel %vm466, 0, %v369
      %v473 = vsel %vm466, 0, %v376
      %v474 = vsel %vm466, 0, %v383
      %v475 = vsel %vm466, 0, %v390
      %v476 = vsel %vm466, 0, %v397
      %v477 = vsel %vm466, 0, %v404
      %v478 = vsel %vm466, 0, %v411
      %v479 = vsel %vm466, 0, %v418
      %v480 = vsel %vm466, 0, %v425
      %v481 = vsel %vm466, 0, %v432
      %v482 = vsel %vm466, 0, %v439
      %v483 = vsel %vm466, 0, %v446
      %v484 = vrot.slane %v332, 1
      %v485 = vor.u32 %v329, %v484
      %v486 = vrot.slane %v339, 1
      %v487 = vor.u32 %v336, %v486
      %v488 = vrot.slane %v346, 1
      %v489 = vor.u32 %v343, %v488
      %v490 = vrot.slane %v353, 1
      %v491 = vor.u32 %v350, %v490
      %v492 = vrot.slane %v360, 1
      %v493 = vor.u32 %v357, %v492
      %v494 = vrot.slane %v367, 1
      %v495 = vor.u32 %v364, %v494
      %v496 = vrot.slane %v374, 1
      %v497 = vor.u32 %v371, %v496
      %v498 = vrot.slane %v381, 1
      %v499 = vor.u32 %v378, %v498
      %v500 = vrot.slane %v388, 1
      %v501 = vor.u32 %v385, %v500
      %v502 = vrot.slane %v395, 1
      %v503 = vor.u32 %v392, %v502
      %v504 = vrot.slane %v402, 1
      %v505 = vor.u32 %v399, %v504
      %v506 = vrot.slane %v409, 1
      %v507 = vor.u32 %v406, %v506
      %v508 = vrot.slane %v416, 1
      %v509 = vor.u32 %v413, %v508
      %v510 = vrot.slane %v423, 1
      %v511 = vor.u32 %v420, %v510
      %v512 = vrot.slane %v430, 1
      %v513 = vor.u32 %v427, %v512
      %v514 = vrot.slane %v437, 1
      %v515 = vor.u32 %v434, %v514
      %v516 = vrot.slane %v444, 1
      %v517 = vor.u32 %v441, %v516
      %vm535 = vcmask 1047552
      %vm536 = vsmask.f32 7424
      %vm537 = vmand %vm535, %vm536
      %v538 = vsel %vm537, %v485, 0
      %v539 = vsel %vm537, %v487, 0
      %v540 = vsel %vm537, %v489, 0
      %v541 = vsel %vm537, %v491, 0
      %v542 = vsel %vm537, %v493, 0
      %v543 = vsel %vm537, %v495, 0
      %v544 = vsel %vm537, %v497, 0
      %v545 = vsel %vm537, %v499, 0
      %v546 = vsel %vm537, %v501, 0
      %v547 = vsel %vm537, %v503, 0
      %v548 = vsel %vm537, %v505, 0
      %v549 = vsel %vm537, %v507, 0
      %v550 = vsel %vm537, %v509, 0
      %v551 = vsel %vm537, %v511, 0
      %v552 = vsel %vm537, %v513, 0
      %v553 = vsel %vm537, %v515, 0
      %v554 = vsel %vm537, %v517, 0
      %556 = vrot.lane.b32.xlu0 0, 16
      %v557 = vpop.permute.xlu0 %556
      %558 = vrot.lane.b32.xlu0 %v312, 16
      %v559 = vpop.permute.xlu0 %558
      %560 = vrot.lane.b32.xlu0 %v313, 16
      %v561 = vpop.permute.xlu0 %560
      %562 = vrot.lane.b32.xlu0 %v314, 16
      %v563 = vpop.permute.xlu0 %562
      %564 = vrot.lane.b32.xlu0 %v315, 16
      %v565 = vpop.permute.xlu0 %564
      %566 = vrot.lane.b32.xlu0 %v316, 16
      %v567 = vpop.permute.xlu0 %566
      %568 = vrot.lane.b32.xlu0 %v317, 16
      %v569 = vpop.permute.xlu0 %568
      %570 = vrot.lane.b32.xlu0 %v318, 16
      %v571 = vpop.permute.xlu0 %570
      %572 = vrot.lane.b32.xlu0 %v319, 16
      %v573 = vpop.permute.xlu0 %572
      %574 = vrot.lane.b32.xlu0 %v320, 16
      %v575 = vpop.permute.xlu0 %574
      %576 = vrot.lane.b32.xlu0 %v321, 16
      %v577 = vpop.permute.xlu0 %576
      %578 = vrot.lane.b32.xlu0 %v322, 16
      %v579 = vpop.permute.xlu0 %578
      %580 = vrot.lane.b32.xlu0 %v323, 16
      %v581 = vpop.permute.xlu0 %580
      %582 = vrot.lane.b32.xlu0 %v324, 16
      %v583 = vpop.permute.xlu0 %582
      %584 = vrot.lane.b32.xlu0 %v325, 16
      %v585 = vpop.permute.xlu0 %584
      %586 = vrot.lane.b32.xlu0 %v326, 16
      %v587 = vpop.permute.xlu0 %586
      %604 = vrot.lane.b32.xlu0 %v538, 32
      %v605 = vpop.permute.xlu0 %604
      %606 = vrot.lane.b32.xlu0 %v539, 32
      %v607 = vpop.permute.xlu0 %606
      %608 = vrot.lane.b32.xlu0 %v540, 32
      %v609 = vpop.permute.xlu0 %608
      %610 = vrot.lane.b32.xlu0 %v541, 32
      %v611 = vpop.permute.xlu0 %610
      %612 = vrot.lane.b32.xlu0 %v542, 32
      %v613 = vpop.permute.xlu0 %612
      %614 = vrot.lane.b32.xlu0 %v543, 32
      %v615 = vpop.permute.xlu0 %614
      %616 = vrot.lane.b32.xlu0 %v544, 32
      %v617 = vpop.permute.xlu0 %616
      %618 = vrot.lane.b32.xlu0 %v545, 32
      %v619 = vpop.permute.xlu0 %618
      %620 = vrot.lane.b32.xlu0 %v546, 32
      %v621 = vpop.permute.xlu0 %620
      %622 = vrot.lane.b32.xlu0 %v547, 32
      %v623 = vpop.permute.xlu0 %622
      %624 = vrot.lane.b32.xlu0 %v548, 32
      %v625 = vpop.permute.xlu0 %624
      %626 = vrot.lane.b32.xlu0 %v549, 32
      %v627 = vpop.permute.xlu0 %626
      %628 = vrot.lane.b32.xlu0 %v550, 32
      %v629 = vpop.permute.xlu0 %628
      %630 = vrot.lane.b32.xlu0 %v551, 32
      %v631 = vpop.permute.xlu0 %630
      %632 = vrot.lane.b32.xlu0 %v552, 32
      %v633 = vpop.permute.xlu0 %632
      %634 = vrot.lane.b32.xlu0 %v553, 32
      %v635 = vpop.permute.xlu0 %634
      %652 = vrot.lane.b32.xlu0 %v468, 48
      %v653 = vpop.permute.xlu0 %652
      %654 = vrot.lane.b32.xlu0 %v469, 48
      %v655 = vpop.permute.xlu0 %654
      %656 = vrot.lane.b32.xlu0 %v470, 48
      %v657 = vpop.permute.xlu0 %656
      %658 = vrot.lane.b32.xlu0 %v471, 48
      %v659 = vpop.permute.xlu0 %658
      %660 = vrot.lane.b32.xlu0 %v472, 48
      %v661 = vpop.permute.xlu0 %660
      %662 = vrot.lane.b32.xlu0 %v473, 48
      %v663 = vpop.permute.xlu0 %662
      %664 = vrot.lane.b32.xlu0 %v474, 48
      %v665 = vpop.permute.xlu0 %664
      %666 = vrot.lane.b32.xlu0 %v475, 48
      %v667 = vpop.permute.xlu0 %666
      %668 = vrot.lane.b32.xlu0 %v476, 48
      %v669 = vpop.permute.xlu0 %668
      %670 = vrot.lane.b32.xlu0 %v477, 48
      %v671 = vpop.permute.xlu0 %670
      %672 = vrot.lane.b32.xlu0 %v478, 48
      %v673 = vpop.permute.xlu0 %672
      %674 = vrot.lane.b32.xlu0 %v479, 48
      %v675 = vpop.permute.xlu0 %674
      %676 = vrot.lane.b32.xlu0 %v480, 48
      %v677 = vpop.permute.xlu0 %676
      %678 = vrot.lane.b32.xlu0 %v481, 48
      %v679 = vpop.permute.xlu0 %678
      %680 = vrot.lane.b32.xlu0 %v482, 48
      %v681 = vpop.permute.xlu0 %680
      %682 = vrot.lane.b32.xlu0 %v483, 48
      %v683 = vpop.permute.xlu0 %682
      %684 = vrot.lane.b32.xlu0 %v312, 64
      %v685 = vpop.permute.xlu0 %684
      %686 = vrot.lane.b32.xlu0 %v313, 64
      %v687 = vpop.permute.xlu0 %686
      %688 = vrot.lane.b32.xlu0 %v314, 64
      %v689 = vpop.permute.xlu0 %688
      %690 = vrot.lane.b32.xlu0 %v315, 64
      %v691 = vpop.permute.xlu0 %690
      %692 = vrot.lane.b32.xlu0 %v316, 64
      %v693 = vpop.permute.xlu0 %692
      %694 = vrot.lane.b32.xlu0 %v317, 64
      %v695 = vpop.permute.xlu0 %694
      %696 = vrot.lane.b32.xlu0 %v318, 64
      %v697 = vpop.permute.xlu0 %696
      %698 = vrot.lane.b32.xlu0 %v319, 64
      %v699 = vpop.permute.xlu0 %698
      %700 = vrot.lane.b32.xlu0 %v320, 64
      %v701 = vpop.permute.xlu0 %700
      %702 = vrot.lane.b32.xlu0 %v321, 64
      %v703 = vpop.permute.xlu0 %702
      %704 = vrot.lane.b32.xlu0 %v322, 64
      %v705 = vpop.permute.xlu0 %704
      %706 = vrot.lane.b32.xlu0 %v323, 64
      %v707 = vpop.permute.xlu0 %706
      %708 = vrot.lane.b32.xlu0 %v324, 64
      %v709 = vpop.permute.xlu0 %708
      %710 = vrot.lane.b32.xlu0 %v325, 64
      %v711 = vpop.permute.xlu0 %710
      %712 = vrot.lane.b32.xlu0 %v326, 64
      %v713 = vpop.permute.xlu0 %712
      %714 = vrot.lane.b32.xlu0 %v327, 64
      %v715 = vpop.permute.xlu0 %714
      %717 = vrot.lane.b32.xlu0 %v539, 80
      %v718 = vpop.permute.xlu0 %717
      %719 = vrot.lane.b32.xlu0 %v540, 80
      %v720 = vpop.permute.xlu0 %719
      %721 = vrot.lane.b32.xlu0 %v541, 80
      %v722 = vpop.permute.xlu0 %721
      %723 = vrot.lane.b32.xlu0 %v542, 80
      %v724 = vpop.permute.xlu0 %723
      %725 = vrot.lane.b32.xlu0 %v543, 80
      %v726 = vpop.permute.xlu0 %725
      %727 = vrot.lane.b32.xlu0 %v544, 80
      %v728 = vpop.permute.xlu0 %727
      %729 = vrot.lane.b32.xlu0 %v545, 80
      %v730 = vpop.permute.xlu0 %729
      %731 = vrot.lane.b32.xlu0 %v546, 80
      %v732 = vpop.permute.xlu0 %731
      %733 = vrot.lane.b32.xlu0 %v547, 80
      %v734 = vpop.permute.xlu0 %733
      %735 = vrot.lane.b32.xlu0 %v548, 80
      %v736 = vpop.permute.xlu0 %735
      %737 = vrot.lane.b32.xlu0 %v549, 80
      %v738 = vpop.permute.xlu0 %737
      %739 = vrot.lane.b32.xlu0 %v550, 80
      %v740 = vpop.permute.xlu0 %739
      %741 = vrot.lane.b32.xlu0 %v551, 80
      %v742 = vpop.permute.xlu0 %741
      %743 = vrot.lane.b32.xlu0 %v552, 80
      %v744 = vpop.permute.xlu0 %743
      %745 = vrot.lane.b32.xlu0 %v553, 80
      %v746 = vpop.permute.xlu0 %745
      %747 = vrot.lane.b32.xlu0 %v554, 80
      %v748 = vpop.permute.xlu0 %747
      %750 = vrot.lane.b32.xlu0 %v469, 96
      %v751 = vpop.permute.xlu0 %750
      %752 = vrot.lane.b32.xlu0 %v470, 96
      %v753 = vpop.permute.xlu0 %752
      %754 = vrot.lane.b32.xlu0 %v471, 96
      %v755 = vpop.permute.xlu0 %754
      %756 = vrot.lane.b32.xlu0 %v472, 96
      %v757 = vpop.permute.xlu0 %756
      %758 = vrot.lane.b32.xlu0 %v473, 96
      %v759 = vpop.permute.xlu0 %758
      %760 = vrot.lane.b32.xlu0 %v474, 96
      %v761 = vpop.permute.xlu0 %760
      %762 = vrot.lane.b32.xlu0 %v475, 96
      %v763 = vpop.permute.xlu0 %762
      %764 = vrot.lane.b32.xlu0 %v476, 96
      %v765 = vpop.permute.xlu0 %764
      %766 = vrot.lane.b32.xlu0 %v477, 96
      %v767 = vpop.permute.xlu0 %766
      %768 = vrot.lane.b32.xlu0 %v478, 96
      %v769 = vpop.permute.xlu0 %768
      %770 = vrot.lane.b32.xlu0 %v479, 96
      %v771 = vpop.permute.xlu0 %770
      %772 = vrot.lane.b32.xlu0 %v480, 96
      %v773 = vpop.permute.xlu0 %772
      %774 = vrot.lane.b32.xlu0 %v481, 96
      %v775 = vpop.permute.xlu0 %774
      %776 = vrot.lane.b32.xlu0 %v482, 96
      %v777 = vpop.permute.xlu0 %776
      %778 = vrot.lane.b32.xlu0 %v483, 96
      %v779 = vpop.permute.xlu0 %778
      %780 = vrot.lane.b32.xlu0 %v467, 96
      %v781 = vpop.permute.xlu0 %780
      %782 = vrot.lane.b32.xlu0 %v313, 112
      %v783 = vpop.permute.xlu0 %782
      %784 = vrot.lane.b32.xlu0 %v314, 112
      %v785 = vpop.permute.xlu0 %784
      %786 = vrot.lane.b32.xlu0 %v315, 112
      %v787 = vpop.permute.xlu0 %786
      %788 = vrot.lane.b32.xlu0 %v316, 112
      %v789 = vpop.permute.xlu0 %788
      %790 = vrot.lane.b32.xlu0 %v317, 112
      %v791 = vpop.permute.xlu0 %790
      %792 = vrot.lane.b32.xlu0 %v318, 112
      %v793 = vpop.permute.xlu0 %792
      %794 = vrot.lane.b32.xlu0 %v319, 112
      %v795 = vpop.permute.xlu0 %794
      %796 = vrot.lane.b32.xlu0 %v320, 112
      %v797 = vpop.permute.xlu0 %796
      %798 = vrot.lane.b32.xlu0 %v321, 112
      %v799 = vpop.permute.xlu0 %798
      %800 = vrot.lane.b32.xlu0 %v322, 112
      %v801 = vpop.permute.xlu0 %800
      %802 = vrot.lane.b32.xlu0 %v323, 112
      %v803 = vpop.permute.xlu0 %802
      %804 = vrot.lane.b32.xlu0 %v324, 112
      %v805 = vpop.permute.xlu0 %804
      %806 = vrot.lane.b32.xlu0 %v325, 112
      %v807 = vpop.permute.xlu0 %806
      %808 = vrot.lane.b32.xlu0 %v326, 112
      %v809 = vpop.permute.xlu0 %808
      %810 = vrot.lane.b32.xlu0 %v327, 112
      %v811 = vpop.permute.xlu0 %810
      %812 = vrot.lane.b32.xlu0 0, 112
      %v813 = vpop.permute.xlu0 %812
      %vm814 = vcmask 130048
      %v817 = vsel %vm814, %v467, %v557
      %v820 = vsel %vm814, %v468, %v559
      %v823 = vsel %vm814, %v469, %v561
      %v826 = vsel %vm814, %v470, %v563
      %v829 = vsel %vm814, %v471, %v565
      %v832 = vsel %vm814, %v472, %v567
      %v835 = vsel %vm814, %v473, %v569
      %v838 = vsel %vm814, %v474, %v571
      %v841 = vsel %vm814, %v475, %v573
      %v844 = vsel %vm814, %v476, %v575
      %v847 = vsel %vm814, %v477, %v577
      %v850 = vsel %vm814, %v478, %v579
      %v853 = vsel %vm814, %v479, %v581
      %v856 = vsel %vm814, %v480, %v583
      %v859 = vsel %vm814, %v481, %v585
      %v862 = vsel %vm814, %v482, %v587
      %vm863 = vcmask 261120
      %v865 = vsel %vm863, %v817, %v605
      %v867 = vsel %vm863, %v820, %v607
      %v869 = vsel %vm863, %v823, %v609
      %v871 = vsel %vm863, %v826, %v611
      %v873 = vsel %vm863, %v829, %v613
      %v875 = vsel %vm863, %v832, %v615
      %v877 = vsel %vm863, %v835, %v617
      %v879 = vsel %vm863, %v838, %v619
      %v881 = vsel %vm863, %v841, %v621
      %v883 = vsel %vm863, %v844, %v623
      %v885 = vsel %vm863, %v847, %v625
      %v887 = vsel %vm863, %v850, %v627
      %v889 = vsel %vm863, %v853, %v629
      %v891 = vsel %vm863, %v856, %v631
      %v893 = vsel %vm863, %v859, %v633
      %v895 = vsel %vm863, %v862, %v635
      %vm896 = vcmask 392192
      %v898 = vsel %vm896, %v865, %v653
      %v900 = vsel %vm896, %v867, %v655
      %v902 = vsel %vm896, %v869, %v657
      %v904 = vsel %vm896, %v871, %v659
      %v906 = vsel %vm896, %v873, %v661
      %v908 = vsel %vm896, %v875, %v663
      %v910 = vsel %vm896, %v877, %v665
      %v912 = vsel %vm896, %v879, %v667
      %v914 = vsel %vm896, %v881, %v669
      %v916 = vsel %vm896, %v883, %v671
      %v918 = vsel %vm896, %v885, %v673
      %v920 = vsel %vm896, %v887, %v675
      %v922 = vsel %vm896, %v889, %v677
      %v924 = vsel %vm896, %v891, %v679
      %v926 = vsel %vm896, %v893, %v681
      %v928 = vsel %vm896, %v895, %v683
      %vm929 = vcmask 523264
      %v931 = vsel %vm929, %v898, %v685
      %v933 = vsel %vm929, %v900, %v687
      %v935 = vsel %vm929, %v902, %v689
      %v937 = vsel %vm929, %v904, %v691
      %v939 = vsel %vm929, %v906, %v693
      %v941 = vsel %vm929, %v908, %v695
      %v943 = vsel %vm929, %v910, %v697
      %v945 = vsel %vm929, %v912, %v699
      %v947 = vsel %vm929, %v914, %v701
      %v949 = vsel %vm929, %v916, %v703
      %v951 = vsel %vm929, %v918, %v705
      %v953 = vsel %vm929, %v920, %v707
      %v955 = vsel %vm929, %v922, %v709
      %v957 = vsel %vm929, %v924, %v711
      %v959 = vsel %vm929, %v926, %v713
      %v961 = vsel %vm929, %v928, %v715
      %vm962 = vcmask 654336
      %v964 = vsel %vm962, %v931, %v718
      %v966 = vsel %vm962, %v933, %v720
      %v968 = vsel %vm962, %v935, %v722
      %v970 = vsel %vm962, %v937, %v724
      %v972 = vsel %vm962, %v939, %v726
      %v974 = vsel %vm962, %v941, %v728
      %v976 = vsel %vm962, %v943, %v730
      %v978 = vsel %vm962, %v945, %v732
      %v980 = vsel %vm962, %v947, %v734
      %v982 = vsel %vm962, %v949, %v736
      %v984 = vsel %vm962, %v951, %v738
      %v986 = vsel %vm962, %v953, %v740
      %v988 = vsel %vm962, %v955, %v742
      %v990 = vsel %vm962, %v957, %v744
      %v992 = vsel %vm962, %v959, %v746
      %v994 = vsel %vm962, %v961, %v748
      %vm995 = vcmask 785408
      %v997 = vsel %vm995, %v964, %v751
      %v999 = vsel %vm995, %v966, %v753
      %v1001 = vsel %vm995, %v968, %v755
      %v1003 = vsel %vm995, %v970, %v757
      %v1005 = vsel %vm995, %v972, %v759
      %v1007 = vsel %vm995, %v974, %v761
      %v1009 = vsel %vm995, %v976, %v763
      %v1011 = vsel %vm995, %v978, %v765
      %v1013 = vsel %vm995, %v980, %v767
      %v1015 = vsel %vm995, %v982, %v769
      %v1017 = vsel %vm995, %v984, %v771
      %v1019 = vsel %vm995, %v986, %v773
      %v1021 = vsel %vm995, %v988, %v775
      %v1023 = vsel %vm995, %v990, %v777
      %v1025 = vsel %vm995, %v992, %v779
      %v1027 = vsel %vm995, %v994, %v781
      %vm1028 = vcmask 916480
      %v1030 = vsel %vm1028, %v997, %v783
      %v1033 = vsel %vm1028, %v999, %v785
      %v1036 = vsel %vm1028, %v1001, %v787
      %v1039 = vsel %vm1028, %v1003, %v789
      %v1042 = vsel %vm1028, %v1005, %v791
      %v1045 = vsel %vm1028, %v1007, %v793
      %v1048 = vsel %vm1028, %v1009, %v795
      %v1051 = vsel %vm1028, %v1011, %v797
      %v1054 = vsel %vm1028, %v1013, %v799
      %v1057 = vsel %vm1028, %v1015, %v801
      %v1060 = vsel %vm1028, %v1017, %v803
      %v1063 = vsel %vm1028, %v1019, %v805
      %v1066 = vsel %vm1028, %v1021, %v807
      %v1069 = vsel %vm1028, %v1023, %v809
      %v1072 = vsel %vm1028, %v1025, %v811
      %v1075 = vsel %vm1028, %v1027, %v813
      %v1077 = vld [vmem:[%s1] sm:$0xf]
      %v1078 = vld [vmem:[%s1 + $0x4] sm:$0xf]
      %v1079 = vld [vmem:[%s1 + $0x8] sm:$0xf]
      %v1080 = vld [vmem:[%s1 + $0xc] sm:$0xf]
      %v1081 = vld [vmem:[%s1 + $0x10] sm:$0xf]
      %v1082 = vld [vmem:[%s1 + $0x14] sm:$0xf]
      %v1083 = vld [vmem:[%s1 + $0x18] sm:$0xf]
      %v1084 = vld [vmem:[%s1 + $0x1c] sm:$0xf]
      %v1085 = vld [vmem:[%s1 + $0x20] sm:$0xf]
      %v1086 = vld [vmem:[%s1 + $0x24] sm:$0xf]
      %v1087 = vld [vmem:[%s1 + $0x28] sm:$0xf]
      %v1088 = vld [vmem:[%s1 + $0x2c] sm:$0xf]
      %v1089 = vld [vmem:[%s1 + $0x30] sm:$0xf]
      %v1090 = vld [vmem:[%s1 + $0x34] sm:$0xf]
      %v1091 = vld [vmem:[%s1 + $0x38] sm:$0xf]
      %v1092 = vld [vmem:[%s1 + $0x3c] sm:$0xf]
      %v1093 = vld [vmem:[%s1 + $0x40] sm:$0xf]
      %v1094 = vld [vmem:[%s1 + $0x44] sm:$0xf]
      %v1113 = vunpack.c.l.b16 %v1077
      %v1114 = vunpack.c.l.b16 %v1078
      %v1115 = vunpack.c.l.b16 %v1079
      %v1116 = vunpack.c.l.b16 %v1080
      %v1117 = vunpack.c.l.b16 %v1081
      %v1118 = vunpack.c.l.b16 %v1082
      %v1119 = vunpack.c.l.b16 %v1083
      %v1120 = vunpack.c.l.b16 %v1084
      %v1121 = vunpack.c.l.b16 %v1085
      %v1122 = vunpack.c.l.b16 %v1086
      %v1123 = vunpack.c.l.b16 %v1087
      %v1124 = vunpack.c.l.b16 %v1088
      %v1125 = vunpack.c.l.b16 %v1089
      %v1126 = vunpack.c.l.b16 %v1090
      %v1127 = vunpack.c.l.b16 %v1091
      %v1128 = vunpack.c.l.b16 %v1092
      %v1129 = vunpack.c.l.b16 %v1093
      %v1130 = vunpack.c.l.b16 %v1094
      %v1131 = vpack.c.b16 %v1114, %v1113
      %v1132 = vpack.c.b16 %v1116, %v1115
      %v1133 = vpack.c.b16 %v1118, %v1117
      %v1134 = vpack.c.b16 %v1120, %v1119
      %v1135 = vpack.c.b16 %v1122, %v1121
      %v1136 = vpack.c.b16 %v1124, %v1123
      %v1137 = vpack.c.b16 %v1126, %v1125
      %v1138 = vpack.c.b16 %v1128, %v1127
      %v1139 = vpack.c.b16 %v1130, %v1129
      %v1150 = vsel %vm814, %v540, 0
      %v1153 = vsel %vm814, %v541, 0
      %v1156 = vsel %vm814, %v542, 0
      %v1159 = vsel %vm814, %v543, 0
      %v1162 = vsel %vm814, %v544, 0
      %v1165 = vsel %vm814, %v545, 0
      %v1168 = vsel %vm814, %v546, 0
      %v1171 = vsel %vm814, %v547, 0
      %v1174 = vsel %vm814, %v548, 0
      %v1177 = vsel %vm814, %v549, 0
      %v1180 = vsel %vm814, %v550, 0
      %v1183 = vsel %vm814, %v551, 0
      %v1186 = vsel %vm814, %v552, 0
      %v1189 = vsel %vm814, %v553, 0
      %v1192 = vsel %vm814, %v554, 0
      %v1195 = vsel %vm814, %v538, 0
      %1197 = vmatprep.subr.bf16.mxu0 0
      %1198 = vmatpush1.bf16.msra.mxu0 %v1131
      %1199 = vmatprep.subr.bf16.mxu0 0
      %1200 = vmatpush1.bf16.msra.mxu0 %v1132
      %1201 = vmatprep.subr.bf16.mxu0 0
      %1202 = vmatpush1.bf16.msra.mxu0 %v1133
      %1203 = vmatprep.subr.bf16.mxu0 0
      %1204 = vmatpush1.bf16.msra.mxu0 %v1134
      %1205 = vmatprep.subr.bf16.mxu0 0
      %1206 = vmatpush1.bf16.msra.mxu0 %v1135
      %1207 = vmatprep.subr.bf16.mxu0 0
      %1208 = vmatpush1.bf16.msra.mxu0 %v1136
      %1209 = vmatprep.subr.bf16.mxu0 0
      %1210 = vmatpush1.bf16.msra.mxu0 %v1137
      %1211 = vmatprep.subr.bf16.mxu0 0
      %1212 = vmatpush1.bf16.msra.mxu0 %v1138
      %1213 = vmatprep.subr.bf16.mxu0 0
      %1214 = vmatpush1.bf16.msra.mxu0 %v1139
      %1215 = vmatprep.subr.bf16.mxu0 0
      %1216 = vmatpush1.bf16.msra.mxu0 0
      %1217 = vmatprep.subr.bf16.mxu0 0
      %1218 = vmatpush1.bf16.msra.mxu0 0
      %1219 = vmatprep.subr.bf16.mxu0 0
      %1220 = vmatpush1.bf16.msra.mxu0 0
      %1221 = vmatprep.subr.bf16.mxu0 0
      %1222 = vmatpush1.bf16.msra.mxu0 0
      %1223 = vmatprep.subr.bf16.mxu0 0
      %1224 = vmatpush1.bf16.msra.mxu0 0
      %1225 = vmatprep.subr.bf16.mxu0 0
      %1226 = vmatpush1.bf16.msra.mxu0 0
      %1227 = vmatprep.subr.bf16.mxu0 0
      %1228 = vmatpush1.bf16.msra.mxu0 0
      %1229 = vmatprep.mubr.bf16.mxu0 %v1150
      %1230 = vmatmul.mubr.bf16.gmra.mrb[0].mxu0 %v1030
      %v1231 = vpop.f32.mrb[0].mxu0
      %v1232 = vadd.f32 0.0, %v1231
      %v1233 = vpop.f32.mrb[0].mxu0
      %v1234 = vpop.f32.mrb[0].mxu0
      %v1235 = vadd.f32 0.0, %v1234
      %v1236 = vpop.f32.mrb[0].mxu0
      %1237 = vmatprep.mubr.bf16.mxu0 %v1153
      %1238 = vmatmul.mubr.bf16.gmra.mrb[0].mxu0 %v1033
      %v1239 = vpop.f32.mrb[0].mxu0
      %v1240 = vadd.f32 0.0, %v1239
      %v1241 = vpop.f32.mrb[0].mxu0
      %v1242 = vpop.f32.mrb[0].mxu0
      %v1243 = vadd.f32 0.0, %v1242
      %v1244 = vpop.f32.mrb[0].mxu0
      %1245 = vmatprep.mubr.bf16.mxu0 %v1156
      %1246 = vmatmul.mubr.bf16.gmra.mrb[0].mxu0 %v1036
      %v1247 = vpop.f32.mrb[0].mxu0
      %v1248 = vadd.f32 0.0, %v1247
      %v1249 = vpop.f32.mrb[0].mxu0
      %v1250 = vpop.f32.mrb[0].mxu0
      %v1251 = vadd.f32 0.0, %v1250
      %v1252 = vpop.f32.mrb[0].mxu0
      %1253 = vmatprep.mubr.bf16.mxu0 %v1159
      %1254 = vmatmul.mubr.bf16.gmra.mrb[0].mxu0 %v1039
      %v1255 = vpop.f32.mrb[0].mxu0
      %v1256 = vadd.f32 0.0, %v1255
      %v1257 = vpop.f32.mrb[0].mxu0
      %v1258 = vpop.f32.mrb[0].mxu0
      %v1259 = vadd.f32 0.0, %v1258
      %v1260 = vpop.f32.mrb[0].mxu0
      %1261 = vmatprep.mubr.bf16.mxu0 %v1162
      %1262 = vmatmul.mubr.bf16.gmra.mrb[0].mxu0 %v1042
      %v1263 = vpop.f32.mrb[0].mxu0
      %v1264 = vadd.f32 0.0, %v1263
      %v1265 = vpop.f32.mrb[0].mxu0
      %v1266 = vpop.f32.mrb[0].mxu0
      %v1267 = vadd.f32 0.0, %v1266
      %v1268 = vpop.f32.mrb[0].mxu0
      %1269 = vmatprep.mubr.bf16.mxu0 %v1165
      %1270 = vmatmul.mubr.bf16.gmra.mrb[0].mxu0 %v1045
      %v1271 = vpop.f32.mrb[0].mxu0
      %v1272 = vadd.f32 0.0, %v1271
      %v1273 = vpop.f32.mrb[0].mxu0
      %v1274 = vpop.f32.mrb[0].mxu0
      %v1275 = vadd.f32 0.0, %v1274
      %v1276 = vpop.f32.mrb[0].mxu0
      %1277 = vmatprep.mubr.bf16.mxu0 %v1168
      %1278 = vmatmul.mubr.bf16.gmra.mrb[0].mxu0 %v1048
      %v1279 = vpop.f32.mrb[0].mxu0
      %v1280 = vadd.f32 0.0, %v1279
      %v1281 = vpop.f32.mrb[0].mxu0
      %v1282 = vpop.f32.mrb[0].mxu0
      %v1283 = vadd.f32 0.0, %v1282
      %v1284 = vpop.f32.mrb[0].mxu0
      %1285 = vmatprep.mubr.bf16.mxu0 %v1171
      %1286 = vmatmul.mubr.bf16.gmra.mrb[0].mxu0 %v1051
      %v1287 = vpop.f32.mrb[0].mxu0
      %v1288 = vadd.f32 0.0, %v1287
      %v1289 = vpop.f32.mrb[0].mxu0
      %v1290 = vpop.f32.mrb[0].mxu0
      %v1291 = vadd.f32 0.0, %v1290
      %v1292 = vpop.f32.mrb[0].mxu0
      %1293 = vmatprep.mubr.bf16.mxu0 %v1174
      %1294 = vmatmul.mubr.bf16.gmra.mrb[0].mxu0 %v1054
      %v1295 = vpop.f32.mrb[0].mxu0
      %v1296 = vadd.f32 0.0, %v1295
      %v1297 = vpop.f32.mrb[0].mxu0
      %v1298 = vpop.f32.mrb[0].mxu0
      %v1299 = vadd.f32 0.0, %v1298
      %v1300 = vpop.f32.mrb[0].mxu0
      %1301 = vmatprep.mubr.bf16.mxu0 %v1177
      %1302 = vmatmul.mubr.bf16.gmra.mrb[0].mxu0 %v1057
      %v1303 = vpop.f32.mrb[0].mxu0
      %v1304 = vadd.f32 0.0, %v1303
      %v1305 = vpop.f32.mrb[0].mxu0
      %v1306 = vpop.f32.mrb[0].mxu0
      %v1307 = vadd.f32 0.0, %v1306
      %v1308 = vpop.f32.mrb[0].mxu0
      %1309 = vmatprep.mubr.bf16.mxu0 %v1180
      %1310 = vmatmul.mubr.bf16.gmra.mrb[0].mxu0 %v1060
      %v1311 = vpop.f32.mrb[0].mxu0
      %v1312 = vadd.f32 0.0, %v1311
      %v1313 = vpop.f32.mrb[0].mxu0
      %v1314 = vpop.f32.mrb[0].mxu0
      %v1315 = vadd.f32 0.0, %v1314
      %v1316 = vpop.f32.mrb[0].mxu0
      %1317 = vmatprep.mubr.bf16.mxu0 %v1183
      %1318 = vmatmul.mubr.bf16.gmra.mrb[0].mxu0 %v1063
      %v1319 = vpop.f32.mrb[0].mxu0
      %v1320 = vadd.f32 0.0, %v1319
      %v1321 = vpop.f32.mrb[0].mxu0
      %v1322 = vpop.f32.mrb[0].mxu0
      %v1323 = vadd.f32 0.0, %v1322
      %v1324 = vpop.f32.mrb[0].mxu0
      %1325 = vmatprep.mubr.bf16.mxu0 %v1186
      %1326 = vmatmul.mubr.bf16.gmra.mrb[0].mxu0 %v1066
      %v1327 = vpop.f32.mrb[0].mxu0
      %v1328 = vadd.f32 0.0, %v1327
      %v1329 = vpop.f32.mrb[0].mxu0
      %v1330 = vpop.f32.mrb[0].mxu0
      %v1331 = vadd.f32 0.0, %v1330
      %v1332 = vpop.f32.mrb[0].mxu0
      %1333 = vmatprep.mubr.bf16.mxu0 %v1189
      %1334 = vmatmul.mubr.bf16.gmra.mrb[0].mxu0 %v1069
      %v1335 = vpop.f32.mrb[0].mxu0
      %v1336 = vadd.f32 0.0, %v1335
      %v1337 = vpop.f32.mrb[0].mxu0
      %v1338 = vpop.f32.mrb[0].mxu0
      %v1339 = vadd.f32 0.0, %v1338
      %v1340 = vpop.f32.mrb[0].mxu0
      %1341 = vmatprep.mubr.bf16.mxu0 %v1192
      %1342 = vmatmul.mubr.bf16.gmra.mrb[0].mxu0 %v1072
      %v1343 = vpop.f32.mrb[0].mxu0
      %v1344 = vadd.f32 0.0, %v1343
      %v1345 = vpop.f32.mrb[0].mxu0
      %v1346 = vpop.f32.mrb[0].mxu0
      %v1347 = vadd.f32 0.0, %v1346
      %v1348 = vpop.f32.mrb[0].mxu0
      %1349 = vmatprep.mubr.bf16.mxu0 %v1195
      %1350 = vmatmul.mubr.bf16.gmra.mrb[0].mxu0 %v1075
      %v1351 = vpop.f32.mrb[0].mxu0
      %v1352 = vadd.f32 0.0, %v1351
      %v1353 = vpop.f32.mrb[0].mxu0
      %v1354 = vpop.f32.mrb[0].mxu0
      %v1355 = vadd.f32 0.0, %v1354
      %v1356 = vpop.f32.mrb[0].mxu0
      %1357 = vdwg.mxu0
      %1358 = vst [vmem:[%s208] sm:$0xff] %v1232
      %1359 = vst [vmem:[%s208 + $0x8] sm:$0xff] %v1235
      %1360 = vst [vmem:[%s208 + $0x10] sm:$0xff] %v1240
      %1361 = vst [vmem:[%s208 + $0x18] sm:$0xff] %v1243
      %1362 = vst [vmem:[%s208 + $0x20] sm:$0xff] %v1248
      %1363 = vst [vmem:[%s208 + $0x28] sm:$0xff] %v1251
      %1364 = vst [vmem:[%s208 + $0x30] sm:$0xff] %v1256
      %1365 = vst [vmem:[%s208 + $0x38] sm:$0xff] %v1259
      %1366 = vst [vmem:[%s208 + $0x40] sm:$0xff] %v1264
      %1367 = vst [vmem:[%s208 + $0x48] sm:$0xff] %v1267
      %1368 = vst [vmem:[%s208 + $0x50] sm:$0xff] %v1272
      %1369 = vst [vmem:[%s208 + $0x58] sm:$0xff] %v1275
      %1370 = vst [vmem:[%s208 + $0x60] sm:$0xff] %v1280
      %1371 = vst [vmem:[%s208 + $0x68] sm:$0xff] %v1283
      %1372 = vst [vmem:[%s208 + $0x70] sm:$0xff] %v1288
      %1373 = vst [vmem:[%s208 + $0x78] sm:$0xff] %v1291
      %1374 = vst [vmem:[%s208 + $0x80] sm:$0xff] %v1296
      %1375 = vst [vmem:[%s208 + $0x88] sm:$0xff] %v1299
      %1376 = vst [vmem:[%s208 + $0x90] sm:$0xff] %v1304
      %1377 = vst [vmem:[%s208 + $0x98] sm:$0xff] %v1307
      %1378 = vst [vmem:[%s208 + $0xa0] sm:$0xff] %v1312
      %1379 = vst [vmem:[%s208 + $0xa8] sm:$0xff] %v1315
      %1380 = vst [vmem:[%s208 + $0xb0] sm:$0xff] %v1320
      %1381 = vst [vmem:[%s208 + $0xb8] sm:$0xff] %v1323
      %1382 = vst [vmem:[%s208 + $0xc0] sm:$0xff] %v1328
      %1383 = vst [vmem:[%s208 + $0xc8] sm:$0xff] %v1331
      %1384 = vst [vmem:[%s208 + $0xd0] sm:$0xff] %v1336
      %1385 = vst [vmem:[%s208 + $0xd8] sm:$0xff] %v1339
      %1386 = vst [vmem:[%s208 + $0xe0] sm:$0xff] %v1344
      %1387 = vst [vmem:[%s208 + $0xe8] sm:$0xff] %v1347
      %1388 = vst [vmem:[%s208 + $0xf0] sm:$0xff] %v1352
      %1389 = vst [vmem:[%s208 + $0xf8] sm:$0xff] %v1355
      %v1390 = vadd.f32 %v1232, %v1235
      %v1391 = vadd.f32 %v1390, %v1240
      %v1392 = vadd.f32 %v1391, %v1243
      %v1393 = vadd.f32 %v1392, %v1248
      %v1394 = vadd.f32 %v1393, %v1251
      %v1395 = vadd.f32 %v1394, %v1256
      %v1396 = vadd.f32 %v1395, %v1259
      %v1397 = vadd.f32 %v1396, %v1264
      %v1398 = vadd.f32 %v1397, %v1267
      %v1399 = vadd.f32 %v1398, %v1272
      %v1400 = vadd.f32 %v1399, %v1275
      %v1401 = vadd.f32 %v1400, %v1280
      %v1402 = vadd.f32 %v1401, %v1283
      %v1403 = vadd.f32 %v1402, %v1288
      %v1404 = vadd.f32 %v1403, %v1291
      %v1405 = vadd.f32 %v1404, %v1296
      %v1406 = vadd.f32 %v1405, %v1299
      %v1407 = vadd.f32 %v1406, %v1304
      %v1408 = vadd.f32 %v1407, %v1307
      %v1409 = vadd.f32 %v1408, %v1312
      %v1410 = vadd.f32 %v1409, %v1315
      %v1411 = vadd.f32 %v1410, %v1320
      %v1412 = vadd.f32 %v1411, %v1323
      %v1413 = vadd.f32 %v1412, %v1328
      %v1414 = vadd.f32 %v1413, %v1331
      %v1415 = vadd.f32 %v1414, %v1336
      %v1416 = vadd.f32 %v1415, %v1339
      %v1417 = vadd.f32 %v1416, %v1344
      %v1418 = vadd.f32 %v1417, %v1347
      %v1419 = vadd.f32 %v1418, %v1352
      %v1420 = vadd.f32 %v1419, %v1355
      %v1421 = vrot.slane %v1420, 4
      %v1422 = vadd.f32 %v1420, %v1421
      %v1423 = vrot.slane %v1422, 2
      %v1424 = vadd.f32 %v1422, %v1423
      %v1425 = vrot.slane %v1424, 1
      %v1426 = vadd.f32 %v1424, %v1425
      %1427 = vst [vmem:[%s211] sm:$0x1] %v1426
      %v1428 = vmul.f32 %v1232, %v1232
      %v1429 = vmul.f32 %v1235, %v1235
      %v1430 = vmul.f32 %v1240, %v1240
      %v1431 = vmul.f32 %v1243, %v1243
      %v1432 = vmul.f32 %v1248, %v1248
      %v1433 = vmul.f32 %v1251, %v1251
      %v1434 = vmul.f32 %v1256, %v1256
      %v1435 = vmul.f32 %v1259, %v1259
      %v1436 = vmul.f32 %v1264, %v1264
      %v1437 = vmul.f32 %v1267, %v1267
      %v1438 = vmul.f32 %v1272, %v1272
      %v1439 = vmul.f32 %v1275, %v1275
      %v1440 = vmul.f32 %v1280, %v1280
      %v1441 = vmul.f32 %v1283, %v1283
      %v1442 = vmul.f32 %v1288, %v1288
      %v1443 = vmul.f32 %v1291, %v1291
      %v1444 = vmul.f32 %v1296, %v1296
      %v1445 = vmul.f32 %v1299, %v1299
      %v1446 = vmul.f32 %v1304, %v1304
      %v1447 = vmul.f32 %v1307, %v1307
      %v1448 = vmul.f32 %v1312, %v1312
      %v1449 = vmul.f32 %v1315, %v1315
      %v1450 = vmul.f32 %v1320, %v1320
      %v1451 = vmul.f32 %v1323, %v1323
      %v1452 = vmul.f32 %v1328, %v1328
      %v1453 = vmul.f32 %v1331, %v1331
      %v1454 = vmul.f32 %v1336, %v1336
      %v1455 = vmul.f32 %v1339, %v1339
      %v1456 = vmul.f32 %v1344, %v1344
      %v1457 = vmul.f32 %v1347, %v1347
      %v1458 = vmul.f32 %v1352, %v1352
      %v1459 = vmul.f32 %v1355, %v1355
      %v1460 = vadd.f32 %v1428, %v1429
      %v1461 = vadd.f32 %v1460, %v1430
      %v1462 = vadd.f32 %v1461, %v1431
      %v1463 = vadd.f32 %v1462, %v1432
      %v1464 = vadd.f32 %v1463, %v1433
      %v1465 = vadd.f32 %v1464, %v1434
      %v1466 = vadd.f32 %v1465, %v1435
      %v1467 = vadd.f32 %v1466, %v1436
      %v1468 = vadd.f32 %v1467, %v1437
      %v1469 = vadd.f32 %v1468, %v1438
      %v1470 = vadd.f32 %v1469, %v1439
      %v1471 = vadd.f32 %v1470, %v1440
      %v1472 = vadd.f32 %v1471, %v1441
      %v1473 = vadd.f32 %v1472, %v1442
      %v1474 = vadd.f32 %v1473, %v1443
      %v1475 = vadd.f32 %v1474, %v1444
      %v1476 = vadd.f32 %v1475, %v1445
      %v1477 = vadd.f32 %v1476, %v1446
      %v1478 = vadd.f32 %v1477, %v1447
      %v1479 = vadd.f32 %v1478, %v1448
      %v1480 = vadd.f32 %v1479, %v1449
      %v1481 = vadd.f32 %v1480, %v1450
      %v1482 = vadd.f32 %v1481, %v1451
      %v1483 = vadd.f32 %v1482, %v1452
      %v1484 = vadd.f32 %v1483, %v1453
      %v1485 = vadd.f32 %v1484, %v1454
      %v1486 = vadd.f32 %v1485, %v1455
      %v1487 = vadd.f32 %v1486, %v1456
      %v1488 = vadd.f32 %v1487, %v1457
      %v1489 = vadd.f32 %v1488, %v1458
      %v1490 = vadd.f32 %v1489, %v1459
      %v1491 = vrot.slane %v1490, 4
      %v1492 = vadd.f32 %v1490, %v1491
      %v1493 = vrot.slane %v1492, 2
      %v1494 = vadd.f32 %v1492, %v1493
      %v1495 = vrot.slane %v1494, 1
      %v1496 = vadd.f32 %v1494, %v1495
      %1497 = vst [vmem:[%s214] sm:$0x1] %v1496
      %p1498 = scmp.lt.s32.totalorder %s16, 7
      %s1499 = scalar_select %p1498, %s16, 7
      %s1500 = smul.addr %s1499, 32
      %s1501 = smul.addr %s1500, 8
      %s1502 = scalar_lea.vmem %s2, %s1501
      %p1503 = scmp.lt.s32.totalorder %s16, 7
      %s1504 = scalar_select %p1503, %s16, 7
      %s1505 = scalar_lea.vmem %s3, %s1504
      %p1506 = scmp.lt.s32.totalorder %s16, 7
      %s1507 = scalar_select %p1506, %s16, 7
      %s1508 = scalar_lea.vmem %s4, %s1507
      // Predicated region
      $region29: #{upsampling_forward.3} parent=27 // pred_check
        %p1509 = pneg %p81
      $region30: #{upsampling_forward.3} parent=27 // pred_check_branch
        %1511 = sbr.rel (%p1509) target = $region32
      $region31: #{upsampling_forward.3} parent=27 // pred_region
        _
      $region32: #{upsampling_forward.3} parent=27 // pred_fallthru
        _
      // Predicated region
      $region33: #{upsampling_forward.3} parent=27 // pred_check
        %p1512 = pneg %p107
      $region34: #{upsampling_forward.3} parent=27 // pred_check_branch
        %1514 = sbr.rel (%p1512) target = $region36
      $region35: #{upsampling_forward.3} parent=27 // pred_region
        _
      $region36: #{upsampling_forward.3} parent=27 // pred_fallthru
        _
      // Predicated region
      $region37: #{upsampling_forward.3} parent=27 // pred_check
        %p1515 = pneg %p133
      $region38: #{upsampling_forward.3} parent=27 // pred_check_branch
        %1517 = sbr.rel (%p1515) target = $region40
      $region39: #{upsampling_forward.3} parent=27 // pred_region
        _
      $region40: #{upsampling_forward.3} parent=27 // pred_fallthru
        _
    $region28: #{upsampling_forward.3} parent=5 // pred_fallthru
      _
    %p1518 = scmp.le.s32.totalorder 2, %s11
    // Predicated region
    $region41: #{upsampling_forward.3} parent=5 // pred_check
      %p1519 = pneg %p1518
    $region42: #{upsampling_forward.3} parent=5 // pred_check_branch
      %1521 = sbr.rel (%p1519) target = $region44
    $region43: #{upsampling_forward.3} parent=5 // pred_region
      %s1522 = ssub.s32 %s11, 2
      // Predicated region
      $region45: #{upsampling_forward.3} parent=43 // pred_check
        %p1523 = pneg %p87
      $region46: #{upsampling_forward.3} parent=43 // pred_check_branch
        %1525 = sbr.rel (%p1523) target = $region48
      $region47: #{upsampling_forward.3} parent=43 // pred_region
        %p1526 = scmp.lt.s32.totalorder %s17, 7
        %s1527 = scalar_select %p1526, %s17, 7
        %s1528 = smul.addr %s1527, 32
        %s1529 = smul.addr %s1528, 8
        %s1530 = scalar_lea.vmem %s2, %s1529
      $region48: #{upsampling_forward.3} parent=43 // pred_fallthru
        _
      // Predicated region
      $region49: #{upsampling_forward.3} parent=43 // pred_check
        %p1531 = pneg %p113
      $region50: #{upsampling_forward.3} parent=43 // pred_check_branch
        %1533 = sbr.rel (%p1531) target = $region52
      $region51: #{upsampling_forward.3} parent=43 // pred_region
        %p1534 = scmp.lt.s32.totalorder %s17, 7
        %s1535 = scalar_select %p1534, %s17, 7
        %s1536 = scalar_lea.vmem %s3, %s1535
      $region52: #{upsampling_forward.3} parent=43 // pred_fallthru
        _
      // Predicated region
      $region53: #{upsampling_forward.3} parent=43 // pred_check
        %p1537 = pneg %p139
      $region54: #{upsampling_forward.3} parent=43 // pred_check_branch
        %1539 = sbr.rel (%p1537) target = $region56
      $region55: #{upsampling_forward.3} parent=43 // pred_region
        %p1540 = scmp.lt.s32.totalorder %s17, 7
        %s1541 = scalar_select %p1540, %s17, 7
        %s1542 = scalar_lea.vmem %s4, %s1541
      $region56: #{upsampling_forward.3} parent=43 // pred_fallthru
        _
    $region44: #{upsampling_forward.3} parent=5 // pred_fallthru
      _
  $region6: #{upsampling_forward.3} parent=0 // loop_footer
    %s15 = sadd.s32 1, %s11
  $region7: #{upsampling_forward.3} parent=0 // loop_footer_branch
    %10 = sbr.rel target = $region3
  $region8: #{upsampling_forward.3} parent=0 // loop_exit
    _

// kernel: upsampling_forward.2
$region0: #{upsampling_forward.2}
  #allocation0 [shape = 'u32[]', space=smem, size = 0x4, offset = 0x4, fixed_abs, tag = 'smem constant byte address 0x4 - core index']
  #allocation1 [shape = 'u32[144,128]{1,0:T(1,128)}', space=vmem, size = 0x12000, scoped, tag = 'internal scratch']
  #allocation2 [shape = 'f32[256,16]{1,0:T(8,128)}', space=vmem, size = 0x20000, scoped, tag = 'scratch operand']
  %s0 = inlined_call_operand.vmem [shape: f32[4,2,16,16,4], index: 0, kind: input, shape index: {}]
  %s1 = inlined_call_operand.vmem [shape: bf16[4,2,256,16], index: 1, kind: output, shape index: {}]
  %s2 = sld [smem:[#allocation0]]
  $region41: #{upsampling_forward.2} parent=0
    _
  %s4 = ssub.s32 1, %s2
  %s5 = scalar_select 0, %s4, %s2
  loop: start=0, step=1, limit=10
  $region2: #{upsampling_forward.2} parent=0 // loop_pre_header
    _
  $region3: #{upsampling_forward.2} parent=0 // loop_header
    %s7 = sphi 0, %s11
    %p8 = scmp.ge.s32.totalorder %s7, 10
    %s14 = sphi 0, %s26
    %s15 = sphi 0, %s22
    %s16 = sphi 0, %s14
    %s17 = sphi 0, %s15
    %s18 = sphi 0, %s16
    %s19 = sphi 0, %s17
    %s31 = sphi 0, %s33
    %s34 = sphi 0, %s31
    %s35 = sphi 0, %s34
    %s51 = sphi 0, %s35
    %s59 = sphi 0, %s61
    %s62 = sphi 0, %s59
    %s63 = sphi 0, %s62
    %s79 = sphi 0, %s63
  $region4: #{upsampling_forward.2} parent=0 // loop_header_branch
    %10 = sbr.rel (%p8) target = $region8
  $region5: #{upsampling_forward.2} parent=0 // loop_body
    %s12 = ssub.s32 %s7, 1
    %s13 = ssub.s32 %s7, 2
    %s20 = sadd.s32 1, %s15
    %p21 = scmp.ge.s32.totalorder %s20, 4
    %s22 = scalar_select %p21, 0, %s20
    %s23 = sadd.s32 1, %s14
    %s24 = scalar_select %p21, %s23, %s14
    %p25 = scmp.ge.s32.totalorder %s24, 2
    %s26 = scalar_select %p25, 0, %s24
    %s27 = ssub.s32 %s15, %s22
    %s28 = ssub.s32 %s14, %s26
    %s29 = sor.u32 %s27, %s28
    %p30 = scmp.eq.s32.totalorder %s29, 0
    %s32 = sadd.s32 %s31, 1
    %s33 = scalar_select %p30, %s31, %s32
    %p36 = pneg %p30
    %p37 = scmp.eq.s32.totalorder %s7, 7
    %p38 = por %p36, %p37
    %p39 = scmp.ne.s32.totalorder %s31, %s34
    %p40 = scmp.eq.s32.totalorder %s7, 0
    %p41 = por %p39, %p40
    %p42 = scmp.ne.s32.totalorder %s31, %s34
    %p43 = scmp.eq.s32.totalorder %s12, 7
    %p44 = por %p42, %p43
    %p45 = scmp.ne.s32.totalorder %s34, %s35
    %p46 = scmp.eq.s32.totalorder %s12, 0
    %p47 = por %p45, %p46
    %p48 = scmp.ne.s32.totalorder %s34, %s35
    %p49 = scmp.eq.s32.totalorder %s13, 7
    %p50 = por %p48, %p49
    %p52 = scmp.ne.s32.totalorder %s35, %s51
    %p53 = scmp.eq.s32.totalorder %s13, 0
    %p54 = por %p52, %p53
    %s55 = ssub.s32 %s15, %s22
    %s56 = ssub.s32 %s14, %s26
    %s57 = sor.u32 %s55, %s56
    %p58 = scmp.eq.s32.totalorder %s57, 0
    %s60 = sadd.s32 %s59, 1
    %s61 = scalar_select %p58, %s59, %s60
    %p64 = pneg %p58
    %p65 = scmp.eq.s32.totalorder %s7, 7
    %p66 = por %p64, %p65
    %p67 = scmp.ne.s32.totalorder %s59, %s62
    %p68 = scmp.eq.s32.totalorder %s7, 0
    %p69 = por %p67, %p68
    %p70 = scmp.ne.s32.totalorder %s59, %s62
    %p71 = scmp.eq.s32.totalorder %s12, 7
    %p72 = por %p70, %p71
    %p73 = scmp.ne.s32.totalorder %s62, %s63
    %p74 = scmp.eq.s32.totalorder %s12, 0
    %p75 = por %p73, %p74
    %p76 = scmp.ne.s32.totalorder %s62, %s63
    %p77 = scmp.eq.s32.totalorder %s13, 7
    %p78 = por %p76, %p77
    %p80 = scmp.ne.s32.totalorder %s63, %s79
    %p81 = scmp.eq.s32.totalorder %s13, 0
    %p82 = por %p80, %p81
    %p83 = scmp.le.s32.totalorder 1, %s7
    %p84 = scmp.lt.s32.totalorder %s7, 9
    %p85 = pnand %p83, %p84
    %p86 = pneg %p85
    // Predicated region
    $region9: #{upsampling_forward.2} parent=5 // pred_check
      _
    $region10: #{upsampling_forward.2} parent=5 // pred_check_branch
      %88 = sbr.rel (%p85) target = $region12
    $region11: #{upsampling_forward.2} parent=5 // pred_region
      %s89 = ssub.s32 %s7, 1
    $region12: #{upsampling_forward.2} parent=5 // pred_fallthru
      _
    %p90 = scmp.lt.s32.totalorder %s7, 8
    // Predicated region
    $region13: #{upsampling_forward.2} parent=5 // pred_check
      %p91 = pneg %p90
    $region14: #{upsampling_forward.2} parent=5 // pred_check_branch
      %93 = sbr.rel (%p91) target = $region16
    $region15: #{upsampling_forward.2} parent=5 // pred_region
      // Predicated region
      $region17: #{upsampling_forward.2} parent=15 // pred_check
        %p94 = pneg %p41
      $region18: #{upsampling_forward.2} parent=15 // pred_check_branch
        %96 = sbr.rel (%p94) target = $region20
      $region19: #{upsampling_forward.2} parent=15 // pred_region
        %p97 = scmp.lt.s32.totalorder %s15, 3
        %s98 = scalar_select %p97, %s15, 3
        %p99 = scmp.lt.s32.totalorder %s14, 1
        %s100 = scalar_select %p99, %s14, 1
        %s101 = smul.addr %s100, 32
        %s102 = smul.addr %s98, 64
        %s103 = sadd.s32 %s101, %s102
        %s104 = smul.addr %s103, 8
        %s105 = scalar_lea.vmem %s0, %s104
      $region20: #{upsampling_forward.2} parent=15 // pred_fallthru
        _
    $region16: #{upsampling_forward.2} parent=5 // pred_fallthru
      _
    %p106 = scmp.le.s32.totalorder 1, %s7
    %p107 = scmp.lt.s32.totalorder %s7, 9
    %p108 = pnand %p106, %p107
    %p109 = pneg %p108
    // Predicated region
    $region21: #{upsampling_forward.2} parent=5 // pred_check
      _
    $region22: #{upsampling_forward.2} parent=5 // pred_check_branch
      %111 = sbr.rel (%p108) target = $region24
    $region23: #{upsampling_forward.2} parent=5 // pred_region
      %s112 = ssub.s32 %s7, 1
      %p113 = scmp.lt.s32.totalorder %s17, 3
      %s114 = scalar_select %p113, %s17, 3
      %p115 = scmp.lt.s32.totalorder %s16, 1
      %s116 = scalar_select %p115, %s16, 1
      %s117 = smul.addr %s116, 32
      %s118 = smul.addr %s114, 64
      %s119 = sadd.s32 %s117, %s118
      %s120 = smul.addr %s119, 8
      %s121 = scalar_lea.vmem %s0, %s120
      %p122 = pneg %p47
      %p123 = pneg %p44
      %p124 = pneg %p75
      %p125 = pneg %p72
      %p126 = scmp.lt.s32.totalorder %s17, 3
      %s127 = scalar_select %p126, %s17, 3
      %p128 = scmp.lt.s32.totalorder %s16, 1
      %s129 = scalar_select %p128, %s16, 1
      %s130 = smul.addr %s129, 32
      %s131 = smul.addr %s127, 64
      %s132 = sadd.s32 %s130, %s131
      %s133 = smul.addr %s132, 4
      %s134 = scalar_lea.vmem %s1, %s133
      %p135 = scmp.lt.s32.totalorder %s17, 3
      %s136 = scalar_select %p135, %s17, 3
      %p137 = scmp.lt.s32.totalorder %s16, 1
      %s138 = scalar_select %p137, %s16, 1
      %s139 = smul.addr %s138, 32
      %s140 = smul.addr %s136, 64
      %s141 = sadd.s32 %s139, %s140
      %s142 = smul.addr %s141, 8
      %s143 = scalar_lea.vmem %s0, %s142
      %p144 = scmp.lt.s32.totalorder %s17, 3
      %s145 = scalar_select %p144, %s17, 3
      %p146 = scmp.lt.s32.totalorder %s16, 1
      %s147 = scalar_select %p146, %s16, 1
      %s148 = smul.addr %s147, 32
      %s149 = smul.addr %s145, 64
      %s150 = sadd.s32 %s148, %s149
      %s151 = smul.addr %s150, 4
      %s152 = scalar_lea.vmem %s1, %s151
      %p153 = scmp.eq.s32.totalorder %s17, 0
      // Predicated region
      $region25: #{upsampling_forward.2} parent=23 // pred_check
        %p154 = pneg %p153
      $region26: #{upsampling_forward.2} parent=23 // pred_check_branch
        %156 = sbr.rel (%p154) target = $region28
      $region27: #{upsampling_forward.2} parent=23 // pred_region
        %vm157 = vcmask 130048
        %158 = vst.msk [vmem:[#allocation2] sm:$0xff] %vm157, 0.0
        %159 = vst.msk [vmem:[#allocation2 + $0x8] sm:$0xff] %vm157, 0.0
        %160 = vst.msk [vmem:[#allocation2 + $0x10] sm:$0xff] %vm157, 0.0
        %161 = vst.msk [vmem:[#allocation2 + $0x18] sm:$0xff] %vm157, 0.0
        %162 = vst.msk [vmem:[#allocation2 + $0x20] sm:$0xff] %vm157, 0.0
        %163 = vst.msk [vmem:[#allocation2 + $0x28] sm:$0xff] %vm157, 0.0
        %164 = vst.msk [vmem:[#allocation2 + $0x30] sm:$0xff] %vm157, 0.0
        %165 = vst.msk [vmem:[#allocation2 + $0x38] sm:$0xff] %vm157, 0.0
        %166 = vst.msk [vmem:[#allocation2 + $0x40] sm:$0xff] %vm157, 0.0
        %167 = vst.msk [vmem:[#allocation2 + $0x48] sm:$0xff] %vm157, 0.0
        %168 = vst.msk [vmem:[#allocation2 + $0x50] sm:$0xff] %vm157, 0.0
        %169 = vst.msk [vmem:[#allocation2 + $0x58] sm:$0xff] %vm157, 0.0
        %170 = vst.msk [vmem:[#allocation2 + $0x60] sm:$0xff] %vm157, 0.0
        %171 = vst.msk [vmem:[#allocation2 + $0x68] sm:$0xff] %vm157, 0.0
        %172 = vst.msk [vmem:[#allocation2 + $0x70] sm:$0xff] %vm157, 0.0
        %173 = vst.msk [vmem:[#allocation2 + $0x78] sm:$0xff] %vm157, 0.0
        %174 = vst.msk [vmem:[#allocation2 + $0x80] sm:$0xff] %vm157, 0.0
        %175 = vst.msk [vmem:[#allocation2 + $0x88] sm:$0xff] %vm157, 0.0
        %176 = vst.msk [vmem:[#allocation2 + $0x90] sm:$0xff] %vm157, 0.0
        %177 = vst.msk [vmem:[#allocation2 + $0x98] sm:$0xff] %vm157, 0.0
        %178 = vst.msk [vmem:[#allocation2 + $0xa0] sm:$0xff] %vm157, 0.0
        %179 = vst.msk [vmem:[#allocation2 + $0xa8] sm:$0xff] %vm157, 0.0
        %180 = vst.msk [vmem:[#allocation2 + $0xb0] sm:$0xff] %vm157, 0.0
        %181 = vst.msk [vmem:[#allocation2 + $0xb8] sm:$0xff] %vm157, 0.0
        %182 = vst.msk [vmem:[#allocation2 + $0xc0] sm:$0xff] %vm157, 0.0
        %183 = vst.msk [vmem:[#allocation2 + $0xc8] sm:$0xff] %vm157, 0.0
        %184 = vst.msk [vmem:[#allocation2 + $0xd0] sm:$0xff] %vm157, 0.0
        %185 = vst.msk [vmem:[#allocation2 + $0xd8] sm:$0xff] %vm157, 0.0
        %186 = vst.msk [vmem:[#allocation2 + $0xe0] sm:$0xff] %vm157, 0.0
        %187 = vst.msk [vmem:[#allocation2 + $0xe8] sm:$0xff] %vm157, 0.0
        %188 = vst.msk [vmem:[#allocation2 + $0xf0] sm:$0xff] %vm157, 0.0
        %189 = vst.msk [vmem:[#allocation2 + $0xf8] sm:$0xff] %vm157, 0.0
      $region28: #{upsampling_forward.2} parent=23 // pred_fallthru
        _
      %v190 = vld [vmem:[%s143] sm:$0xff]
      %v191 = vld [vmem:[%s143 + $0x8] sm:$0xff]
      %v192 = vld [vmem:[%s143 + $0x10] sm:$0xff]
      %v193 = vld [vmem:[%s143 + $0x18] sm:$0xff]
      %v194 = vld [vmem:[%s143 + $0x20] sm:$0xff]
      %v195 = vld [vmem:[%s143 + $0x28] sm:$0xff]
      %v196 = vld [vmem:[%s143 + $0x30] sm:$0xff]
      %v197 = vld [vmem:[%s143 + $0x38] sm:$0xff]
      %v198 = vld [vmem:[%s143 + $0x40] sm:$0xff]
      %v199 = vld [vmem:[%s143 + $0x48] sm:$0xff]
      %v200 = vld [vmem:[%s143 + $0x50] sm:$0xff]
      %v201 = vld [vmem:[%s143 + $0x58] sm:$0xff]
      %v202 = vld [vmem:[%s143 + $0x60] sm:$0xff]
      %v203 = vld [vmem:[%s143 + $0x68] sm:$0xff]
      %v204 = vld [vmem:[%s143 + $0x70] sm:$0xff]
      %v205 = vld [vmem:[%s143 + $0x78] sm:$0xff]
      %v206 = vld [vmem:[%s143 + $0x80] sm:$0xff]
      %v207 = vld [vmem:[%s143 + $0x88] sm:$0xff]
      %v208 = vld [vmem:[%s143 + $0x90] sm:$0xff]
      %v209 = vld [vmem:[%s143 + $0x98] sm:$0xff]
      %v210 = vld [vmem:[%s143 + $0xa0] sm:$0xff]
      %v211 = vld [vmem:[%s143 + $0xa8] sm:$0xff]
      %v212 = vld [vmem:[%s143 + $0xb0] sm:$0xff]
      %v213 = vld [vmem:[%s143 + $0xb8] sm:$0xff]
      %v214 = vld [vmem:[%s143 + $0xc0] sm:$0xff]
      %v215 = vld [vmem:[%s143 + $0xc8] sm:$0xff]
      %v216 = vld [vmem:[%s143 + $0xd0] sm:$0xff]
      %v217 = vld [vmem:[%s143 + $0xd8] sm:$0xff]
      %v218 = vld [vmem:[%s143 + $0xe0] sm:$0xff]
      %v219 = vld [vmem:[%s143 + $0xe8] sm:$0xff]
      %v220 = vld [vmem:[%s143 + $0xf0] sm:$0xff]
      %v221 = vld [vmem:[%s143 + $0xf8] sm:$0xff]
      %v222 = vmul.f32 %v190, 0.75
      %v223 = vmul.f32 %v191, 0.75
      %v224 = vmul.f32 %v192, 0.75
      %v225 = vmul.f32 %v193, 0.75
      %v226 = vmul.f32 %v194, 0.75
      %v227 = vmul.f32 %v195, 0.75
      %v228 = vmul.f32 %v196, 0.75
      %v229 = vmul.f32 %v197, 0.75
      %v230 = vmul.f32 %v198, 0.75
      %v231 = vmul.f32 %v199, 0.75
      %v232 = vmul.f32 %v200, 0.75
      %v233 = vmul.f32 %v201, 0.75
      %v234 = vmul.f32 %v202, 0.75
      %v235 = vmul.f32 %v203, 0.75
      %v236 = vmul.f32 %v204, 0.75
      %v237 = vmul.f32 %v205, 0.75
      %v238 = vmul.f32 %v206, 0.75
      %v239 = vmul.f32 %v207, 0.75
      %v240 = vmul.f32 %v208, 0.75
      %v241 = vmul.f32 %v209, 0.75
      %v242 = vmul.f32 %v210, 0.75
      %v243 = vmul.f32 %v211, 0.75
      %v244 = vmul.f32 %v212, 0.75
      %v245 = vmul.f32 %v213, 0.75
      %v246 = vmul.f32 %v214, 0.75
      %v247 = vmul.f32 %v215, 0.75
      %v248 = vmul.f32 %v216, 0.75
      %v249 = vmul.f32 %v217, 0.75
      %v250 = vmul.f32 %v218, 0.75
      %v251 = vmul.f32 %v219, 0.75
      %v252 = vmul.f32 %v220, 0.75
      %v253 = vmul.f32 %v221, 0.75
      %v254 = vmul.f32 %v190, 0.25
      %v255 = vmul.f32 %v191, 0.25
      %v256 = vmul.f32 %v192, 0.25
      %v257 = vmul.f32 %v193, 0.25
      %v258 = vmul.f32 %v194, 0.25
      %v259 = vmul.f32 %v195, 0.25
      %v260 = vmul.f32 %v196, 0.25
      %v261 = vmul.f32 %v197, 0.25
      %v262 = vmul.f32 %v198, 0.25
      %v263 = vmul.f32 %v199, 0.25
      %v264 = vmul.f32 %v200, 0.25
      %v265 = vmul.f32 %v201, 0.25
      %v266 = vmul.f32 %v202, 0.25
      %v267 = vmul.f32 %v203, 0.25
      %v268 = vmul.f32 %v204, 0.25
      %v269 = vmul.f32 %v205, 0.25
      %v270 = vmul.f32 %v206, 0.25
      %v271 = vmul.f32 %v207, 0.25
      %v272 = vmul.f32 %v208, 0.25
      %v273 = vmul.f32 %v209, 0.25
      %v274 = vmul.f32 %v210, 0.25
      %v275 = vmul.f32 %v211, 0.25
      %v276 = vmul.f32 %v212, 0.25
      %v277 = vmul.f32 %v213, 0.25
      %v278 = vmul.f32 %v214, 0.25
      %v279 = vmul.f32 %v215, 0.25
      %v280 = vmul.f32 %v216, 0.25
      %v281 = vmul.f32 %v217, 0.25
      %v282 = vmul.f32 %v218, 0.25
      %v283 = vmul.f32 %v219, 0.25
      %v284 = vadd.f32 %v222, %v254
      %v285 = vadd.f32 %v223, %v255
      %v286 = vadd.f32 %v224, %v254
      %v287 = vadd.f32 %v225, %v255
      %v288 = vadd.f32 %v226, %v256
      %v289 = vadd.f32 %v227, %v257
      %v290 = vadd.f32 %v228, %v258
      %v291 = vadd.f32 %v229, %v259
      %v292 = vadd.f32 %v230, %v260
      %v293 = vadd.f32 %v231, %v261
      %v294 = vadd.f32 %v232, %v262
      %v295 = vadd.f32 %v233, %v263
      %v296 = vadd.f32 %v234, %v264
      %v297 = vadd.f32 %v235, %v265
      %v298 = vadd.f32 %v236, %v266
      %v299 = vadd.f32 %v237, %v267
      %v300 = vadd.f32 %v238, %v268
      %v301 = vadd.f32 %v239, %v269
      %v302 = vadd.f32 %v240, %v270
      %v303 = vadd.f32 %v241, %v271
      %v304 = vadd.f32 %v242, %v272
      %v305 = vadd.f32 %v243, %v273
      %v306 = vadd.f32 %v244, %v274
      %v307 = vadd.f32 %v245, %v275
      %v308 = vadd.f32 %v246, %v276
      %v309 = vadd.f32 %v247, %v277
      %v310 = vadd.f32 %v248, %v278
      %v311 = vadd.f32 %v249, %v279
      %v312 = vadd.f32 %v250, %v280
      %v313 = vadd.f32 %v251, %v281
      %v314 = vadd.f32 %v252, %v282
      %v315 = vadd.f32 %v253, %v283
      %v316 = vmul.f32 %v220, 0.25
      %v317 = vmul.f32 %v221, 0.25
      %v318 = vadd.f32 %v222, %v256
      %v319 = vadd.f32 %v223, %v257
      %v320 = vadd.f32 %v224, %v258
      %v321 = vadd.f32 %v225, %v259
      %v322 = vadd.f32 %v226, %v260
      %v323 = vadd.f32 %v227, %v261
      %v324 = vadd.f32 %v228, %v262
      %v325 = vadd.f32 %v229, %v263
      %v326 = vadd.f32 %v230, %v264
      %v327 = vadd.f32 %v231, %v265
      %v328 = vadd.f32 %v232, %v266
      %v329 = vadd.f32 %v233, %v267
      %v330 = vadd.f32 %v234, %v268
      %v331 = vadd.f32 %v235, %v269
      %v332 = vadd.f32 %v236, %v270
      %v333 = vadd.f32 %v237, %v271
      %v334 = vadd.f32 %v238, %v272
      %v335 = vadd.f32 %v239, %v273
      %v336 = vadd.f32 %v240, %v274
      %v337 = vadd.f32 %v241, %v275
      %v338 = vadd.f32 %v242, %v276
      %v339 = vadd.f32 %v243, %v277
      %v340 = vadd.f32 %v244, %v278
      %v341 = vadd.f32 %v245, %v279
      %v342 = vadd.f32 %v246, %v280
      %v343 = vadd.f32 %v247, %v281
      %v344 = vadd.f32 %v248, %v282
      %v345 = vadd.f32 %v249, %v283
      %v346 = vadd.f32 %v250, %v316
      %v347 = vadd.f32 %v251, %v317
      %v348 = vadd.f32 %v252, %v316
      %v349 = vadd.f32 %v253, %v317
      %382 = vrot.lane.b32.xlu0 %v284, 4
      %v383 = vpop.permute.xlu0 %382
      %384 = vrot.lane.b32.xlu0 %v285, 4
      %v385 = vpop.permute.xlu0 %384
      %386 = vrot.lane.b32.xlu0 %v286, 4
      %v387 = vpop.permute.xlu0 %386
      %388 = vrot.lane.b32.xlu0 %v287, 4
      %v389 = vpop.permute.xlu0 %388
      %390 = vrot.lane.b32.xlu0 %v288, 4
      %v391 = vpop.permute.xlu0 %390
      %392 = vrot.lane.b32.xlu0 %v289, 4
      %v393 = vpop.permute.xlu0 %392
      %394 = vrot.lane.b32.xlu0 %v290, 4
      %v395 = vpop.permute.xlu0 %394
      %396 = vrot.lane.b32.xlu0 %v291, 4
      %v397 = vpop.permute.xlu0 %396
      %398 = vrot.lane.b32.xlu0 %v292, 4
      %v399 = vpop.permute.xlu0 %398
      %400 = vrot.lane.b32.xlu0 %v293, 4
      %v401 = vpop.permute.xlu0 %400
      %402 = vrot.lane.b32.xlu0 %v294, 4
      %v403 = vpop.permute.xlu0 %402
      %404 = vrot.lane.b32.xlu0 %v295, 4
      %v405 = vpop.permute.xlu0 %404
      %406 = vrot.lane.b32.xlu0 %v296, 4
      %v407 = vpop.permute.xlu0 %406
      %408 = vrot.lane.b32.xlu0 %v297, 4
      %v409 = vpop.permute.xlu0 %408
      %410 = vrot.lane.b32.xlu0 %v298, 4
      %v411 = vpop.permute.xlu0 %410
      %412 = vrot.lane.b32.xlu0 %v299, 4
      %v413 = vpop.permute.xlu0 %412
      %414 = vrot.lane.b32.xlu0 %v300, 4
      %v415 = vpop.permute.xlu0 %414
      %416 = vrot.lane.b32.xlu0 %v301, 4
      %v417 = vpop.permute.xlu0 %416
      %418 = vrot.lane.b32.xlu0 %v302, 4
      %v419 = vpop.permute.xlu0 %418
      %420 = vrot.lane.b32.xlu0 %v303, 4
      %v421 = vpop.permute.xlu0 %420
      %422 = vrot.lane.b32.xlu0 %v304, 4
      %v423 = vpop.permute.xlu0 %422
      %424 = vrot.lane.b32.xlu0 %v305, 4
      %v425 = vpop.permute.xlu0 %424
      %426 = vrot.lane.b32.xlu0 %v306, 4
      %v427 = vpop.permute.xlu0 %426
      %428 = vrot.lane.b32.xlu0 %v307, 4
      %v429 = vpop.permute.xlu0 %428
      %430 = vrot.lane.b32.xlu0 %v308, 4
      %v431 = vpop.permute.xlu0 %430
      %432 = vrot.lane.b32.xlu0 %v309, 4
      %v433 = vpop.permute.xlu0 %432
      %434 = vrot.lane.b32.xlu0 %v310, 4
      %v435 = vpop.permute.xlu0 %434
      %436 = vrot.lane.b32.xlu0 %v311, 4
      %v437 = vpop.permute.xlu0 %436
      %438 = vrot.lane.b32.xlu0 %v312, 4
      %v439 = vpop.permute.xlu0 %438
      %440 = vrot.lane.b32.xlu0 %v313, 4
      %v441 = vpop.permute.xlu0 %440
      %442 = vrot.lane.b32.xlu0 %v314, 4
      %v443 = vpop.permute.xlu0 %442
      %444 = vrot.lane.b32.xlu0 %v315, 4
      %v445 = vpop.permute.xlu0 %444
      %510 = vrot.lane.b32.xlu0 %v318, 8
      %v511 = vpop.permute.xlu0 %510
      %512 = vrot.lane.b32.xlu0 %v319, 8
      %v513 = vpop.permute.xlu0 %512
      %514 = vrot.lane.b32.xlu0 %v320, 8
      %v515 = vpop.permute.xlu0 %514
      %516 = vrot.lane.b32.xlu0 %v321, 8
      %v517 = vpop.permute.xlu0 %516
      %518 = vrot.lane.b32.xlu0 %v322, 8
      %v519 = vpop.permute.xlu0 %518
      %520 = vrot.lane.b32.xlu0 %v323, 8
      %v521 = vpop.permute.xlu0 %520
      %522 = vrot.lane.b32.xlu0 %v324, 8
      %v523 = vpop.permute.xlu0 %522
      %524 = vrot.lane.b32.xlu0 %v325, 8
      %v525 = vpop.permute.xlu0 %524
      %526 = vrot.lane.b32.xlu0 %v326, 8
      %v527 = vpop.permute.xlu0 %526
      %528 = vrot.lane.b32.xlu0 %v327, 8
      %v529 = vpop.permute.xlu0 %528
      %530 = vrot.lane.b32.xlu0 %v328, 8
      %v531 = vpop.permute.xlu0 %530
      %532 = vrot.lane.b32.xlu0 %v329, 8
      %v533 = vpop.permute.xlu0 %532
      %534 = vrot.lane.b32.xlu0 %v330, 8
      %v535 = vpop.permute.xlu0 %534
      %536 = vrot.lane.b32.xlu0 %v331, 8
      %v537 = vpop.permute.xlu0 %536
      %538 = vrot.lane.b32.xlu0 %v332, 8
      %v539 = vpop.permute.xlu0 %538
      %540 = vrot.lane.b32.xlu0 %v333, 8
      %v541 = vpop.permute.xlu0 %540
      %542 = vrot.lane.b32.xlu0 %v334, 8
      %v543 = vpop.permute.xlu0 %542
      %544 = vrot.lane.b32.xlu0 %v335, 8
      %v545 = vpop.permute.xlu0 %544
      %546 = vrot.lane.b32.xlu0 %v336, 8
      %v547 = vpop.permute.xlu0 %546
      %548 = vrot.lane.b32.xlu0 %v337, 8
      %v549 = vpop.permute.xlu0 %548
      %550 = vrot.lane.b32.xlu0 %v338, 8
      %v551 = vpop.permute.xlu0 %550
      %552 = vrot.lane.b32.xlu0 %v339, 8
      %v553 = vpop.permute.xlu0 %552
      %554 = vrot.lane.b32.xlu0 %v340, 8
      %v555 = vpop.permute.xlu0 %554
      %556 = vrot.lane.b32.xlu0 %v341, 8
      %v557 = vpop.permute.xlu0 %556
      %558 = vrot.lane.b32.xlu0 %v342, 8
      %v559 = vpop.permute.xlu0 %558
      %560 = vrot.lane.b32.xlu0 %v343, 8
      %v561 = vpop.permute.xlu0 %560
      %562 = vrot.lane.b32.xlu0 %v344, 8
      %v563 = vpop.permute.xlu0 %562
      %564 = vrot.lane.b32.xlu0 %v345, 8
      %v565 = vpop.permute.xlu0 %564
      %566 = vrot.lane.b32.xlu0 %v346, 8
      %v567 = vpop.permute.xlu0 %566
      %568 = vrot.lane.b32.xlu0 %v347, 8
      %v569 = vpop.permute.xlu0 %568
      %570 = vrot.lane.b32.xlu0 %v348, 8
      %v571 = vpop.permute.xlu0 %570
      %572 = vrot.lane.b32.xlu0 %v349, 8
      %v573 = vpop.permute.xlu0 %572
      %606 = vrot.lane.b32.xlu0 %v318, 12
      %v607 = vpop.permute.xlu0 %606
      %608 = vrot.lane.b32.xlu0 %v319, 12
      %v609 = vpop.permute.xlu0 %608
      %610 = vrot.lane.b32.xlu0 %v320, 12
      %v611 = vpop.permute.xlu0 %610
      %612 = vrot.lane.b32.xlu0 %v321, 12
      %v613 = vpop.permute.xlu0 %612
      %614 = vrot.lane.b32.xlu0 %v322, 12
      %v615 = vpop.permute.xlu0 %614
      %616 = vrot.lane.b32.xlu0 %v323, 12
      %v617 = vpop.permute.xlu0 %616
      %618 = vrot.lane.b32.xlu0 %v324, 12
      %v619 = vpop.permute.xlu0 %618
      %620 = vrot.lane.b32.xlu0 %v325, 12
      %v621 = vpop.permute.xlu0 %620
      %622 = vrot.lane.b32.xlu0 %v326, 12
      %v623 = vpop.permute.xlu0 %622
      %624 = vrot.lane.b32.xlu0 %v327, 12
      %v625 = vpop.permute.xlu0 %624
      %626 = vrot.lane.b32.xlu0 %v328, 12
      %v627 = vpop.permute.xlu0 %626
      %628 = vrot.lane.b32.xlu0 %v329, 12
      %v629 = vpop.permute.xlu0 %628
      %630 = vrot.lane.b32.xlu0 %v330, 12
      %v631 = vpop.permute.xlu0 %630
      %632 = vrot.lane.b32.xlu0 %v331, 12
      %v633 = vpop.permute.xlu0 %632
      %634 = vrot.lane.b32.xlu0 %v332, 12
      %v635 = vpop.permute.xlu0 %634
      %636 = vrot.lane.b32.xlu0 %v333, 12
      %v637 = vpop.permute.xlu0 %636
      %638 = vrot.lane.b32.xlu0 %v334, 12
      %v639 = vpop.permute.xlu0 %638
      %640 = vrot.lane.b32.xlu0 %v335, 12
      %v641 = vpop.permute.xlu0 %640
      %642 = vrot.lane.b32.xlu0 %v336, 12
      %v643 = vpop.permute.xlu0 %642
      %644 = vrot.lane.b32.xlu0 %v337, 12
      %v645 = vpop.permute.xlu0 %644
      %646 = vrot.lane.b32.xlu0 %v338, 12
      %v647 = vpop.permute.xlu0 %646
      %648 = vrot.lane.b32.xlu0 %v339, 12
      %v649 = vpop.permute.xlu0 %648
      %650 = vrot.lane.b32.xlu0 %v340, 12
      %v651 = vpop.permute.xlu0 %650
      %652 = vrot.lane.b32.xlu0 %v341, 12
      %v653 = vpop.permute.xlu0 %652
      %654 = vrot.lane.b32.xlu0 %v342, 12
      %v655 = vpop.permute.xlu0 %654
      %656 = vrot.lane.b32.xlu0 %v343, 12
      %v657 = vpop.permute.xlu0 %656
      %658 = vrot.lane.b32.xlu0 %v344, 12
      %v659 = vpop.permute.xlu0 %658
      %660 = vrot.lane.b32.xlu0 %v345, 12
      %v661 = vpop.permute.xlu0 %660
      %662 = vrot.lane.b32.xlu0 %v346, 12
      %v663 = vpop.permute.xlu0 %662
      %664 = vrot.lane.b32.xlu0 %v347, 12
      %v665 = vpop.permute.xlu0 %664
      %666 = vrot.lane.b32.xlu0 %v348, 12
      %v667 = vpop.permute.xlu0 %666
      %668 = vrot.lane.b32.xlu0 %v349, 12
      %v669 = vpop.permute.xlu0 %668
      %vm702 = vcmask 31744
      %v703 = vsel %vm702, %v284, %v383
      %v704 = vsel %vm702, %v285, %v385
      %v705 = vsel %vm702, %v286, %v387
      %v706 = vsel %vm702, %v287, %v389
      %v707 = vsel %vm702, %v288, %v391
      %v708 = vsel %vm702, %v289, %v393
      %v709 = vsel %vm702, %v290, %v395
      %v710 = vsel %vm702, %v291, %v397
      %v711 = vsel %vm702, %v292, %v399
      %v712 = vsel %vm702, %v293, %v401
      %v713 = vsel %vm702, %v294, %v403
      %v714 = vsel %vm702, %v295, %v405
      %v715 = vsel %vm702, %v296, %v407
      %v716 = vsel %vm702, %v297, %v409
      %v717 = vsel %vm702, %v298, %v411
      %v718 = vsel %vm702, %v299, %v413
      %v719 = vsel %vm702, %v300, %v415
      %v720 = vsel %vm702, %v301, %v417
      %v721 = vsel %vm702, %v302, %v419
      %v722 = vsel %vm702, %v303, %v421
      %v723 = vsel %vm702, %v304, %v423
      %v724 = vsel %vm702, %v305, %v425
      %v725 = vsel %vm702, %v306, %v427
      %v726 = vsel %vm702, %v307, %v429
      %v727 = vsel %vm702, %v308, %v431
      %v728 = vsel %vm702, %v309, %v433
      %v729 = vsel %vm702, %v310, %v435
      %v730 = vsel %vm702, %v311, %v437
      %v731 = vsel %vm702, %v312, %v439
      %v732 = vsel %vm702, %v313, %v441
      %v733 = vsel %vm702, %v314, %v443
      %v734 = vsel %vm702, %v315, %v445
      %vm735 = vcmask 64512
      %v736 = vsel %vm735, %v703, %v511
      %v737 = vsel %vm735, %v704, %v513
      %v738 = vsel %vm735, %v705, %v515
      %v739 = vsel %vm735, %v706, %v517
      %v740 = vsel %vm735, %v707, %v519
      %v741 = vsel %vm735, %v708, %v521
      %v742 = vsel %vm735, %v709, %v523
      %v743 = vsel %vm735, %v710, %v525
      %v744 = vsel %vm735, %v711, %v527
      %v745 = vsel %vm735, %v712, %v529
      %v746 = vsel %vm735, %v713, %v531
      %v747 = vsel %vm735, %v714, %v533
      %v748 = vsel %vm735, %v715, %v535
      %v749 = vsel %vm735, %v716, %v537
      %v750 = vsel %vm735, %v717, %v539
      %v751 = vsel %vm735, %v718, %v541
      %v752 = vsel %vm735, %v719, %v543
      %v753 = vsel %vm735, %v720, %v545
      %v754 = vsel %vm735, %v721, %v547
      %v755 = vsel %vm735, %v722, %v549
      %v756 = vsel %vm735, %v723, %v551
      %v757 = vsel %vm735, %v724, %v553
      %v758 = vsel %vm735, %v725, %v555
      %v759 = vsel %vm735, %v726, %v557
      %v760 = vsel %vm735, %v727, %v559
      %v761 = vsel %vm735, %v728, %v561
      %v762 = vsel %vm735, %v729, %v563
      %v763 = vsel %vm735, %v730, %v565
      %v764 = vsel %vm735, %v731, %v567
      %v765 = vsel %vm735, %v732, %v569
      %v766 = vsel %vm735, %v733, %v571
      %v767 = vsel %vm735, %v734, %v573
      %vm768 = vcmask 97280
      %v769 = vsel %vm768, %v736, %v607
      %v770 = vsel %vm768, %v737, %v609
      %v771 = vsel %vm768, %v738, %v611
      %v772 = vsel %vm768, %v739, %v613
      %v773 = vsel %vm768, %v740, %v615
      %v774 = vsel %vm768, %v741, %v617
      %v775 = vsel %vm768, %v742, %v619
      %v776 = vsel %vm768, %v743, %v621
      %v777 = vsel %vm768, %v744, %v623
      %v778 = vsel %vm768, %v745, %v625
      %v779 = vsel %vm768, %v746, %v627
      %v780 = vsel %vm768, %v747, %v629
      %v781 = vsel %vm768, %v748, %v631
      %v782 = vsel %vm768, %v749, %v633
      %v783 = vsel %vm768, %v750, %v635
      %v784 = vsel %vm768, %v751, %v637
      %v785 = vsel %vm768, %v752, %v639
      %v786 = vsel %vm768, %v753, %v641
      %v787 = vsel %vm768, %v754, %v643
      %v788 = vsel %vm768, %v755, %v645
      %v789 = vsel %vm768, %v756, %v647
      %v790 = vsel %vm768, %v757, %v649
      %v791 = vsel %vm768, %v758, %v651
      %v792 = vsel %vm768, %v759, %v653
      %v793 = vsel %vm768, %v760, %v655
      %v794 = vsel %vm768, %v761, %v657
      %v795 = vsel %vm768, %v762, %v659
      %v796 = vsel %vm768, %v763, %v661
      %v797 = vsel %vm768, %v764, %v663
      %v798 = vsel %vm768, %v765, %v665
      %v799 = vsel %vm768, %v766, %v667
      %v800 = vsel %vm768, %v767, %v669
      %v801 = vlaneseq
      %v802 = vshrl.u32 %v801, 7
      %v803 = vadd.s32 %v802, 8
      %v804 = vadd.s32 %v802, 16
      %v805 = vadd.s32 %v802, 24
      %v806 = vadd.s32 %v802, 32
      %v807 = vadd.s32 %v802, 40
      %v808 = vadd.s32 %v802, 48
      %v809 = vadd.s32 %v802, 56
      %v810 = vadd.s32 %v802, 64
      %v811 = vadd.s32 %v802, 72
      %v812 = vadd.s32 %v802, 80
      %v813 = vadd.s32 %v802, 88
      %v814 = vadd.s32 %v802, 96
      %v815 = vadd.s32 %v802, 104
      %v816 = vadd.s32 %v802, 112
      %v817 = vadd.s32 %v802, 120
      %v818 = vadd.s32 %v802, 128
      %v819 = vadd.s32 %v802, 136
      %v820 = vadd.s32 %v802, 144
      %v821 = vadd.s32 %v802, 152
      %v822 = vadd.s32 %v802, 160
      %v823 = vadd.s32 %v802, 168
      %v824 = vadd.s32 %v802, 176
      %v825 = vadd.s32 %v802, 184
      %v826 = vadd.s32 %v802, 192
      %v827 = vadd.s32 %v802, 200
      %v828 = vadd.s32 %v802, 208
      %v829 = vadd.s32 %v802, 216
      %v830 = vadd.s32 %v802, 224
      %v831 = vadd.s32 %v802, 232
      %v832 = vadd.s32 %v802, 240
      %v833 = vadd.s32 %v802, 248
      %vm834 = vcmp.lt.s32.totalorder %v802, 0
      %v835 = vsub.s32 0, %v802
      %v836 = vsel %vm834, %v835, %v802
      %v837 = vshrl.u32 %v836, 4
      %v838 = vand.u32 %v836, 15
      %v839 = vsub.s32 0, %v838
      %v840 = vsel %vm834, %v839, %v838
      %vm841 = vcmp.lt.s32.totalorder %v803, 0
      %v842 = vsub.s32 0, %v803
      %v843 = vsel %vm841, %v842, %v803
      %v844 = vshrl.u32 %v843, 4
      %v845 = vand.u32 %v843, 15
      %v846 = vsub.s32 0, %v845
      %v847 = vsel %vm841, %v846, %v845
      %vm848 = vcmp.lt.s32.totalorder %v804, 0
      %v849 = vsub.s32 0, %v804
      %v850 = vsel %vm848, %v849, %v804
      %v851 = vshrl.u32 %v850, 4
      %v852 = vand.u32 %v850, 15
      %v853 = vsub.s32 0, %v852
      %v854 = vsel %vm848, %v853, %v852
      %vm855 = vcmp.lt.s32.totalorder %v805, 0
      %v856 = vsub.s32 0, %v805
      %v857 = vsel %vm855, %v856, %v805
      %v858 = vshrl.u32 %v857, 4
      %v859 = vand.u32 %v857, 15
      %v860 = vsub.s32 0, %v859
      %v861 = vsel %vm855, %v860, %v859
      %vm862 = vcmp.lt.s32.totalorder %v806, 0
      %v863 = vsub.s32 0, %v806
      %v864 = vsel %vm862, %v863, %v806
      %v865 = vshrl.u32 %v864, 4
      %v866 = vand.u32 %v864, 15
      %v867 = vsub.s32 0, %v866
      %v868 = vsel %vm862, %v867, %v866
      %vm869 = vcmp.lt.s32.totalorder %v807, 0
      %v870 = vsub.s32 0, %v807
      %v871 = vsel %vm869, %v870, %v807
      %v872 = vshrl.u32 %v871, 4
      %v873 = vand.u32 %v871, 15
      %v874 = vsub.s32 0, %v873
      %v875 = vsel %vm869, %v874, %v873
      %vm876 = vcmp.lt.s32.totalorder %v808, 0
      %v877 = vsub.s32 0, %v808
      %v878 = vsel %vm876, %v877, %v808
      %v879 = vshrl.u32 %v878, 4
      %v880 = vand.u32 %v878, 15
      %v881 = vsub.s32 0, %v880
      %v882 = vsel %vm876, %v881, %v880
      %vm883 = vcmp.lt.s32.totalorder %v809, 0
      %v884 = vsub.s32 0, %v809
      %v885 = vsel %vm883, %v884, %v809
      %v886 = vshrl.u32 %v885, 4
      %v887 = vand.u32 %v885, 15
      %v888 = vsub.s32 0, %v887
      %v889 = vsel %vm883, %v888, %v887
      %vm890 = vcmp.lt.s32.totalorder %v810, 0
      %v891 = vsub.s32 0, %v810
      %v892 = vsel %vm890, %v891, %v810
      %v893 = vshrl.u32 %v892, 4
      %v894 = vand.u32 %v892, 15
      %v895 = vsub.s32 0, %v894
      %v896 = vsel %vm890, %v895, %v894
      %vm897 = vcmp.lt.s32.totalorder %v811, 0
      %v898 = vsub.s32 0, %v811
      %v899 = vsel %vm897, %v898, %v811
      %v900 = vshrl.u32 %v899, 4
      %v901 = vand.u32 %v899, 15
      %v902 = vsub.s32 0, %v901
      %v903 = vsel %vm897, %v902, %v901
      %vm904 = vcmp.lt.s32.totalorder %v812, 0
      %v905 = vsub.s32 0, %v812
      %v906 = vsel %vm904, %v905, %v812
      %v907 = vshrl.u32 %v906, 4
      %v908 = vand.u32 %v906, 15
      %v909 = vsub.s32 0, %v908
      %v910 = vsel %vm904, %v909, %v908
      %vm911 = vcmp.lt.s32.totalorder %v813, 0
      %v912 = vsub.s32 0, %v813
      %v913 = vsel %vm911, %v912, %v813
      %v914 = vshrl.u32 %v913, 4
      %v915 = vand.u32 %v913, 15
      %v916 = vsub.s32 0, %v915
      %v917 = vsel %vm911, %v916, %v915
      %vm918 = vcmp.lt.s32.totalorder %v814, 0
      %v919 = vsub.s32 0, %v814
      %v920 = vsel %vm918, %v919, %v814
      %v921 = vshrl.u32 %v920, 4
      %v922 = vand.u32 %v920, 15
      %v923 = vsub.s32 0, %v922
      %v924 = vsel %vm918, %v923, %v922
      %vm925 = vcmp.lt.s32.totalorder %v815, 0
      %v926 = vsub.s32 0, %v815
      %v927 = vsel %vm925, %v926, %v815
      %v928 = vshrl.u32 %v927, 4
      %v929 = vand.u32 %v927, 15
      %v930 = vsub.s32 0, %v929
      %v931 = vsel %vm925, %v930, %v929
      %vm932 = vcmp.lt.s32.totalorder %v816, 0
      %v933 = vsub.s32 0, %v816
      %v934 = vsel %vm932, %v933, %v816
      %v935 = vshrl.u32 %v934, 4
      %v936 = vand.u32 %v934, 15
      %v937 = vsub.s32 0, %v936
      %v938 = vsel %vm932, %v937, %v936
      %vm939 = vcmp.lt.s32.totalorder %v817, 0
      %v940 = vsub.s32 0, %v817
      %v941 = vsel %vm939, %v940, %v817
      %v942 = vshrl.u32 %v941, 4
      %v943 = vand.u32 %v941, 15
      %v944 = vsub.s32 0, %v943
      %v945 = vsel %vm939, %v944, %v943
      %vm946 = vcmp.lt.s32.totalorder %v818, 0
      %v947 = vsub.s32 0, %v818
      %v948 = vsel %vm946, %v947, %v818
      %v949 = vshrl.u32 %v948, 4
      %v950 = vand.u32 %v948, 15
      %v951 = vsub.s32 0, %v950
      %v952 = vsel %vm946, %v951, %v950
      %vm953 = vcmp.lt.s32.totalorder %v819, 0
      %v954 = vsub.s32 0, %v819
      %v955 = vsel %vm953, %v954, %v819
      %v956 = vshrl.u32 %v955, 4
      %v957 = vand.u32 %v955, 15
      %v958 = vsub.s32 0, %v957
      %v959 = vsel %vm953, %v958, %v957
      %vm960 = vcmp.lt.s32.totalorder %v820, 0
      %v961 = vsub.s32 0, %v820
      %v962 = vsel %vm960, %v961, %v820
      %v963 = vshrl.u32 %v962, 4
      %v964 = vand.u32 %v962, 15
      %v965 = vsub.s32 0, %v964
      %v966 = vsel %vm960, %v965, %v964
      %vm967 = vcmp.lt.s32.totalorder %v821, 0
      %v968 = vsub.s32 0, %v821
      %v969 = vsel %vm967, %v968, %v821
      %v970 = vshrl.u32 %v969, 4
      %v971 = vand.u32 %v969, 15
      %v972 = vsub.s32 0, %v971
      %v973 = vsel %vm967, %v972, %v971
      %vm974 = vcmp.lt.s32.totalorder %v822, 0
      %v975 = vsub.s32 0, %v822
      %v976 = vsel %vm974, %v975, %v822
      %v977 = vshrl.u32 %v976, 4
      %v978 = vand.u32 %v976, 15
      %v979 = vsub.s32 0, %v978
      %v980 = vsel %vm974, %v979, %v978
      %vm981 = vcmp.lt.s32.totalorder %v823, 0
      %v982 = vsub.s32 0, %v823
      %v983 = vsel %vm981, %v982, %v823
      %v984 = vshrl.u32 %v983, 4
      %v985 = vand.u32 %v983, 15
      %v986 = vsub.s32 0, %v985
      %v987 = vsel %vm981, %v986, %v985
      %vm988 = vcmp.lt.s32.totalorder %v824, 0
      %v989 = vsub.s32 0, %v824
      %v990 = vsel %vm988, %v989, %v824
      %v991 = vshrl.u32 %v990, 4
      %v992 = vand.u32 %v990, 15
      %v993 = vsub.s32 0, %v992
      %v994 = vsel %vm988, %v993, %v992
      %vm995 = vcmp.lt.s32.totalorder %v825, 0
      %v996 = vsub.s32 0, %v825
      %v997 = vsel %vm995, %v996, %v825
      %v998 = vshrl.u32 %v997, 4
      %v999 = vand.u32 %v997, 15
      %v1000 = vsub.s32 0, %v999
      %v1001 = vsel %vm995, %v1000, %v999
      %vm1002 = vcmp.lt.s32.totalorder %v826, 0
      %v1003 = vsub.s32 0, %v826
      %v1004 = vsel %vm1002, %v1003, %v826
      %v1005 = vshrl.u32 %v1004, 4
      %v1006 = vand.u32 %v1004, 15
      %v1007 = vsub.s32 0, %v1006
      %v1008 = vsel %vm1002, %v1007, %v1006
      %vm1009 = vcmp.lt.s32.totalorder %v827, 0
      %v1010 = vsub.s32 0, %v827
      %v1011 = vsel %vm1009, %v1010, %v827
      %v1012 = vshrl.u32 %v1011, 4
      %v1013 = vand.u32 %v1011, 15
      %v1014 = vsub.s32 0, %v1013
      %v1015 = vsel %vm1009, %v1014, %v1013
      %vm1016 = vcmp.lt.s32.totalorder %v828, 0
      %v1017 = vsub.s32 0, %v828
      %v1018 = vsel %vm1016, %v1017, %v828
      %v1019 = vshrl.u32 %v1018, 4
      %v1020 = vand.u32 %v1018, 15
      %v1021 = vsub.s32 0, %v1020
      %v1022 = vsel %vm1016, %v1021, %v1020
      %vm1023 = vcmp.lt.s32.totalorder %v829, 0
      %v1024 = vsub.s32 0, %v829
      %v1025 = vsel %vm1023, %v1024, %v829
      %v1026 = vshrl.u32 %v1025, 4
      %v1027 = vand.u32 %v1025, 15
      %v1028 = vsub.s32 0, %v1027
      %v1029 = vsel %vm1023, %v1028, %v1027
      %vm1030 = vcmp.lt.s32.totalorder %v830, 0
      %v1031 = vsub.s32 0, %v830
      %v1032 = vsel %vm1030, %v1031, %v830
      %v1033 = vshrl.u32 %v1032, 4
      %v1034 = vand.u32 %v1032, 15
      %v1035 = vsub.s32 0, %v1034
      %v1036 = vsel %vm1030, %v1035, %v1034
      %vm1037 = vcmp.lt.s32.totalorder %v831, 0
      %v1038 = vsub.s32 0, %v831
      %v1039 = vsel %vm1037, %v1038, %v831
      %v1040 = vshrl.u32 %v1039, 4
      %v1041 = vand.u32 %v1039, 15
      %v1042 = vsub.s32 0, %v1041
      %v1043 = vsel %vm1037, %v1042, %v1041
      %vm1044 = vcmp.lt.s32.totalorder %v832, 0
      %v1045 = vsub.s32 0, %v832
      %v1046 = vsel %vm1044, %v1045, %v832
      %v1047 = vshrl.u32 %v1046, 4
      %v1048 = vand.u32 %v1046, 15
      %v1049 = vsub.s32 0, %v1048
      %v1050 = vsel %vm1044, %v1049, %v1048
      %vm1051 = vcmp.lt.s32.totalorder %v833, 0
      %v1052 = vsub.s32 0, %v833
      %v1053 = vsel %vm1051, %v1052, %v833
      %v1054 = vshrl.u32 %v1053, 4
      %v1055 = vand.u32 %v1053, 15
      %v1056 = vsub.s32 0, %v1055
      %v1057 = vsel %vm1051, %v1056, %v1055
      %vm1058 = vcmp.ne.s32.totalorder %v840, 0
      %vm1059 = vcmp.ne.s32.totalorder %v847, 0
      %vm1060 = vcmp.ne.s32.totalorder %v854, 0
      %vm1061 = vcmp.ne.s32.totalorder %v861, 0
      %vm1062 = vcmp.ne.s32.totalorder %v868, 0
      %vm1063 = vcmp.ne.s32.totalorder %v875, 0
      %vm1064 = vcmp.ne.s32.totalorder %v882, 0
      %vm1065 = vcmp.ne.s32.totalorder %v889, 0
      %vm1066 = vcmp.ne.s32.totalorder %v896, 0
      %vm1067 = vcmp.ne.s32.totalorder %v903, 0
      %vm1068 = vcmp.ne.s32.totalorder %v910, 0
      %vm1069 = vcmp.ne.s32.totalorder %v917, 0
      %vm1070 = vcmp.ne.s32.totalorder %v924, 0
      %vm1071 = vcmp.ne.s32.totalorder %v931, 0
      %vm1072 = vcmp.ne.s32.totalorder %v938, 0
      %vm1073 = vcmp.ne.s32.totalorder %v945, 0
      %vm1074 = vcmp.ne.s32.totalorder %v952, 0
      %vm1075 = vcmp.ne.s32.totalorder %v959, 0
      %vm1076 = vcmp.ne.s32.totalorder %v966, 0
      %vm1077 = vcmp.ne.s32.totalorder %v973, 0
      %vm1078 = vcmp.ne.s32.totalorder %v980, 0
      %vm1079 = vcmp.ne.s32.totalorder %v987, 0
      %vm1080 = vcmp.ne.s32.totalorder %v994, 0
      %vm1081 = vcmp.ne.s32.totalorder %v1001, 0
      %vm1082 = vcmp.ne.s32.totalorder %v1008, 0
      %vm1083 = vcmp.ne.s32.totalorder %v1015, 0
      %vm1084 = vcmp.ne.s32.totalorder %v1022, 0
      %vm1085 = vcmp.ne.s32.totalorder %v1029, 0
      %vm1086 = vcmp.ne.s32.totalorder %v1036, 0
      %vm1087 = vcmp.ne.s32.totalorder %v1043, 0
      %vm1088 = vcmp.ne.s32.totalorder %v1050, 0
      %vm1089 = vcmp.ne.s32.totalorder %v1057, 0
      %vm1090 = vcmp.lt.s32.totalorder %v840, 0
      %vm1091 = vcmp.lt.s32.totalorder %v847, 0
      %vm1092 = vcmp.lt.s32.totalorder %v854, 0
      %vm1093 = vcmp.lt.s32.totalorder %v861, 0
      %vm1094 = vcmp.lt.s32.totalorder %v868, 0
      %vm1095 = vcmp.lt.s32.totalorder %v875, 0
      %vm1096 = vcmp.lt.s32.totalorder %v882, 0
      %vm1097 = vcmp.lt.s32.totalorder %v889, 0
      %vm1098 = vcmp.lt.s32.totalorder %v896, 0
      %vm1099 = vcmp.lt.s32.totalorder %v903, 0
      %vm1100 = vcmp.lt.s32.totalorder %v910, 0
      %vm1101 = vcmp.lt.s32.totalorder %v917, 0
      %vm1102 = vcmp.lt.s32.totalorder %v924, 0
      %vm1103 = vcmp.lt.s32.totalorder %v931, 0
      %vm1104 = vcmp.lt.s32.totalorder %v938, 0
      %vm1105 = vcmp.lt.s32.totalorder %v945, 0
      %vm1106 = vcmp.lt.s32.totalorder %v952, 0
      %vm1107 = vcmp.lt.s32.totalorder %v959, 0
      %vm1108 = vcmp.lt.s32.totalorder %v966, 0
      %vm1109 = vcmp.lt.s32.totalorder %v973, 0
      %vm1110 = vcmp.lt.s32.totalorder %v980, 0
      %vm1111 = vcmp.lt.s32.totalorder %v987, 0
      %vm1112 = vcmp.lt.s32.totalorder %v994, 0
      %vm1113 = vcmp.lt.s32.totalorder %v1001, 0
      %vm1114 = vcmp.lt.s32.totalorder %v1008, 0
      %vm1115 = vcmp.lt.s32.totalorder %v1015, 0
      %vm1116 = vcmp.lt.s32.totalorder %v1022, 0
      %vm1117 = vcmp.lt.s32.totalorder %v1029, 0
      %vm1118 = vcmp.lt.s32.totalorder %v1036, 0
      %vm1119 = vcmp.lt.s32.totalorder %v1043, 0
      %vm1120 = vcmp.lt.s32.totalorder %v1050, 0
      %vm1121 = vcmp.lt.s32.totalorder %v1057, 0
      %vm1122 = vmand %vm1090, %vm1058
      %vm1123 = vmand %vm1091, %vm1059
      %vm1124 = vmand %vm1092, %vm1060
      %vm1125 = vmand %vm1093, %vm1061
      %vm1126 = vmand %vm1094, %vm1062
      %vm1127 = vmand %vm1095, %vm1063
      %vm1128 = vmand %vm1096, %vm1064
      %vm1129 = vmand %vm1097, %vm1065
      %vm1130 = vmand %vm1098, %vm1066
      %vm1131 = vmand %vm1099, %vm1067
      %vm1132 = vmand %vm1100, %vm1068
      %vm1133 = vmand %vm1101, %vm1069
      %vm1134 = vmand %vm1102, %vm1070
      %vm1135 = vmand %vm1103, %vm1071
      %vm1136 = vmand %vm1104, %vm1072
      %vm1137 = vmand %vm1105, %vm1073
      %vm1138 = vmand %vm1106, %vm1074
      %vm1139 = vmand %vm1107, %vm1075
      %vm1140 = vmand %vm1108, %vm1076
      %vm1141 = vmand %vm1109, %vm1077
      %vm1142 = vmand %vm1110, %vm1078
      %vm1143 = vmand %vm1111, %vm1079
      %vm1144 = vmand %vm1112, %vm1080
      %vm1145 = vmand %vm1113, %vm1081
      %vm1146 = vmand %vm1114, %vm1082
      %vm1147 = vmand %vm1115, %vm1083
      %vm1148 = vmand %vm1116, %vm1084
      %vm1149 = vmand %vm1117, %vm1085
      %vm1150 = vmand %vm1118, %vm1086
      %vm1151 = vmand %vm1119, %vm1087
      %vm1152 = vmand %vm1120, %vm1088
      %vm1153 = vmand %vm1121, %vm1089
      %v1154 = vadd.s32 %v840, 16
      %v1155 = vadd.s32 %v847, 16
      %v1156 = vadd.s32 %v854, 16
      %v1157 = vadd.s32 %v861, 16
      %v1158 = vadd.s32 %v868, 16
      %v1159 = vadd.s32 %v875, 16
      %v1160 = vadd.s32 %v882, 16
      %v1161 = vadd.s32 %v889, 16
      %v1162 = vadd.s32 %v896, 16
      %v1163 = vadd.s32 %v903, 16
      %v1164 = vadd.s32 %v910, 16
      %v1165 = vadd.s32 %v917, 16
      %v1166 = vadd.s32 %v924, 16
      %v1167 = vadd.s32 %v931, 16
      %v1168 = vadd.s32 %v938, 16
      %v1169 = vadd.s32 %v945, 16
      %v1170 = vadd.s32 %v952, 16
      %v1171 = vadd.s32 %v959, 16
      %v1172 = vadd.s32 %v966, 16
      %v1173 = vadd.s32 %v973, 16
      %v1174 = vadd.s32 %v980, 16
      %v1175 = vadd.s32 %v987, 16
      %v1176 = vadd.s32 %v994, 16
      %v1177 = vadd.s32 %v1001, 16
      %v1178 = vadd.s32 %v1008, 16
      %v1179 = vadd.s32 %v1015, 16
      %v1180 = vadd.s32 %v1022, 16
      %v1181 = vadd.s32 %v1029, 16
      %v1182 = vadd.s32 %v1036, 16
      %v1183 = vadd.s32 %v1043, 16
      %v1184 = vadd.s32 %v1050, 16
      %v1185 = vadd.s32 %v1057, 16
      %v1186 = vsel %vm1122, %v1154, %v840
      %v1187 = vsel %vm1123, %v1155, %v847
      %v1188 = vsel %vm1124, %v1156, %v854
      %v1189 = vsel %vm1125, %v1157, %v861
      %v1190 = vsel %vm1126, %v1158, %v868
      %v1191 = vsel %vm1127, %v1159, %v875
      %v1192 = vsel %vm1128, %v1160, %v882
      %v1193 = vsel %vm1129, %v1161, %v889
      %v1194 = vsel %vm1130, %v1162, %v896
      %v1195 = vsel %vm1131, %v1163, %v903
      %v1196 = vsel %vm1132, %v1164, %v910
      %v1197 = vsel %vm1133, %v1165, %v917
      %v1198 = vsel %vm1134, %v1166, %v924
      %v1199 = vsel %vm1135, %v1167, %v931
      %v1200 = vsel %vm1136, %v1168, %v938
      %v1201 = vsel %vm1137, %v1169, %v945
      %v1202 = vsel %vm1138, %v1170, %v952
      %v1203 = vsel %vm1139, %v1171, %v959
      %v1204 = vsel %vm1140, %v1172, %v966
      %v1205 = vsel %vm1141, %v1173, %v973
      %v1206 = vsel %vm1142, %v1174, %v980
      %v1207 = vsel %vm1143, %v1175, %v987
      %v1208 = vsel %vm1144, %v1176, %v994
      %v1209 = vsel %vm1145, %v1177, %v1001
      %v1210 = vsel %vm1146, %v1178, %v1008
      %v1211 = vsel %vm1147, %v1179, %v1015
      %v1212 = vsel %vm1148, %v1180, %v1022
      %v1213 = vsel %vm1149, %v1181, %v1029
      %v1214 = vsel %vm1150, %v1182, %v1036
      %v1215 = vsel %vm1151, %v1183, %v1043
      %v1216 = vsel %vm1152, %v1184, %v1050
      %v1217 = vsel %vm1153, %v1185, %v1057
      %vm1218 = vcmp.eq.s32.totalorder %v1186, 0
      %vm1219 = vcmp.eq.s32.totalorder %v1187, 0
      %vm1220 = vcmp.eq.s32.totalorder %v1188, 0
      %vm1221 = vcmp.eq.s32.totalorder %v1189, 0
      %vm1222 = vcmp.eq.s32.totalorder %v1190, 0
      %vm1223 = vcmp.eq.s32.totalorder %v1191, 0
      %vm1224 = vcmp.eq.s32.totalorder %v1192, 0
      %vm1225 = vcmp.eq.s32.totalorder %v1193, 0
      %vm1226 = vcmp.eq.s32.totalorder %v1194, 0
      %vm1227 = vcmp.eq.s32.totalorder %v1195, 0
      %vm1228 = vcmp.eq.s32.totalorder %v1196, 0
      %vm1229 = vcmp.eq.s32.totalorder %v1197, 0
      %vm1230 = vcmp.eq.s32.totalorder %v1198, 0
      %vm1231 = vcmp.eq.s32.totalorder %v1199, 0
      %vm1232 = vcmp.eq.s32.totalorder %v1200, 0
      %vm1233 = vcmp.eq.s32.totalorder %v1201, 0
      %vm1234 = vcmp.eq.s32.totalorder %v1202, 0
      %vm1235 = vcmp.eq.s32.totalorder %v1203, 0
      %vm1236 = vcmp.eq.s32.totalorder %v1204, 0
      %vm1237 = vcmp.eq.s32.totalorder %v1205, 0
      %vm1238 = vcmp.eq.s32.totalorder %v1206, 0
      %vm1239 = vcmp.eq.s32.totalorder %v1207, 0
      %vm1240 = vcmp.eq.s32.totalorder %v1208, 0
      %vm1241 = vcmp.eq.s32.totalorder %v1209, 0
      %vm1242 = vcmp.eq.s32.totalorder %v1210, 0
      %vm1243 = vcmp.eq.s32.totalorder %v1211, 0
      %vm1244 = vcmp.eq.s32.totalorder %v1212, 0
      %vm1245 = vcmp.eq.s32.totalorder %v1213, 0
      %vm1246 = vcmp.eq.s32.totalorder %v1214, 0
      %vm1247 = vcmp.eq.s32.totalorder %v1215, 0
      %vm1248 = vcmp.eq.s32.totalorder %v1216, 0
      %vm1249 = vcmp.eq.s32.totalorder %v1217, 0
      %v1250 = vrot.slane %v769, 7
      %v1251 = vrot.slane %v770, 7
      %v1252 = vrot.slane %v771, 7
      %v1253 = vrot.slane %v772, 7
      %v1254 = vrot.slane %v773, 7
      %v1255 = vrot.slane %v774, 7
      %v1256 = vrot.slane %v775, 7
      %v1257 = vrot.slane %v776, 7
      %v1258 = vrot.slane %v777, 7
      %v1259 = vrot.slane %v778, 7
      %v1260 = vrot.slane %v779, 7
      %v1261 = vrot.slane %v780, 7
      %v1262 = vrot.slane %v781, 7
      %v1263 = vrot.slane %v782, 7
      %v1264 = vrot.slane %v783, 7
      %v1265 = vrot.slane %v784, 7
      %v1266 = vrot.slane %v785, 7
      %v1267 = vrot.slane %v786, 7
      %v1268 = vrot.slane %v787, 7
      %v1269 = vrot.slane %v788, 7
      %v1270 = vrot.slane %v789, 7
      %v1271 = vrot.slane %v790, 7
      %v1272 = vrot.slane %v791, 7
      %v1273 = vrot.slane %v792, 7
      %v1274 = vrot.slane %v793, 7
      %v1275 = vrot.slane %v794, 7
      %v1276 = vrot.slane %v795, 7
      %v1277 = vrot.slane %v796, 7
      %v1278 = vrot.slane %v797, 7
      %v1279 = vrot.slane %v798, 7
      %v1280 = vrot.slane %v799, 7
      %v1281 = vrot.slane %v800, 7
      %vm1282 = vcmp.lt.s32.totalorder %v802, 1
      %v1283 = vsel %vm1282, %v1280, %v1281
      %v1284 = vsel %vm1282, %v1279, %v1280
      %v1285 = vsel %vm1282, %v1278, %v1279
      %v1286 = vsel %vm1282, %v1277, %v1278
      %v1287 = vsel %vm1282, %v1276, %v1277
      %v1288 = vsel %vm1282, %v1275, %v1276
      %v1289 = vsel %vm1282, %v1274, %v1275
      %v1290 = vsel %vm1282, %v1273, %v1274
      %v1291 = vsel %vm1282, %v1272, %v1273
      %v1292 = vsel %vm1282, %v1271, %v1272
      %v1293 = vsel %vm1282, %v1270, %v1271
      %v1294 = vsel %vm1282, %v1269, %v1270
      %v1295 = vsel %vm1282, %v1268, %v1269
      %v1296 = vsel %vm1282, %v1267, %v1268
      %v1297 = vsel %vm1282, %v1266, %v1267
      %v1298 = vsel %vm1282, %v1265, %v1266
      %v1299 = vsel %vm1282, %v1264, %v1265
      %v1300 = vsel %vm1282, %v1263, %v1264
      %v1301 = vsel %vm1282, %v1262, %v1263
      %v1302 = vsel %vm1282, %v1261, %v1262
      %v1303 = vsel %vm1282, %v1260, %v1261
      %v1304 = vsel %vm1282, %v1259, %v1260
      %v1305 = vsel %vm1282, %v1258, %v1259
      %v1306 = vsel %vm1282, %v1257, %v1258
      %v1307 = vsel %vm1282, %v1256, %v1257
      %v1308 = vsel %vm1282, %v1255, %v1256
      %v1309 = vsel %vm1282, %v1254, %v1255
      %v1310 = vsel %vm1282, %v1253, %v1254
      %v1311 = vsel %vm1282, %v1252, %v1253
      %v1312 = vsel %vm1282, %v1251, %v1252
      %v1313 = vsel %vm1282, %v1250, %v1251
      %v1314 = vsel %vm1282, %v1281, %v1250
      %v1315 = vsel %vm1218, %v769, %v1314
      %v1316 = vsel %vm1219, %v770, %v1313
      %v1317 = vsel %vm1220, %v771, %v1312
      %v1318 = vsel %vm1221, %v772, %v1311
      %v1319 = vsel %vm1222, %v773, %v1310
      %v1320 = vsel %vm1223, %v774, %v1309
      %v1321 = vsel %vm1224, %v775, %v1308
      %v1322 = vsel %vm1225, %v776, %v1307
      %v1323 = vsel %vm1226, %v777, %v1306
      %v1324 = vsel %vm1227, %v778, %v1305
      %v1325 = vsel %vm1228, %v779, %v1304
      %v1326 = vsel %vm1229, %v780, %v1303
      %v1327 = vsel %vm1230, %v781, %v1302
      %v1328 = vsel %vm1231, %v782, %v1301
      %v1329 = vsel %vm1232, %v783, %v1300
      %v1330 = vsel %vm1233, %v784, %v1299
      %v1331 = vsel %vm1234, %v785, %v1298
      %v1332 = vsel %vm1235, %v786, %v1297
      %v1333 = vsel %vm1236, %v787, %v1296
      %v1334 = vsel %vm1237, %v788, %v1295
      %v1335 = vsel %vm1238, %v789, %v1294
      %v1336 = vsel %vm1239, %v790, %v1293
      %v1337 = vsel %vm1240, %v791, %v1292
      %v1338 = vsel %vm1241, %v792, %v1291
      %v1339 = vsel %vm1242, %v793, %v1290
      %v1340 = vsel %vm1243, %v794, %v1289
      %v1341 = vsel %vm1244, %v795, %v1288
      %v1342 = vsel %vm1245, %v796, %v1287
      %v1343 = vsel %vm1246, %v797, %v1286
      %v1344 = vsel %vm1247, %v798, %v1285
      %v1345 = vsel %vm1248, %v799, %v1284
      %v1346 = vsel %vm1249, %v800, %v1283
      %vm1347 = vcmp.eq.s32.totalorder %v1186, 15
      %vm1348 = vcmp.eq.s32.totalorder %v1187, 15
      %vm1349 = vcmp.eq.s32.totalorder %v1188, 15
      %vm1350 = vcmp.eq.s32.totalorder %v1189, 15
      %vm1351 = vcmp.eq.s32.totalorder %v1190, 15
      %vm1352 = vcmp.eq.s32.totalorder %v1191, 15
      %vm1353 = vcmp.eq.s32.totalorder %v1192, 15
      %vm1354 = vcmp.eq.s32.totalorder %v1193, 15
      %vm1355 = vcmp.eq.s32.totalorder %v1194, 15
      %vm1356 = vcmp.eq.s32.totalorder %v1195, 15
      %vm1357 = vcmp.eq.s32.totalorder %v1196, 15
      %vm1358 = vcmp.eq.s32.totalorder %v1197, 15
      %vm1359 = vcmp.eq.s32.totalorder %v1198, 15
      %vm1360 = vcmp.eq.s32.totalorder %v1199, 15
      %vm1361 = vcmp.eq.s32.totalorder %v1200, 15
      %vm1362 = vcmp.eq.s32.totalorder %v1201, 15
      %vm1363 = vcmp.eq.s32.totalorder %v1202, 15
      %vm1364 = vcmp.eq.s32.totalorder %v1203, 15
      %vm1365 = vcmp.eq.s32.totalorder %v1204, 15
      %vm1366 = vcmp.eq.s32.totalorder %v1205, 15
      %vm1367 = vcmp.eq.s32.totalorder %v1206, 15
      %vm1368 = vcmp.eq.s32.totalorder %v1207, 15
      %vm1369 = vcmp.eq.s32.totalorder %v1208, 15
      %vm1370 = vcmp.eq.s32.totalorder %v1209, 15
      %vm1371 = vcmp.eq.s32.totalorder %v1210, 15
      %vm1372 = vcmp.eq.s32.totalorder %v1211, 15
      %vm1373 = vcmp.eq.s32.totalorder %v1212, 15
      %vm1374 = vcmp.eq.s32.totalorder %v1213, 15
      %vm1375 = vcmp.eq.s32.totalorder %v1214, 15
      %vm1376 = vcmp.eq.s32.totalorder %v1215, 15
      %vm1377 = vcmp.eq.s32.totalorder %v1216, 15
      %vm1378 = vcmp.eq.s32.totalorder %v1217, 15
      %v1379 = vrot.slane %v769, 1
      %v1380 = vrot.slane %v770, 1
      %v1381 = vrot.slane %v771, 1
      %v1382 = vrot.slane %v772, 1
      %v1383 = vrot.slane %v773, 1
      %v1384 = vrot.slane %v774, 1
      %v1385 = vrot.slane %v775, 1
      %v1386 = vrot.slane %v776, 1
      %v1387 = vrot.slane %v777, 1
      %v1388 = vrot.slane %v778, 1
      %v1389 = vrot.slane %v779, 1
      %v1390 = vrot.slane %v780, 1
      %v1391 = vrot.slane %v781, 1
      %v1392 = vrot.slane %v782, 1
      %v1393 = vrot.slane %v783, 1
      %v1394 = vrot.slane %v784, 1
      %v1395 = vrot.slane %v785, 1
      %v1396 = vrot.slane %v786, 1
      %v1397 = vrot.slane %v787, 1
      %v1398 = vrot.slane %v788, 1
      %v1399 = vrot.slane %v789, 1
      %v1400 = vrot.slane %v790, 1
      %v1401 = vrot.slane %v791, 1
      %v1402 = vrot.slane %v792, 1
      %v1403 = vrot.slane %v793, 1
      %v1404 = vrot.slane %v794, 1
      %v1405 = vrot.slane %v795, 1
      %v1406 = vrot.slane %v796, 1
      %v1407 = vrot.slane %v797, 1
      %v1408 = vrot.slane %v798, 1
      %v1409 = vrot.slane %v799, 1
      %v1410 = vrot.slane %v800, 1
      %vm1411 = vcmp.lt.s32.totalorder %v802, 7
      %v1412 = vsel %vm1411, %v1409, %v1410
      %v1413 = vsel %vm1411, %v1408, %v1409
      %v1414 = vsel %vm1411, %v1407, %v1408
      %v1415 = vsel %vm1411, %v1406, %v1407
      %v1416 = vsel %vm1411, %v1405, %v1406
      %v1417 = vsel %vm1411, %v1404, %v1405
      %v1418 = vsel %vm1411, %v1403, %v1404
      %v1419 = vsel %vm1411, %v1402, %v1403
      %v1420 = vsel %vm1411, %v1401, %v1402
      %v1421 = vsel %vm1411, %v1400, %v1401
      %v1422 = vsel %vm1411, %v1399, %v1400
      %v1423 = vsel %vm1411, %v1398, %v1399
      %v1424 = vsel %vm1411, %v1397, %v1398
      %v1425 = vsel %vm1411, %v1396, %v1397
      %v1426 = vsel %vm1411, %v1395, %v1396
      %v1427 = vsel %vm1411, %v1394, %v1395
      %v1428 = vsel %vm1411, %v1393, %v1394
      %v1429 = vsel %vm1411, %v1392, %v1393
      %v1430 = vsel %vm1411, %v1391, %v1392
      %v1431 = vsel %vm1411, %v1390, %v1391
      %v1432 = vsel %vm1411, %v1389, %v1390
      %v1433 = vsel %vm1411, %v1388, %v1389
      %v1434 = vsel %vm1411, %v1387, %v1388
      %v1435 = vsel %vm1411, %v1386, %v1387
      %v1436 = vsel %vm1411, %v1385, %v1386
      %v1437 = vsel %vm1411, %v1384, %v1385
      %v1438 = vsel %vm1411, %v1383, %v1384
      %v1439 = vsel %vm1411, %v1382, %v1383
      %v1440 = vsel %vm1411, %v1381, %v1382
      %v1441 = vsel %vm1411, %v1380, %v1381
      %v1442 = vsel %vm1411, %v1379, %v1380
      %v1443 = vsel %vm1411, %v1410, %v1379
      %v1444 = vsel %vm1347, %v769, %v1442
      %v1445 = vsel %vm1348, %v770, %v1441
      %v1446 = vsel %vm1349, %v771, %v1440
      %v1447 = vsel %vm1350, %v772, %v1439
      %v1448 = vsel %vm1351, %v773, %v1438
      %v1449 = vsel %vm1352, %v774, %v1437
      %v1450 = vsel %vm1353, %v775, %v1436
      %v1451 = vsel %vm1354, %v776, %v1435
      %v1452 = vsel %vm1355, %v777, %v1434
      %v1453 = vsel %vm1356, %v778, %v1433
      %v1454 = vsel %vm1357, %v779, %v1432
      %v1455 = vsel %vm1358, %v780, %v1431
      %v1456 = vsel %vm1359, %v781, %v1430
      %v1457 = vsel %vm1360, %v782, %v1429
      %v1458 = vsel %vm1361, %v783, %v1428
      %v1459 = vsel %vm1362, %v784, %v1427
      %v1460 = vsel %vm1363, %v785, %v1426
      %v1461 = vsel %vm1364, %v786, %v1425
      %v1462 = vsel %vm1365, %v787, %v1424
      %v1463 = vsel %vm1366, %v788, %v1423
      %v1464 = vsel %vm1367, %v789, %v1422
      %v1465 = vsel %vm1368, %v790, %v1421
      %v1466 = vsel %vm1369, %v791, %v1420
      %v1467 = vsel %vm1370, %v792, %v1419
      %v1468 = vsel %vm1371, %v793, %v1418
      %v1469 = vsel %vm1372, %v794, %v1417
      %v1470 = vsel %vm1373, %v795, %v1416
      %v1471 = vsel %vm1374, %v796, %v1415
      %v1472 = vsel %vm1375, %v797, %v1414
      %v1473 = vsel %vm1376, %v798, %v1413
      %v1474 = vsel %vm1377, %v799, %v1412
      %v1475 = vsel %vm1378, %v800, %v1443
      %v1476 = vlaneseq
      %v1477 = vand.u32 %v1476, 127
      %vm1478 = vcmp.lt.s32.totalorder %v1477, 4
      %vm1479 = vcmp.ge.s32.totalorder %v1477, 8
      %vm1480 = vcmp.lt.s32.totalorder %v1477, 12
      %vm1481 = vmand %vm1479, %vm1480
      %vm1482 = vmor %vm1478, %vm1481
      %v1483 = vmul.f32 %v769, 0.75
      %v1484 = vmul.f32 %v770, 0.75
      %v1485 = vmul.f32 %v771, 0.75
      %v1486 = vmul.f32 %v772, 0.75
      %v1487 = vmul.f32 %v773, 0.75
      %v1488 = vmul.f32 %v774, 0.75
      %v1489 = vmul.f32 %v775, 0.75
      %v1490 = vmul.f32 %v776, 0.75
      %v1491 = vmul.f32 %v777, 0.75
      %v1492 = vmul.f32 %v778, 0.75
      %v1493 = vmul.f32 %v779, 0.75
      %v1494 = vmul.f32 %v780, 0.75
      %v1495 = vmul.f32 %v781, 0.75
      %v1496 = vmul.f32 %v782, 0.75
      %v1497 = vmul.f32 %v783, 0.75
      %v1498 = vmul.f32 %v784, 0.75
      %v1499 = vmul.f32 %v785, 0.75
      %v1500 = vmul.f32 %v786, 0.75
      %v1501 = vmul.f32 %v787, 0.75
      %v1502 = vmul.f32 %v788, 0.75
      %v1503 = vmul.f32 %v789, 0.75
      %v1504 = vmul.f32 %v790, 0.75
      %v1505 = vmul.f32 %v791, 0.75
      %v1506 = vmul.f32 %v792, 0.75
      %v1507 = vmul.f32 %v793, 0.75
      %v1508 = vmul.f32 %v794, 0.75
      %v1509 = vmul.f32 %v795, 0.75
      %v1510 = vmul.f32 %v796, 0.75
      %v1511 = vmul.f32 %v797, 0.75
      %v1512 = vmul.f32 %v798, 0.75
      %v1513 = vmul.f32 %v799, 0.75
      %v1514 = vmul.f32 %v800, 0.75
      %v1515 = vsel %vm1482, %v1315, %v1444
      %v1516 = vsel %vm1482, %v1316, %v1445
      %v1517 = vsel %vm1482, %v1317, %v1446
      %v1518 = vsel %vm1482, %v1318, %v1447
      %v1519 = vsel %vm1482, %v1319, %v1448
      %v1520 = vsel %vm1482, %v1320, %v1449
      %v1521 = vsel %vm1482, %v1321, %v1450
      %v1522 = vsel %vm1482, %v1322, %v1451
      %v1523 = vsel %vm1482, %v1323, %v1452
      %v1524 = vsel %vm1482, %v1324, %v1453
      %v1525 = vsel %vm1482, %v1325, %v1454
      %v1526 = vsel %vm1482, %v1326, %v1455
      %v1527 = vsel %vm1482, %v1327, %v1456
      %v1528 = vsel %vm1482, %v1328, %v1457
      %v1529 = vsel %vm1482, %v1329, %v1458
      %v1530 = vsel %vm1482, %v1330, %v1459
      %v1531 = vsel %vm1482, %v1331, %v1460
      %v1532 = vsel %vm1482, %v1332, %v1461
      %v1533 = vsel %vm1482, %v1333, %v1462
      %v1534 = vsel %vm1482, %v1334, %v1463
      %v1535 = vsel %vm1482, %v1335, %v1464
      %v1536 = vsel %vm1482, %v1336, %v1465
      %v1537 = vsel %vm1482, %v1337, %v1466
      %v1538 = vsel %vm1482, %v1338, %v1467
      %v1539 = vsel %vm1482, %v1339, %v1468
      %v1540 = vsel %vm1482, %v1340, %v1469
      %v1541 = vsel %vm1482, %v1341, %v1470
      %v1542 = vsel %vm1482, %v1342, %v1471
      %v1543 = vsel %vm1482, %v1343, %v1472
      %v1544 = vsel %vm1482, %v1344, %v1473
      %v1545 = vsel %vm1482, %v1345, %v1474
      %v1546 = vsel %vm1482, %v1346, %v1475
      %v1547 = vmul.f32 %v1515, 0.25
      %v1548 = vmul.f32 %v1516, 0.25
      %v1549 = vmul.f32 %v1517, 0.25
      %v1550 = vmul.f32 %v1518, 0.25
      %v1551 = vmul.f32 %v1519, 0.25
      %v1552 = vmul.f32 %v1520, 0.25
      %v1553 = vmul.f32 %v1521, 0.25
      %v1554 = vmul.f32 %v1522, 0.25
      %v1555 = vmul.f32 %v1523, 0.25
      %v1556 = vmul.f32 %v1524, 0.25
      %v1557 = vmul.f32 %v1525, 0.25
      %v1558 = vmul.f32 %v1526, 0.25
      %v1559 = vmul.f32 %v1527, 0.25
      %v1560 = vmul.f32 %v1528, 0.25
      %v1561 = vmul.f32 %v1529, 0.25
      %v1562 = vmul.f32 %v1530, 0.25
      %v1563 = vmul.f32 %v1531, 0.25
      %v1564 = vmul.f32 %v1532, 0.25
      %v1565 = vmul.f32 %v1533, 0.25
      %v1566 = vmul.f32 %v1534, 0.25
      %v1567 = vmul.f32 %v1535, 0.25
      %v1568 = vmul.f32 %v1536, 0.25
      %v1569 = vmul.f32 %v1537, 0.25
      %v1570 = vmul.f32 %v1538, 0.25
      %v1571 = vmul.f32 %v1539, 0.25
      %v1572 = vmul.f32 %v1540, 0.25
      %v1573 = vmul.f32 %v1541, 0.25
      %v1574 = vmul.f32 %v1542, 0.25
      %v1575 = vmul.f32 %v1543, 0.25
      %v1576 = vmul.f32 %v1544, 0.25
      %v1577 = vmul.f32 %v1545, 0.25
      %v1578 = vmul.f32 %v1546, 0.25
      %v1579 = vadd.f32 %v1483, %v1547
      %v1580 = vadd.f32 %v1484, %v1548
      %v1581 = vadd.f32 %v1485, %v1549
      %v1582 = vadd.f32 %v1486, %v1550
      %v1583 = vadd.f32 %v1487, %v1551
      %v1584 = vadd.f32 %v1488, %v1552
      %v1585 = vadd.f32 %v1489, %v1553
      %v1586 = vadd.f32 %v1490, %v1554
      %v1587 = vadd.f32 %v1491, %v1555
      %v1588 = vadd.f32 %v1492, %v1556
      %v1589 = vadd.f32 %v1493, %v1557
      %v1590 = vadd.f32 %v1494, %v1558
      %v1591 = vadd.f32 %v1495, %v1559
      %v1592 = vadd.f32 %v1496, %v1560
      %v1593 = vadd.f32 %v1497, %v1561
      %v1594 = vadd.f32 %v1498, %v1562
      %v1595 = vadd.f32 %v1499, %v1563
      %v1596 = vadd.f32 %v1500, %v1564
      %v1597 = vadd.f32 %v1501, %v1565
      %v1598 = vadd.f32 %v1502, %v1566
      %v1599 = vadd.f32 %v1503, %v1567
      %v1600 = vadd.f32 %v1504, %v1568
      %v1601 = vadd.f32 %v1505, %v1569
      %v1602 = vadd.f32 %v1506, %v1570
      %v1603 = vadd.f32 %v1507, %v1571
      %v1604 = vadd.f32 %v1508, %v1572
      %v1605 = vadd.f32 %v1509, %v1573
      %v1606 = vadd.f32 %v1510, %v1574
      %v1607 = vadd.f32 %v1511, %v1575
      %v1608 = vadd.f32 %v1512, %v1576
      %v1609 = vadd.f32 %v1513, %v1577
      %v1610 = vadd.f32 %v1514, %v1578
      %v1611 = vld [vmem:[#allocation2] sm:$0xff]
      %v1612 = vld [vmem:[#allocation2 + $0x8] sm:$0xff]
      %v1613 = vld [vmem:[#allocation2 + $0x10] sm:$0xff]
      %v1614 = vld [vmem:[#allocation2 + $0x18] sm:$0xff]
      %v1615 = vld [vmem:[#allocation2 + $0x20] sm:$0xff]
      %v1616 = vld [vmem:[#allocation2 + $0x28] sm:$0xff]
      %v1617 = vld [vmem:[#allocation2 + $0x30] sm:$0xff]
      %v1618 = vld [vmem:[#allocation2 + $0x38] sm:$0xff]
      %v1619 = vld [vmem:[#allocation2 + $0x40] sm:$0xff]
      %v1620 = vld [vmem:[#allocation2 + $0x48] sm:$0xff]
      %v1621 = vld [vmem:[#allocation2 + $0x50] sm:$0xff]
      %v1622 = vld [vmem:[#allocation2 + $0x58] sm:$0xff]
      %v1623 = vld [vmem:[#allocation2 + $0x60] sm:$0xff]
      %v1624 = vld [vmem:[#allocation2 + $0x68] sm:$0xff]
      %v1625 = vld [vmem:[#allocation2 + $0x70] sm:$0xff]
      %v1626 = vld [vmem:[#allocation2 + $0x78] sm:$0xff]
      %v1627 = vld [vmem:[#allocation2 + $0x80] sm:$0xff]
      %v1628 = vld [vmem:[#allocation2 + $0x88] sm:$0xff]
      %v1629 = vld [vmem:[#allocation2 + $0x90] sm:$0xff]
      %v1630 = vld [vmem:[#allocation2 + $0x98] sm:$0xff]
      %v1631 = vld [vmem:[#allocation2 + $0xa0] sm:$0xff]
      %v1632 = vld [vmem:[#allocation2 + $0xa8] sm:$0xff]
      %v1633 = vld [vmem:[#allocation2 + $0xb0] sm:$0xff]
      %v1634 = vld [vmem:[#allocation2 + $0xb8] sm:$0xff]
      %v1635 = vld [vmem:[#allocation2 + $0xc0] sm:$0xff]
      %v1636 = vld [vmem:[#allocation2 + $0xc8] sm:$0xff]
      %v1637 = vld [vmem:[#allocation2 + $0xd0] sm:$0xff]
      %v1638 = vld [vmem:[#allocation2 + $0xd8] sm:$0xff]
      %v1639 = vld [vmem:[#allocation2 + $0xe0] sm:$0xff]
      %v1640 = vld [vmem:[#allocation2 + $0xe8] sm:$0xff]
      %v1641 = vld [vmem:[#allocation2 + $0xf0] sm:$0xff]
      %v1642 = vld [vmem:[#allocation2 + $0xf8] sm:$0xff]
      %v1643 = vmul.f32 %v1611, 0.5
      %v1644 = vmul.f32 %v1612, 0.5
      %v1645 = vmul.f32 %v1613, 0.5
      %v1646 = vmul.f32 %v1614, 0.5
      %v1647 = vmul.f32 %v1615, 0.5
      %v1648 = vmul.f32 %v1616, 0.5
      %v1649 = vmul.f32 %v1617, 0.5
      %v1650 = vmul.f32 %v1618, 0.5
      %v1651 = vmul.f32 %v1619, 0.5
      %v1652 = vmul.f32 %v1620, 0.5
      %v1653 = vmul.f32 %v1621, 0.5
      %v1654 = vmul.f32 %v1622, 0.5
      %v1655 = vmul.f32 %v1623, 0.5
      %v1656 = vmul.f32 %v1624, 0.5
      %v1657 = vmul.f32 %v1625, 0.5
      %v1658 = vmul.f32 %v1626, 0.5
      %v1659 = vmul.f32 %v1627, 0.5
      %v1660 = vmul.f32 %v1628, 0.5
      %v1661 = vmul.f32 %v1629, 0.5
      %v1662 = vmul.f32 %v1630, 0.5
      %v1663 = vmul.f32 %v1631, 0.5
      %v1664 = vmul.f32 %v1632, 0.5
      %v1665 = vmul.f32 %v1633, 0.5
      %v1666 = vmul.f32 %v1634, 0.5
      %v1667 = vmul.f32 %v1635, 0.5
      %v1668 = vmul.f32 %v1636, 0.5
      %v1669 = vmul.f32 %v1637, 0.5
      %v1670 = vmul.f32 %v1638, 0.5
      %v1671 = vmul.f32 %v1639, 0.5
      %v1672 = vmul.f32 %v1640, 0.5
      %v1673 = vmul.f32 %v1641, 0.5
      %v1674 = vmul.f32 %v1642, 0.5
      %v1675 = vadd.f32 %v1643, %v1579
      %v1676 = vadd.f32 %v1644, %v1580
      %v1677 = vadd.f32 %v1645, %v1581
      %v1678 = vadd.f32 %v1646, %v1582
      %v1679 = vadd.f32 %v1647, %v1583
      %v1680 = vadd.f32 %v1648, %v1584
      %v1681 = vadd.f32 %v1649, %v1585
      %v1682 = vadd.f32 %v1650, %v1586
      %v1683 = vadd.f32 %v1651, %v1587
      %v1684 = vadd.f32 %v1652, %v1588
      %v1685 = vadd.f32 %v1653, %v1589
      %v1686 = vadd.f32 %v1654, %v1590
      %v1687 = vadd.f32 %v1655, %v1591
      %v1688 = vadd.f32 %v1656, %v1592
      %v1689 = vadd.f32 %v1657, %v1593
      %v1690 = vadd.f32 %v1658, %v1594
      %v1691 = vadd.f32 %v1659, %v1595
      %v1692 = vadd.f32 %v1660, %v1596
      %v1693 = vadd.f32 %v1661, %v1597
      %v1694 = vadd.f32 %v1662, %v1598
      %v1695 = vadd.f32 %v1663, %v1599
      %v1696 = vadd.f32 %v1664, %v1600
      %v1697 = vadd.f32 %v1665, %v1601
      %v1698 = vadd.f32 %v1666, %v1602
      %v1699 = vadd.f32 %v1667, %v1603
      %v1700 = vadd.f32 %v1668, %v1604
      %v1701 = vadd.f32 %v1669, %v1605
      %v1702 = vadd.f32 %v1670, %v1606
      %v1703 = vadd.f32 %v1671, %v1607
      %v1704 = vadd.f32 %v1672, %v1608
      %v1705 = vadd.f32 %v1673, %v1609
      %v1706 = vadd.f32 %v1674, %v1610
      %vm1707 = vcmp.ge.f32.partialorder %v1675, 0.15
      %vm1708 = vcmp.ge.f32.partialorder %v1676, 0.15
      %vm1709 = vcmp.ge.f32.partialorder %v1677, 0.15
      %vm1710 = vcmp.ge.f32.partialorder %v1678, 0.15
      %vm1711 = vcmp.ge.f32.partialorder %v1679, 0.15
      %vm1712 = vcmp.ge.f32.partialorder %v1680, 0.15
      %vm1713 = vcmp.ge.f32.partialorder %v1681, 0.15
      %vm1714 = vcmp.ge.f32.partialorder %v1682, 0.15
      %vm1715 = vcmp.ge.f32.partialorder %v1683, 0.15
      %vm1716 = vcmp.ge.f32.partialorder %v1684, 0.15
      %vm1717 = vcmp.ge.f32.partialorder %v1685, 0.15
      %vm1718 = vcmp.ge.f32.partialorder %v1686, 0.15
      %vm1719 = vcmp.ge.f32.partialorder %v1687, 0.15
      %vm1720 = vcmp.ge.f32.partialorder %v1688, 0.15
      %vm1721 = vcmp.ge.f32.partialorder %v1689, 0.15
      %vm1722 = vcmp.ge.f32.partialorder %v1690, 0.15
      %vm1723 = vcmp.ge.f32.partialorder %v1691, 0.15
      %vm1724 = vcmp.ge.f32.partialorder %v1692, 0.15
      %vm1725 = vcmp.ge.f32.partialorder %v1693, 0.15
      %vm1726 = vcmp.ge.f32.partialorder %v1694, 0.15
      %vm1727 = vcmp.ge.f32.partialorder %v1695, 0.15
      %vm1728 = vcmp.ge.f32.partialorder %v1696, 0.15
      %vm1729 = vcmp.ge.f32.partialorder %v1697, 0.15
      %vm1730 = vcmp.ge.f32.partialorder %v1698, 0.15
      %vm1731 = vcmp.ge.f32.partialorder %v1699, 0.15
      %vm1732 = vcmp.ge.f32.partialorder %v1700, 0.15
      %vm1733 = vcmp.ge.f32.partialorder %v1701, 0.15
      %vm1734 = vcmp.ge.f32.partialorder %v1702, 0.15
      %vm1735 = vcmp.ge.f32.partialorder %v1703, 0.15
      %vm1736 = vcmp.ge.f32.partialorder %v1704, 0.15
      %vm1737 = vcmp.ge.f32.partialorder %v1705, 0.15
      %vm1738 = vcmp.ge.f32.partialorder %v1706, 0.15
      %v1739 = vsel %vm1707, 1, 0
      %v1740 = vsel %vm1708, 1, 0
      %v1741 = vsel %vm1709, 1, 0
      %v1742 = vsel %vm1710, 1, 0
      %v1743 = vsel %vm1711, 1, 0
      %v1744 = vsel %vm1712, 1, 0
      %v1745 = vsel %vm1713, 1, 0
      %v1746 = vsel %vm1714, 1, 0
      %v1747 = vsel %vm1715, 1, 0
      %v1748 = vsel %vm1716, 1, 0
      %v1749 = vsel %vm1717, 1, 0
      %v1750 = vsel %vm1718, 1, 0
      %v1751 = vsel %vm1719, 1, 0
      %v1752 = vsel %vm1720, 1, 0
      %v1753 = vsel %vm1721, 1, 0
      %v1754 = vsel %vm1722, 1, 0
      %v1755 = vsel %vm1723, 1, 0
      %v1756 = vsel %vm1724, 1, 0
      %v1757 = vsel %vm1725, 1, 0
      %v1758 = vsel %vm1726, 1, 0
      %v1759 = vsel %vm1727, 1, 0
      %v1760 = vsel %vm1728, 1, 0
      %v1761 = vsel %vm1729, 1, 0
      %v1762 = vsel %vm1730, 1, 0
      %v1763 = vsel %vm1731, 1, 0
      %v1764 = vsel %vm1732, 1, 0
      %v1765 = vsel %vm1733, 1, 0
      %v1766 = vsel %vm1734, 1, 0
      %v1767 = vsel %vm1735, 1, 0
      %v1768 = vsel %vm1736, 1, 0
      %v1769 = vsel %vm1737, 1, 0
      %v1770 = vsel %vm1738, 1, 0
      %v1771 = vcvt.s32.f32 %v1739
      %v1772 = vcvt.s32.f32 %v1740
      %v1773 = vcvt.s32.f32 %v1741
      %v1774 = vcvt.s32.f32 %v1742
      %v1775 = vcvt.s32.f32 %v1743
      %v1776 = vcvt.s32.f32 %v1744
      %v1777 = vcvt.s32.f32 %v1745
      %v1778 = vcvt.s32.f32 %v1746
      %v1779 = vcvt.s32.f32 %v1747
      %v1780 = vcvt.s32.f32 %v1748
      %v1781 = vcvt.s32.f32 %v1749
      %v1782 = vcvt.s32.f32 %v1750
      %v1783 = vcvt.s32.f32 %v1751
      %v1784 = vcvt.s32.f32 %v1752
      %v1785 = vcvt.s32.f32 %v1753
      %v1786 = vcvt.s32.f32 %v1754
      %v1787 = vcvt.s32.f32 %v1755
      %v1788 = vcvt.s32.f32 %v1756
      %v1789 = vcvt.s32.f32 %v1757
      %v1790 = vcvt.s32.f32 %v1758
      %v1791 = vcvt.s32.f32 %v1759
      %v1792 = vcvt.s32.f32 %v1760
      %v1793 = vcvt.s32.f32 %v1761
      %v1794 = vcvt.s32.f32 %v1762
      %v1795 = vcvt.s32.f32 %v1763
      %v1796 = vcvt.s32.f32 %v1764
      %v1797 = vcvt.s32.f32 %v1765
      %v1798 = vcvt.s32.f32 %v1766
      %v1799 = vcvt.s32.f32 %v1767
      %v1800 = vcvt.s32.f32 %v1768
      %v1801 = vcvt.s32.f32 %v1769
      %v1802 = vcvt.s32.f32 %v1770
      %v1803 = vsub.f32 1.0, %v1771
      %v1804 = vsub.f32 1.0, %v1772
      %v1805 = vsub.f32 1.0, %v1773
      %v1806 = vsub.f32 1.0, %v1774
      %v1807 = vsub.f32 1.0, %v1775
      %v1808 = vsub.f32 1.0, %v1776
      %v1809 = vsub.f32 1.0, %v1777
      %v1810 = vsub.f32 1.0, %v1778
      %v1811 = vsub.f32 1.0, %v1779
      %v1812 = vsub.f32 1.0, %v1780
      %v1813 = vsub.f32 1.0, %v1781
      %v1814 = vsub.f32 1.0, %v1782
      %v1815 = vsub.f32 1.0, %v1783
      %v1816 = vsub.f32 1.0, %v1784
      %v1817 = vsub.f32 1.0, %v1785
      %v1818 = vsub.f32 1.0, %v1786
      %v1819 = vsub.f32 1.0, %v1787
      %v1820 = vsub.f32 1.0, %v1788
      %v1821 = vsub.f32 1.0, %v1789
      %v1822 = vsub.f32 1.0, %v1790
      %v1823 = vsub.f32 1.0, %v1791
      %v1824 = vsub.f32 1.0, %v1792
      %v1825 = vsub.f32 1.0, %v1793
      %v1826 = vsub.f32 1.0, %v1794
      %v1827 = vsub.f32 1.0, %v1795
      %v1828 = vsub.f32 1.0, %v1796
      %v1829 = vsub.f32 1.0, %v1797
      %v1830 = vsub.f32 1.0, %v1798
      %v1831 = vsub.f32 1.0, %v1799
      %v1832 = vsub.f32 1.0, %v1800
      %v1833 = vsub.f32 1.0, %v1801
      %v1834 = vsub.f32 1.0, %v1802
      %v1835 = vmul.f32 %v1675, %v1803
      %v1836 = vmul.f32 %v1676, %v1804
      %v1837 = vmul.f32 %v1677, %v1805
      %v1838 = vmul.f32 %v1678, %v1806
      %v1839 = vmul.f32 %v1679, %v1807
      %v1840 = vmul.f32 %v1680, %v1808
      %v1841 = vmul.f32 %v1681, %v1809
      %v1842 = vmul.f32 %v1682, %v1810
      %v1843 = vmul.f32 %v1683, %v1811
      %v1844 = vmul.f32 %v1684, %v1812
      %v1845 = vmul.f32 %v1685, %v1813
      %v1846 = vmul.f32 %v1686, %v1814
      %v1847 = vmul.f32 %v1687, %v1815
      %v1848 = vmul.f32 %v1688, %v1816
      %v1849 = vmul.f32 %v1689, %v1817
      %v1850 = vmul.f32 %v1690, %v1818
      %v1851 = vmul.f32 %v1691, %v1819
      %v1852 = vmul.f32 %v1692, %v1820
      %v1853 = vmul.f32 %v1693, %v1821
      %v1854 = vmul.f32 %v1694, %v1822
      %v1855 = vmul.f32 %v1695, %v1823
      %v1856 = vmul.f32 %v1696, %v1824
      %v1857 = vmul.f32 %v1697, %v1825
      %v1858 = vmul.f32 %v1698, %v1826
      %v1859 = vmul.f32 %v1699, %v1827
      %v1860 = vmul.f32 %v1700, %v1828
      %v1861 = vmul.f32 %v1701, %v1829
      %v1862 = vmul.f32 %v1702, %v1830
      %v1863 = vmul.f32 %v1703, %v1831
      %v1864 = vmul.f32 %v1704, %v1832
      %v1865 = vmul.f32 %v1705, %v1833
      %v1866 = vmul.f32 %v1706, %v1834
      %vm1867 = vcmask 130048
      %1868 = vst.msk [vmem:[#allocation2] sm:$0xff] %vm1867, %v1835
      %1869 = vst.msk [vmem:[#allocation2 + $0x8] sm:$0xff] %vm1867, %v1836
      %1870 = vst.msk [vmem:[#allocation2 + $0x10] sm:$0xff] %vm1867, %v1837
      %1871 = vst.msk [vmem:[#allocation2 + $0x18] sm:$0xff] %vm1867, %v1838
      %1872 = vst.msk [vmem:[#allocation2 + $0x20] sm:$0xff] %vm1867, %v1839
      %1873 = vst.msk [vmem:[#allocation2 + $0x28] sm:$0xff] %vm1867, %v1840
      %1874 = vst.msk [vmem:[#allocation2 + $0x30] sm:$0xff] %vm1867, %v1841
      %1875 = vst.msk [vmem:[#allocation2 + $0x38] sm:$0xff] %vm1867, %v1842
      %1876 = vst.msk [vmem:[#allocation2 + $0x40] sm:$0xff] %vm1867, %v1843
      %1877 = vst.msk [vmem:[#allocation2 + $0x48] sm:$0xff] %vm1867, %v1844
      %1878 = vst.msk [vmem:[#allocation2 + $0x50] sm:$0xff] %vm1867, %v1845
      %1879 = vst.msk [vmem:[#allocation2 + $0x58] sm:$0xff] %vm1867, %v1846
      %1880 = vst.msk [vmem:[#allocation2 + $0x60] sm:$0xff] %vm1867, %v1847
      %1881 = vst.msk [vmem:[#allocation2 + $0x68] sm:$0xff] %vm1867, %v1848
      %1882 = vst.msk [vmem:[#allocation2 + $0x70] sm:$0xff] %vm1867, %v1849
      %1883 = vst.msk [vmem:[#allocation2 + $0x78] sm:$0xff] %vm1867, %v1850
      %1884 = vst.msk [vmem:[#allocation2 + $0x80] sm:$0xff] %vm1867, %v1851
      %1885 = vst.msk [vmem:[#allocation2 + $0x88] sm:$0xff] %vm1867, %v1852
      %1886 = vst.msk [vmem:[#allocation2 + $0x90] sm:$0xff] %vm1867, %v1853
      %1887 = vst.msk [vmem:[#allocation2 + $0x98] sm:$0xff] %vm1867, %v1854
      %1888 = vst.msk [vmem:[#allocation2 + $0xa0] sm:$0xff] %vm1867, %v1855
      %1889 = vst.msk [vmem:[#allocation2 + $0xa8] sm:$0xff] %vm1867, %v1856
      %1890 = vst.msk [vmem:[#allocation2 + $0xb0] sm:$0xff] %vm1867, %v1857
      %1891 = vst.msk [vmem:[#allocation2 + $0xb8] sm:$0xff] %vm1867, %v1858
      %1892 = vst.msk [vmem:[#allocation2 + $0xc0] sm:$0xff] %vm1867, %v1859
      %1893 = vst.msk [vmem:[#allocation2 + $0xc8] sm:$0xff] %vm1867, %v1860
      %1894 = vst.msk [vmem:[#allocation2 + $0xd0] sm:$0xff] %vm1867, %v1861
      %1895 = vst.msk [vmem:[#allocation2 + $0xd8] sm:$0xff] %vm1867, %v1862
      %1896 = vst.msk [vmem:[#allocation2 + $0xe0] sm:$0xff] %vm1867, %v1863
      %1897 = vst.msk [vmem:[#allocation2 + $0xe8] sm:$0xff] %vm1867, %v1864
      %1898 = vst.msk [vmem:[#allocation2 + $0xf0] sm:$0xff] %vm1867, %v1865
      %1899 = vst.msk [vmem:[#allocation2 + $0xf8] sm:$0xff] %vm1867, %v1866
      %v1900 = vpack.c.bf16 %v1772, %v1771
      %v1901 = vpack.c.bf16 %v1774, %v1773
      %v1902 = vpack.c.bf16 %v1776, %v1775
      %v1903 = vpack.c.bf16 %v1778, %v1777
      %v1904 = vpack.c.bf16 %v1780, %v1779
      %v1905 = vpack.c.bf16 %v1782, %v1781
      %v1906 = vpack.c.bf16 %v1784, %v1783
      %v1907 = vpack.c.bf16 %v1786, %v1785
      %v1908 = vpack.c.bf16 %v1788, %v1787
      %v1909 = vpack.c.bf16 %v1790, %v1789
      %v1910 = vpack.c.bf16 %v1792, %v1791
      %v1911 = vpack.c.bf16 %v1794, %v1793
      %v1912 = vpack.c.bf16 %v1796, %v1795
      %v1913 = vpack.c.bf16 %v1798, %v1797
      %v1914 = vpack.c.bf16 %v1800, %v1799
      %v1915 = vpack.c.bf16 %v1802, %v1801
      %v1932 = vunpack.c.l.b16 %v1900
      %v1933 = vunpack.c.h.b16 %v1900
      %v1934 = vunpack.c.l.b16 %v1901
      %v1935 = vunpack.c.h.b16 %v1901
      %v1936 = vunpack.c.l.b16 %v1902
      %v1937 = vunpack.c.h.b16 %v1902
      %v1938 = vunpack.c.l.b16 %v1903
      %v1939 = vunpack.c.h.b16 %v1903
      %v1940 = vunpack.c.l.b16 %v1904
      %v1941 = vunpack.c.h.b16 %v1904
      %v1942 = vunpack.c.l.b16 %v1905
      %v1943 = vunpack.c.h.b16 %v1905
      %v1944 = vunpack.c.l.b16 %v1906
      %v1945 = vunpack.c.h.b16 %v1906
      %v1946 = vunpack.c.l.b16 %v1907
      %v1947 = vunpack.c.h.b16 %v1907
      %v1948 = vunpack.c.l.b16 %v1908
      %v1949 = vunpack.c.h.b16 %v1908
      %v1950 = vunpack.c.l.b16 %v1909
      %v1951 = vunpack.c.h.b16 %v1909
      %v1952 = vunpack.c.l.b16 %v1910
      %v1953 = vunpack.c.h.b16 %v1910
      %v1954 = vunpack.c.l.b16 %v1911
      %v1955 = vunpack.c.h.b16 %v1911
      %v1956 = vunpack.c.l.b16 %v1912
      %v1957 = vunpack.c.h.b16 %v1912
      %v1958 = vunpack.c.l.b16 %v1913
      %v1959 = vunpack.c.h.b16 %v1913
      %v1960 = vunpack.c.l.b16 %v1914
      %v1961 = vunpack.c.h.b16 %v1914
      %v1962 = vunpack.c.l.b16 %v1915
      %v1963 = vunpack.c.h.b16 %v1915
      %v1964 = vpack.c.b16 %v1932, %v1932
      %v1965 = vpack.c.b16 %v1933, %v1933
      %v1966 = vpack.c.b16 %v1934, %v1934
      %v1967 = vpack.c.b16 %v1935, %v1935
      %v1968 = vpack.c.b16 %v1936, %v1936
      %v1969 = vpack.c.b16 %v1937, %v1937
      %v1970 = vpack.c.b16 %v1938, %v1938
      %v1971 = vpack.c.b16 %v1939, %v1939
      %v1972 = vpack.c.b16 %v1940, %v1940
      %v1973 = vpack.c.b16 %v1941, %v1941
      %v1974 = vpack.c.b16 %v1942, %v1942
      %v1975 = vpack.c.b16 %v1943, %v1943
      %v1976 = vpack.c.b16 %v1944, %v1944
      %v1977 = vpack.c.b16 %v1945, %v1945
      %v1978 = vpack.c.b16 %v1946, %v1946
      %v1979 = vpack.c.b16 %v1947, %v1947
      %v1980 = vpack.c.b16 %v1948, %v1948
      %v1981 = vpack.c.b16 %v1949, %v1949
      %v1982 = vpack.c.b16 %v1950, %v1950
      %v1983 = vpack.c.b16 %v1951, %v1951
      %v1984 = vpack.c.b16 %v1952, %v1952
      %v1985 = vpack.c.b16 %v1953, %v1953
      %v1986 = vpack.c.b16 %v1954, %v1954
      %v1987 = vpack.c.b16 %v1955, %v1955
      %v1988 = vpack.c.b16 %v1956, %v1956
      %v1989 = vpack.c.b16 %v1957, %v1957
      %v1990 = vpack.c.b16 %v1958, %v1958
      %v1991 = vpack.c.b16 %v1959, %v1959
      %v1992 = vpack.c.b16 %v1960, %v1960
      %v1993 = vpack.c.b16 %v1961, %v1961
      %v1994 = vpack.c.b16 %v1962, %v1962
      %v1995 = vpack.c.b16 %v1963, %v1963
      %vm2028 = vcmask 125952
      %2029 = vst.msk [vmem:[%s152] sm:$0xf] %vm2028, %v1964
      %2030 = vst.msk [vmem:[%s152 + $0x4] sm:$0xf] %vm2028, %v1965
      %2031 = vst.msk [vmem:[%s152 + $0x8] sm:$0xf] %vm2028, %v1966
      %2032 = vst.msk [vmem:[%s152 + $0xc] sm:$0xf] %vm2028, %v1967
      %2033 = vst.msk [vmem:[%s152 + $0x10] sm:$0xf] %vm2028, %v1968
      %2034 = vst.msk [vmem:[%s152 + $0x14] sm:$0xf] %vm2028, %v1969
      %2035 = vst.msk [vmem:[%s152 + $0x18] sm:$0xf] %vm2028, %v1970
      %2036 = vst.msk [vmem:[%s152 + $0x1c] sm:$0xf] %vm2028, %v1971
      %2037 = vst.msk [vmem:[%s152 + $0x20] sm:$0xf] %vm2028, %v1972
      %2038 = vst.msk [vmem:[%s152 + $0x24] sm:$0xf] %vm2028, %v1973
      %2039 = vst.msk [vmem:[%s152 + $0x28] sm:$0xf] %vm2028, %v1974
      %2040 = vst.msk [vmem:[%s152 + $0x2c] sm:$0xf] %vm2028, %v1975
      %2041 = vst.msk [vmem:[%s152 + $0x30] sm:$0xf] %vm2028, %v1976
      %2042 = vst.msk [vmem:[%s152 + $0x34] sm:$0xf] %vm2028, %v1977
      %2043 = vst.msk [vmem:[%s152 + $0x38] sm:$0xf] %vm2028, %v1978
      %2044 = vst.msk [vmem:[%s152 + $0x3c] sm:$0xf] %vm2028, %v1979
      %2045 = vst.msk [vmem:[%s152 + $0x40] sm:$0xf] %vm2028, %v1980
      %2046 = vst.msk [vmem:[%s152 + $0x44] sm:$0xf] %vm2028, %v1981
      %2047 = vst.msk [vmem:[%s152 + $0x48] sm:$0xf] %vm2028, %v1982
      %2048 = vst.msk [vmem:[%s152 + $0x4c] sm:$0xf] %vm2028, %v1983
      %2049 = vst.msk [vmem:[%s152 + $0x50] sm:$0xf] %vm2028, %v1984
      %2050 = vst.msk [vmem:[%s152 + $0x54] sm:$0xf] %vm2028, %v1985
      %2051 = vst.msk [vmem:[%s152 + $0x58] sm:$0xf] %vm2028, %v1986
      %2052 = vst.msk [vmem:[%s152 + $0x5c] sm:$0xf] %vm2028, %v1987
      %2053 = vst.msk [vmem:[%s152 + $0x60] sm:$0xf] %vm2028, %v1988
      %2054 = vst.msk [vmem:[%s152 + $0x64] sm:$0xf] %vm2028, %v1989
      %2055 = vst.msk [vmem:[%s152 + $0x68] sm:$0xf] %vm2028, %v1990
      %2056 = vst.msk [vmem:[%s152 + $0x6c] sm:$0xf] %vm2028, %v1991
      %2057 = vst.msk [vmem:[%s152 + $0x70] sm:$0xf] %vm2028, %v1992
      %2058 = vst.msk [vmem:[%s152 + $0x74] sm:$0xf] %vm2028, %v1993
      %2059 = vst.msk [vmem:[%s152 + $0x78] sm:$0xf] %vm2028, %v1994
      %2060 = vst.msk [vmem:[%s152 + $0x7c] sm:$0xf] %vm2028, %v1995
      %p2061 = scmp.lt.s32.totalorder %s17, 3
      %s2062 = scalar_select %p2061, %s17, 3
      %p2063 = scmp.lt.s32.totalorder %s16, 1
      %s2064 = scalar_select %p2063, %s16, 1
      %s2065 = smul.addr %s2064, 32
      %s2066 = smul.addr %s2062, 64
      %s2067 = sadd.s32 %s2065, %s2066
      %s2068 = smul.addr %s2067, 4
      %s2069 = scalar_lea.vmem %s1, %s2068
      // Predicated region
      $region29: #{upsampling_forward.2} parent=23 // pred_check
        %p2070 = pneg %p72
      $region30: #{upsampling_forward.2} parent=23 // pred_check_branch
        %2072 = sbr.rel (%p2070) target = $region32
      $region31: #{upsampling_forward.2} parent=23 // pred_region
        _
      $region32: #{upsampling_forward.2} parent=23 // pred_fallthru
        _
    $region24: #{upsampling_forward.2} parent=5 // pred_fallthru
      _
    %p2073 = scmp.le.s32.totalorder 2, %s7
    // Predicated region
    $region33: #{upsampling_forward.2} parent=5 // pred_check
      %p2074 = pneg %p2073
    $region34: #{upsampling_forward.2} parent=5 // pred_check_branch
      %2076 = sbr.rel (%p2074) target = $region36
    $region35: #{upsampling_forward.2} parent=5 // pred_region
      %s2077 = ssub.s32 %s7, 2
      // Predicated region
      $region37: #{upsampling_forward.2} parent=35 // pred_check
        %p2078 = pneg %p78
      $region38: #{upsampling_forward.2} parent=35 // pred_check_branch
        %2080 = sbr.rel (%p2078) target = $region40
      $region39: #{upsampling_forward.2} parent=35 // pred_region
        %p2081 = scmp.lt.s32.totalorder %s19, 3
        %s2082 = scalar_select %p2081, %s19, 3
        %p2083 = scmp.lt.s32.totalorder %s18, 1
        %s2084 = scalar_select %p2083, %s18, 1
        %s2085 = smul.addr %s2084, 32
        %s2086 = smul.addr %s2082, 64
        %s2087 = sadd.s32 %s2085, %s2086
        %s2088 = smul.addr %s2087, 4
        %s2089 = scalar_lea.vmem %s1, %s2088
      $region40: #{upsampling_forward.2} parent=35 // pred_fallthru
        _
    $region36: #{upsampling_forward.2} parent=5 // pred_fallthru
      _
  $region6: #{upsampling_forward.2} parent=0 // loop_footer
    %s11 = sadd.s32 1, %s7
  $region7: #{upsampling_forward.2} parent=0 // loop_footer_branch
    %6 = sbr.rel target = $region3
  $region8: #{upsampling_forward.2} parent=0 // loop_exit
    _

</llo_original>
